<compile_context>
chip_gen: v6e
topology: v6e:2x2x1
jax: 0.10.0
libtpu: 0.0.40
codegen_flags: <defaults>
</compile_context>

<pallas_src>
import functools
import math

import jax
import jax.numpy as jnp
from jax import lax
from jax.experimental import pallas as pl
from jax.experimental.pallas import tpu as pltpu


def convgru_step_kernel(xpre_ref, wh_ref, b2_ref, wmask_ref, y_ref,
                        hs_ref, patch_ref):
    """One grid step == one (batch row, timestep) of the ConvGRU.

    xpre_ref  : (1, H, W, 3*Ch) bf16  precomputed x-side pre-activations:
                [..., :2*Ch] = conv_zr_x(x_t) + b_zr
                [..., 2*Ch:] = conv_h1(x_t)   + b_h1
    wh_ref    : (9*Ch, 3*Ch)  bf16   fused h-side 3x3 weights, im2col layout
                (rows ordered (dy, dx, cin)); cols [:2*Ch]=zr h-half, [2*Ch:]=h2
    b2_ref    : (1, Ch) f32          b_h2 only (added inside the r-term)
    wmask_ref : (2, W, Ch) f32       precomputed W-boundary masks
                ([0]: zero at w==0, [1]: zero at w==W-1)
    y_ref     : (1, H, W, Ch) f32    hidden state at (b, t)
    hs_ref    : (1, H+2, W, Ch) f32  VMEM scratch: carried h, padded along H
    patch_ref : (H*W, 9*Ch) bf16     VMEM scratch: im2col patch for the fused
                                     h-side conv (single MXU matmul)
    """
    t = pl.program_id(1)
    _, H, W, C3 = xpre_ref.shape
    Ch = y_ref.shape[-1]
    Ch2 = 2 * Ch

    @pl.when(t == 0)
    def _init():
        hs_ref[...] = jnp.zeros_like(hs_ref)

    h_pad = hs_ref[...]                                   # (1, H+2, W, Ch) f32

    # Precomputed W-boundary masks (no per-step iota/compare).
    m_l = wmask_ref[0].reshape(1, 1, W, Ch)               # zero at w == 0
    m_r = wmask_ref[1].reshape(1, 1, W, Ch)               # zero at w == W-1

    # im2col: 9 aligned bf16 slice-stores into the patch scratch.  The W
    # +/-1 shifts are XLU rolls + mask multiplies, so every slice / reshape /
    # store stays (8,128)-aligned (no offset-1 sublane slices).
    for dx in range(3):
        if dx == 0:
            hsft = pltpu.roll(h_pad, 1, 2) * m_l          # h[x-1]
        elif dx == 1:
            hsft = h_pad                                  # h[x]
        else:
            hsft = pltpu.roll(h_pad, W - 1, 2) * m_r      # h[x+1]
        hsft = hsft.astype(jnp.bfloat16)
        for dy in range(3):
            k = dy * 3 + dx
            patch_ref[:, k * Ch:(k + 1) * Ch] = (
                hsft[:, dy:dy + H].reshape(H * W, Ch))

    # Fused h-side 3x3 conv (Cout = 3*Ch) as ONE MXU matmul, K = 9*Ch.
    # No VMEM/vreg accumulator: the MXU accumulates over K in f32 internally.
    hconv = jnp.dot(patch_ref[...], wh_ref[...],
                    preferred_element_type=jnp.float32)    # (H*W, 3*Ch) f32

    xp = xpre_ref[...].reshape(H * W, C3).astype(jnp.float32)

    # Gating math in f32 (v5e EUP/VPU have no bf16).
    zr = jax.nn.sigmoid(xp[:, :Ch2] + hconv[:, :Ch2])
    z = zr[:, :Ch]
    r = zr[:, Ch:]
    # b_h2 added only to the h2 slice, inside the r-multiplied term.
    h_tilde = jnp.tanh(xp[:, Ch2:] + r * (hconv[:, Ch2:] + b2_ref[...]))

    # Late, fresh load of the unquantized carried h for the blend (keeps it
    # out of the live range of the matmul).
    h_prev = hs_ref[:, 1:1 + H].reshape(H * W, Ch)
    h_new = h_tilde + z * (h_prev - h_tilde)              # (1-z)*h_t + z*h

    h_new4 = h_new.reshape(1, H, W, Ch)
    y_ref[...] = h_new4.astype(y_ref.dtype)
    hs_ref[:, 1:1 + H] = h_new4                           # aligned writeback


def _nbytes(shape, dtype):
    return math.prod(shape) * jnp.dtype(dtype).itemsize


def temporal_encoder_pallas(x_btchw, params):
    """Forward of TemporalEncoder (n_layers=1).

    x_btchw : (B, T, Cin, H, W)  -- PyTorch batch_first layout.
    params  : (w_zr, b_zr, w_h1, b_h1, w_h2, b_h2) in HWIO layout, where w_zr
              acts on concat([x, h], C).
    Returns (y, h_last) with y: (B, T, Ch, H, W), h_last: (B, Ch, H, W),
    matching `x, h[-1]` of the PyTorch module.
    """
    w_zr, b_zr, w_h1, b_h1, w_h2, b_h2 = params
    B, T, Cin, H, W = x_btchw.shape
    Ch = w_h2.shape[-1]
    C3 = 3 * Ch

    x_nthwc = jnp.transpose(x_btchw, (0, 1, 3, 4, 2)).astype(jnp.float32)

    # ---- Hoisted x-side pre-activations, all T timesteps at once (parallel).
    # conv over concat([x, h]) == conv_x(x) + conv_h(h) by linearity, so the
    # x-half of the zr conv and the h1 conv depend only on x_t and are fused
    # into a single Cout=3*Ch convolution outside the serial recurrence.
    # Streamed into the kernel as bf16 (halves the per-step HBM read).
    w_x = jnp.concatenate([w_zr[:, :, :Cin, :], w_h1], axis=-1)     # (3,3,Cin,3Ch)
    b_x = jnp.concatenate([b_zr, b_h1], axis=-1)                    # (3Ch,)
    xpre = lax.conv_general_dilated(
        x_nthwc.reshape(B * T, H, W, Cin), w_x, (1, 1), "SAME",
        dimension_numbers=("NHWC", "HWIO", "NHWC")) + b_x
    xpre = xpre.reshape(B, T, H, W, C3).astype(jnp.bfloat16)

    # ---- Fused h-side weights (zr's h-half ++ h2), im2col layout, bf16.
    w_h = jnp.concatenate([w_zr[:, :, Cin:, :], w_h2], axis=-1)     # (3,3,Ch,3Ch)
    w_h = w_h.reshape(9 * Ch, C3).astype(jnp.bfloat16)              # (9Ch, 3Ch)
    b2 = b_h2.reshape(1, Ch).astype(jnp.float32)

    # ---- W-boundary masks for the roll-based halo, computed once.
    col = jnp.arange(W, dtype=jnp.int32)[:, None]                   # (W, 1)
    wmask = jnp.stack([col > 0, col < W - 1], axis=0)               # (2, W, 1)
    wmask = jnp.broadcast_to(wmask, (2, W, Ch)).astype(jnp.float32)

    # ---- VMEM budget derived from actual blocks (2x headroom, v7x-safe cap).
    vmem_need = (
        2 * _nbytes((1, H, W, C3), jnp.bfloat16)        # xpre block, 2 buffers
        + 2 * _nbytes((1, H, W, Ch), jnp.float32)       # y block, 2 buffers
        + 2 * _nbytes((9 * Ch, C3), jnp.bfloat16)       # weights
        + 2 * _nbytes((1, Ch), jnp.float32)             # bias
        + 2 * _nbytes((2, W, Ch), jnp.float32)          # masks
        + _nbytes((1, H + 2, W, Ch), jnp.float32)       # carried h scratch
        + _nbytes((H * W, 9 * Ch), jnp.bfloat16)        # im2col scratch
    )
    vmem_limit = int(min(max(2 * vmem_need, 16 * 1024 * 1024),
                         56 * 1024 * 1024))

    grid_spec = pltpu.PrefetchScalarGridSpec(
        num_scalar_prefetch=0,
        grid=(B, T),          # batch parallel (v7x megacore), time serial
        in_specs=[
            pl.BlockSpec((1, None, H, W, C3), lambda b, t: (b, t, 0, 0, 0)),
            pl.BlockSpec((9 * Ch, C3), lambda b, t: (0, 0)),
            pl.BlockSpec((1, Ch), lambda b, t: (0, 0)),
            pl.BlockSpec((2, W, Ch), lambda b, t: (0, 0, 0)),
        ],
        out_specs=pl.BlockSpec((1, None, H, W, Ch), lambda b, t: (b, t, 0, 0, 0)),
        scratch_shapes=[
            pltpu.VMEM((1, H + 2, W, Ch), jnp.float32),   # carried h (H-padded)
            pltpu.VMEM((H * W, 9 * Ch), jnp.bfloat16),    # im2col patch
        ],
    )

    y_nthwc = pl.pallas_call(
        convgru_step_kernel,
        out_shape=jax.ShapeDtypeStruct((B, T, H, W, Ch), jnp.float32),
        grid_spec=grid_spec,
        compiler_params=pltpu.CompilerParams(
            dimension_semantics=("parallel", "arbitrary"),
            vmem_limit_bytes=vmem_limit),
    )(xpre, w_h, b2, wmask)

    # Back to PyTorch layouts; h[-1] of a 1-layer GRU is just the last step.
    y = jnp.transpose(y_nthwc, (0, 1, 4, 2, 3))           # (B, T, Ch, H, W)
    h_last = y[:, -1]                                     # (B, Ch, H, W)
    return y, h_last


# ----------------------------- reference (plain JAX) -----------------------------
def _conv_same(x_nhwc, w_hwio, b):
    out = lax.conv_general_dilated(
        x_nhwc, w_hwio, window_strides=(1, 1), padding="SAME",
        dimension_numbers=("NHWC", "HWIO", "NHWC"))
    return out + b


def temporal_encoder_ref(x_btchw, params, Ch, match_kernel_quant=False):
    """Plain-JAX ConvGRU reference.

    With match_kernel_quant=True every operand the kernel rounds to bf16
    (x-side pre-activations, h fed to the h-side convs, h-side weights) is
    rounded the same way, isolating the semantic check from bf16 noise.
    """
    w_zr, b_zr, w_h1, b_h1, w_h2, b_h2 = params
    B, T, Cin, H, W = x_btchw.shape

    def q(a):
        return a.astype(jnp.bfloat16).astype(jnp.float32) if match_kernel_quant else a

    x_nthwc = jnp.transpose(x_btchw, (0, 1, 3, 4, 2)).astype(jnp.float32)
    x_flat = x_nthwc.reshape(B * T, H, W, Cin)

    # x-side pre-activations (conv over concat decomposed by linearity,
    # exactly as the kernel does).
    a_x = q(_conv_same(x_flat, w_zr[:, :, :Cin, :], b_zr)).reshape(B, T, H, W, 2 * Ch)
    c_x = q(_conv_same(x_flat, w_h1, b_h1)).reshape(B, T, H, W, Ch)

    w_zr_h = q(w_zr[:, :, Cin:, :])
    w_h2_q = q(w_h2)
    zero_b = jnp.zeros((2 * Ch,), jnp.float32)

    h = jnp.zeros((B, H, W, Ch), jnp.float32)
    ys = []
    for t in range(T):
        h_in = q(h)
        zr = jax.nn.sigmoid(a_x[:, t] + _conv_same(h_in, w_zr_h, zero_b))
        z, r = zr[..., :Ch], zr[..., Ch:]
        h_t = jnp.tanh(c_x[:, t] + r * _conv_same(h_in, w_h2_q, b_h2))
        h = (1.0 - z) * h_t + z * h
        ys.append(h)
    y = jnp.stack(ys, axis=1)
    return (jnp.transpose(y, (0, 1, 4, 2, 3)),
            jnp.transpose(h, (0, 3, 1, 2)))


if __name__ == "__main__":
    # Small shapes consistent with TemporalEncoder(in_channels=4, ks=3, n_layers=1)
    # on a (B, T, C, H, W) batch_first sequence. Ch is kept a multiple of 128
    # (the real model uses 384) so the channel/lane dim stays dense.
    B, T, Cin, H, W = 2, 6, 4, 16, 16
    Ch = 128

    key = jax.random.PRNGKey(0)
    k_x, k1, k2, k3, k4, k5, k6 = jax.random.split(key, 7)

    x = jax.random.normal(k_x, (B, T, Cin, H, W), jnp.float32)

    # Deterministic synthetic conv parameters (HWIO layout), scaled small.
    s = 0.05
    w_zr = s * jax.random.normal(k1, (3, 3, Cin + Ch, 2 * Ch), jnp.float32)
    b_zr = s * jax.random.normal(k2, (2 * Ch,), jnp.float32)
    w_h1 = s * jax.random.normal(k3, (3, 3, Cin, Ch), jnp.float32)
    b_h1 = s * jax.random.normal(k4, (Ch,), jnp.float32)
    w_h2 = s * jax.random.normal(k5, (3, 3, Ch, Ch), jnp.float32)
    b_h2 = s * jax.random.normal(k6, (Ch,), jnp.float32)
    params = (w_zr, b_zr, w_h1, b_h1, w_h2, b_h2)

    run = jax.jit(functools.partial(temporal_encoder_pallas, params=params))
    y, h_last = jax.block_until_ready(run(x))
    assert y.shape == (B, T, Ch, H, W) and h_last.shape == (B, Ch, H, W)

    # Tight semantic check vs. a reference that feeds the same bf16-rounded
    # operands as the kernel (removes bf16 quantization noise).
    y_q, h_q = temporal_encoder_ref(x, params, Ch, match_kernel_quant=True)
    assert jnp.allclose(y, y_q, atol=3e-3, rtol=3e-3), "sequence mismatch (bf16-matched ref)"
    assert jnp.allclose(h_last, h_q, atol=3e-3, rtol=3e-3), "last hidden mismatch (bf16-matched ref)"

    # Looser end-to-end check vs. the pure f32 reference (bf16 noise only).
    y_f, h_f = temporal_encoder_ref(x, params, Ch)
    assert jnp.allclose(y, y_f, atol=5e-2, rtol=5e-2), "sequence mismatch (f32 ref)"
    assert jnp.allclose(h_last, h_f, atol=5e-2, rtol=5e-2), "last hidden mismatch (f32 ref)"

    print("KERNEL_OK")
</pallas_src>

<mosaic_0001>
module attributes {stable_mosaic.version = 11 : i64} {
  func.func @convgru_step_kernel(%arg0: i32, %arg1: i32, %arg2: memref<1x1x16x16x384xbf16, #tpu.memory_space<vmem>>, %arg3: memref<1152x384xbf16, #tpu.memory_space<vmem>>, %arg4: memref<1x128xf32, #tpu.memory_space<vmem>>, %arg5: memref<2x16x128xf32, #tpu.memory_space<vmem>>, %arg6: memref<1x1x16x16x128xf32, #tpu.memory_space<vmem>>, %arg7: memref<1x18x16x128xf32, #tpu.memory_space<vmem>>, %arg8: memref<256x1152xbf16, #tpu.memory_space<vmem>>) attributes {dimension_semantics = [#tpu.dimension_semantics<parallel>, #tpu.dimension_semantics<arbitrary>], iteration_bounds = array<i64: 2, 6>, scalar_prefetch = 0 : i64, scratch_operands = 2 : i64, tpu.core_type = #tpu.core_type<tc>, window_params = [{transform_indices = @transform_0, window_bounds = array<i64: 1, 1, 16, 16, 384>}, {pipeline_mode = #tpu.pipeline_mode<synchronous>, transform_indices = @transform_1, window_bounds = array<i64: 1152, 384>}, {pipeline_mode = #tpu.pipeline_mode<synchronous>, transform_indices = @transform_2, window_bounds = array<i64: 1, 128>}, {pipeline_mode = #tpu.pipeline_mode<synchronous>, transform_indices = @transform_3, window_bounds = array<i64: 2, 16, 128>}, {transform_indices = @transform_4, window_bounds = array<i64: 1, 1, 16, 16, 128>}]} {
    %c0_i32 = arith.constant 0 : i32
    %0 = arith.cmpi eq, %arg1, %c0_i32 : i32
    %1 = arith.extui %0 : i1 to i32
    %c0_i32_0 = arith.constant 0 : i32
    %2 = arith.cmpi ne, %1, %c0_i32_0 : i32
    scf.if %2 {
      %cst_44 = arith.constant 0.000000e+00 : f32
      %81 = vector.broadcast %cst_44 : f32 to vector<1x18x16x128xf32>
      %c0_45 = arith.constant 0 : index
      %c0_46 = arith.constant 0 : index
      %c0_47 = arith.constant 0 : index
      %c0_48 = arith.constant 0 : index
      %82 = vector.load %arg7[%c0_45, %c0_46, %c0_47, %c0_48] : memref<1x18x16x128xf32, #tpu.memory_space<vmem>>, vector<1x18x16x128xf32>
      tpu.vector_store %arg7[%c0_45, %c0_46, %c0_47, %c0_48], %81 {strides = array<i32>} : memref<1x18x16x128xf32, #tpu.memory_space<vmem>>, vector<1x18x16x128xf32>,
    } else {
    }
    %c0 = arith.constant 0 : index
    %c0_1 = arith.constant 0 : index
    %c0_2 = arith.constant 0 : index
    %c0_3 = arith.constant 0 : index
    %3 = vector.load %arg7[%c0, %c0_1, %c0_2, %c0_3] : memref<1x18x16x128xf32, #tpu.memory_space<vmem>>, vector<1x18x16x128xf32>
    %c0_4 = arith.constant 0 : index
    %c0_5 = arith.constant 0 : index
    %c0_6 = arith.constant 0 : index
    %4 = vector.load %arg5[%c0_4, %c0_5, %c0_6] : memref<2x16x128xf32, #tpu.memory_space<vmem>>, vector<1x16x128xf32>
    %5 = vector.shape_cast %4 : vector<1x16x128xf32> to vector<16x128xf32>
    %6 = vector.shape_cast %5 : vector<16x128xf32> to vector<1x1x16x128xf32>
    %c1 = arith.constant 1 : index
    %c0_7 = arith.constant 0 : index
    %c0_8 = arith.constant 0 : index
    %7 = vector.load %arg5[%c1, %c0_7, %c0_8] : memref<2x16x128xf32, #tpu.memory_space<vmem>>, vector<1x16x128xf32>
    %8 = vector.shape_cast %7 : vector<1x16x128xf32> to vector<16x128xf32>
    %9 = vector.shape_cast %8 : vector<16x128xf32> to vector<1x1x16x128xf32>
    %c1_i32 = arith.constant 1 : i32
    %10 = tpu.dynamic_rotate %3 by %c1_i32 dim 2 : vector<1x18x16x128xf32>, i32 -> vector<1x18x16x128xf32>
    %11 = vector.broadcast %6 : vector<1x1x16x128xf32> to vector<1x18x16x128xf32>
    %12 = arith.mulf %10, %11 : vector<1x18x16x128xf32>
    %13 = arith.truncf %12 : vector<1x18x16x128xf32> to vector<1x18x16x128xbf16>
    %14 = vector.extract_strided_slice %13 {offsets = [0, 0, 0, 0], sizes = [1, 16, 16, 128], strides = [1, 1, 1, 1]} : vector<1x18x16x128xbf16> to vector<1x16x16x128xbf16>
    %15 = vector.shape_cast %14 : vector<1x16x16x128xbf16> to vector<256x128xbf16>
    %c0_9 = arith.constant 0 : index
    %c0_10 = arith.constant 0 : index
    %16 = vector.load %arg8[%c0_9, %c0_10] : memref<256x1152xbf16, #tpu.memory_space<vmem>>, vector<256x128xbf16>
    tpu.vector_store %arg8[%c0_9, %c0_10], %15 {strides = array<i32>} : memref<256x1152xbf16, #tpu.memory_space<vmem>>, vector<256x128xbf16>,
    %17 = vector.extract_strided_slice %13 {offsets = [0, 1, 0, 0], sizes = [1, 16, 16, 128], strides = [1, 1, 1, 1]} : vector<1x18x16x128xbf16> to vector<1x16x16x128xbf16>
    %18 = vector.shape_cast %17 : vector<1x16x16x128xbf16> to vector<256x128xbf16>
    %c0_11 = arith.constant 0 : index
    %c384 = arith.constant 384 : index
    %19 = vector.load %arg8[%c0_11, %c384] : memref<256x1152xbf16, #tpu.memory_space<vmem>>, vector<256x128xbf16>
    tpu.vector_store %arg8[%c0_11, %c384], %18 {strides = array<i32>} : memref<256x1152xbf16, #tpu.memory_space<vmem>>, vector<256x128xbf16>,
    %20 = vector.extract_strided_slice %13 {offsets = [0, 2, 0, 0], sizes = [1, 16, 16, 128], strides = [1, 1, 1, 1]} : vector<1x18x16x128xbf16> to vector<1x16x16x128xbf16>
    %21 = vector.shape_cast %20 : vector<1x16x16x128xbf16> to vector<256x128xbf16>
    %c0_12 = arith.constant 0 : index
    %c768 = arith.constant 768 : index
    %22 = vector.load %arg8[%c0_12, %c768] : memref<256x1152xbf16, #tpu.memory_space<vmem>>, vector<256x128xbf16>
    tpu.vector_store %arg8[%c0_12, %c768], %21 {strides = array<i32>} : memref<256x1152xbf16, #tpu.memory_space<vmem>>, vector<256x128xbf16>,
    %23 = arith.truncf %3 : vector<1x18x16x128xf32> to vector<1x18x16x128xbf16>
    %24 = vector.extract_strided_slice %23 {offsets = [0, 0, 0, 0], sizes = [1, 16, 16, 128], strides = [1, 1, 1, 1]} : vector<1x18x16x128xbf16> to vector<1x16x16x128xbf16>
    %25 = vector.shape_cast %24 : vector<1x16x16x128xbf16> to vector<256x128xbf16>
    %c0_13 = arith.constant 0 : index
    %c128 = arith.constant 128 : index
    %26 = vector.load %arg8[%c0_13, %c128] : memref<256x1152xbf16, #tpu.memory_space<vmem>>, vector<256x128xbf16>
    tpu.vector_store %arg8[%c0_13, %c128], %25 {strides = array<i32>} : memref<256x1152xbf16, #tpu.memory_space<vmem>>, vector<256x128xbf16>,
    %27 = vector.extract_strided_slice %23 {offsets = [0, 1, 0, 0], sizes = [1, 16, 16, 128], strides = [1, 1, 1, 1]} : vector<1x18x16x128xbf16> to vector<1x16x16x128xbf16>
    %28 = vector.shape_cast %27 : vector<1x16x16x128xbf16> to vector<256x128xbf16>
    %c0_14 = arith.constant 0 : index
    %c512 = arith.constant 512 : index
    %29 = vector.load %arg8[%c0_14, %c512] : memref<256x1152xbf16, #tpu.memory_space<vmem>>, vector<256x128xbf16>
    tpu.vector_store %arg8[%c0_14, %c512], %28 {strides = array<i32>} : memref<256x1152xbf16, #tpu.memory_space<vmem>>, vector<256x128xbf16>,
    %30 = vector.extract_strided_slice %23 {offsets = [0, 2, 0, 0], sizes = [1, 16, 16, 128], strides = [1, 1, 1, 1]} : vector<1x18x16x128xbf16> to vector<1x16x16x128xbf16>
    %31 = vector.shape_cast %30 : vector<1x16x16x128xbf16> to vector<256x128xbf16>
    %c0_15 = arith.constant 0 : index
    %c896 = arith.constant 896 : index
    %32 = vector.load %arg8[%c0_15, %c896] : memref<256x1152xbf16, #tpu.memory_space<vmem>>, vector<256x128xbf16>
    tpu.vector_store %arg8[%c0_15, %c896], %31 {strides = array<i32>} : memref<256x1152xbf16, #tpu.memory_space<vmem>>, vector<256x128xbf16>,
    %c15_i32 = arith.constant 15 : i32
    %33 = tpu.dynamic_rotate %3 by %c15_i32 dim 2 : vector<1x18x16x128xf32>, i32 -> vector<1x18x16x128xf32>
    %34 = vector.broadcast %9 : vector<1x1x16x128xf32> to vector<1x18x16x128xf32>
    %35 = arith.mulf %33, %34 : vector<1x18x16x128xf32>
    %36 = arith.truncf %35 : vector<1x18x16x128xf32> to vector<1x18x16x128xbf16>
    %37 = vector.extract_strided_slice %36 {offsets = [0, 0, 0, 0], sizes = [1, 16, 16, 128], strides = [1, 1, 1, 1]} : vector<1x18x16x128xbf16> to vector<1x16x16x128xbf16>
    %38 = vector.shape_cast %37 : vector<1x16x16x128xbf16> to vector<256x128xbf16>
    %c0_16 = arith.constant 0 : index
    %c256 = arith.constant 256 : index
    %39 = vector.load %arg8[%c0_16, %c256] : memref<256x1152xbf16, #tpu.memory_space<vmem>>, vector<256x128xbf16>
    tpu.vector_store %arg8[%c0_16, %c256], %38 {strides = array<i32>} : memref<256x1152xbf16, #tpu.memory_space<vmem>>, vector<256x128xbf16>,
    %40 = vector.extract_strided_slice %36 {offsets = [0, 1, 0, 0], sizes = [1, 16, 16, 128], strides = [1, 1, 1, 1]} : vector<1x18x16x128xbf16> to vector<1x16x16x128xbf16>
    %41 = vector.shape_cast %40 : vector<1x16x16x128xbf16> to vector<256x128xbf16>
    %c0_17 = arith.constant 0 : index
    %c640 = arith.constant 640 : index
    %42 = vector.load %arg8[%c0_17, %c640] : memref<256x1152xbf16, #tpu.memory_space<vmem>>, vector<256x128xbf16>
    tpu.vector_store %arg8[%c0_17, %c640], %41 {strides = array<i32>} : memref<256x1152xbf16, #tpu.memory_space<vmem>>, vector<256x128xbf16>,
    %43 = vector.extract_strided_slice %36 {offsets = [0, 2, 0, 0], sizes = [1, 16, 16, 128], strides = [1, 1, 1, 1]} : vector<1x18x16x128xbf16> to vector<1x16x16x128xbf16>
    %44 = vector.shape_cast %43 : vector<1x16x16x128xbf16> to vector<256x128xbf16>
    %c0_18 = arith.constant 0 : index
    %c1024 = arith.constant 1024 : index
    %45 = vector.load %arg8[%c0_18, %c1024] : memref<256x1152xbf16, #tpu.memory_space<vmem>>, vector<256x128xbf16>
    tpu.vector_store %arg8[%c0_18, %c1024], %44 {strides = array<i32>} : memref<256x1152xbf16, #tpu.memory_space<vmem>>, vector<256x128xbf16>,
    %c0_19 = arith.constant 0 : index
    %c0_20 = arith.constant 0 : index
    %46 = vector.load %arg8[%c0_19, %c0_20] : memref<256x1152xbf16, #tpu.memory_space<vmem>>, vector<256x1152xbf16>
    %c0_21 = arith.constant 0 : index
    %c0_22 = arith.constant 0 : index
    %47 = vector.load %arg3[%c0_21, %c0_22] : memref<1152x384xbf16, #tpu.memory_space<vmem>>, vector<1152x384xbf16>
    %cst = arith.constant dense<0.000000e+00> : vector<256x384xf32>
    %48 = tpu.matmul %46, %47, %cst {dimension_numbers = #tpu.dot_dimension_numbers<[1], [0], [0], [1], [0, 0, 1, 1], [], []>} : vector<256x1152xbf16>, vector<1152x384xbf16>, vector<256x384xf32> -> vector<256x384xf32>
    %c0_23 = arith.constant 0 : index
    %c0_24 = arith.constant 0 : index
    %c0_25 = arith.constant 0 : index
    %c0_26 = arith.constant 0 : index
    %c0_27 = arith.constant 0 : index
    %49 = vector.load %arg2[%c0_23, %c0_24, %c0_25, %c0_26, %c0_27] : memref<1x1x16x16x384xbf16, #tpu.memory_space<vmem>>, vector<1x1x16x16x384xbf16>
    %50 = vector.shape_cast %49 : vector<1x1x16x16x384xbf16> to vector<1x16x16x384xbf16>
    %51 = vector.shape_cast %50 : vector<1x16x16x384xbf16> to vector<256x384xbf16>
    %52 = arith.extf %51 : vector<256x384xbf16> to vector<256x384xf32>
    %53 = vector.extract_strided_slice %52 {offsets = [0, 0], sizes = [256, 256], strides = [1, 1]} : vector<256x384xf32> to vector<256x256xf32>
    %54 = vector.extract_strided_slice %48 {offsets = [0, 0], sizes = [256, 256], strides = [1, 1]} : vector<256x384xf32> to vector<256x256xf32>
    %55 = arith.addf %53, %54 : vector<256x256xf32>
    %56 = arith.negf %55 : vector<256x256xf32>
    %57 = math.exp %56 : vector<256x256xf32>
    %cst_28 = arith.constant 1.000000e+00 : f32
    %58 = vector.broadcast %cst_28 : f32 to vector<256x256xf32>
    %59 = arith.addf %58, %57 : vector<256x256xf32>
    %60 = arith.divf %58, %59 : vector<256x256xf32>
    %61 = vector.extract_strided_slice %60 {offsets = [0, 0], sizes = [256, 128], strides = [1, 1]} : vector<256x256xf32> to vector<256x128xf32>
    %62 = vector.extract_strided_slice %60 {offsets = [0, 128], sizes = [256, 128], strides = [1, 1]} : vector<256x256xf32> to vector<256x128xf32>
    %63 = vector.extract_strided_slice %52 {offsets = [0, 256], sizes = [256, 128], strides = [1, 1]} : vector<256x384xf32> to vector<256x128xf32>
    %64 = vector.extract_strided_slice %48 {offsets = [0, 256], sizes = [256, 128], strides = [1, 1]} : vector<256x384xf32> to vector<256x128xf32>
    %c0_29 = arith.constant 0 : index
    %c0_30 = arith.constant 0 : index
    %65 = vector.load %arg4[%c0_29, %c0_30] : memref<1x128xf32, #tpu.memory_space<vmem>>, vector<1x128xf32>
    %66 = vector.broadcast %65 : vector<1x128xf32> to vector<256x128xf32>
    %67 = arith.addf %64, %66 : vector<256x128xf32>
    %68 = arith.mulf %62, %67 : vector<256x128xf32>
    %69 = arith.addf %63, %68 : vector<256x128xf32>
    %70 = math.tanh %69 : vector<256x128xf32>
    %c0_31 = arith.constant 0 : index
    %c1_32 = arith.constant 1 : index
    %c0_33 = arith.constant 0 : index
    %c0_34 = arith.constant 0 : index
    %71 = vector.load %arg7[%c0_31, %c1_32, %c0_33, %c0_34] : memref<1x18x16x128xf32, #tpu.memory_space<vmem>>, vector<1x16x16x128xf32>
    %72 = vector.shape_cast %71 : vector<1x16x16x128xf32> to vector<256x128xf32>
    %73 = arith.subf %72, %70 : vector<256x128xf32>
    %74 = arith.mulf %61, %73 : vector<256x128xf32>
    %75 = arith.addf %70, %74 : vector<256x128xf32>
    %76 = vector.shape_cast %75 : vector<256x128xf32> to vector<1x16x16x128xf32>
    %c0_35 = arith.constant 0 : index
    %c0_36 = arith.constant 0 : index
    %c0_37 = arith.constant 0 : index
    %c0_38 = arith.constant 0 : index
    %c0_39 = arith.constant 0 : index
    %77 = vector.load %arg6[%c0_35, %c0_36, %c0_37, %c0_38, %c0_39] : memref<1x1x16x16x128xf32, #tpu.memory_space<vmem>>, vector<1x1x16x16x128xf32>
    %78 = vector.shape_cast %77 : vector<1x1x16x16x128xf32> to vector<1x16x16x128xf32>
    %79 = vector.shape_cast %76 : vector<1x16x16x128xf32> to vector<1x1x16x16x128xf32>
    tpu.vector_store %arg6[%c0_35, %c0_36, %c0_37, %c0_38, %c0_39], %79 {strides = array<i32>} : memref<1x1x16x16x128xf32, #tpu.memory_space<vmem>>, vector<1x1x16x16x128xf32>,
    %c0_40 = arith.constant 0 : index
    %c1_41 = arith.constant 1 : index
    %c0_42 = arith.constant 0 : index
    %c0_43 = arith.constant 0 : index
    %80 = vector.load %arg7[%c0_40, %c1_41, %c0_42, %c0_43] : memref<1x18x16x128xf32, #tpu.memory_space<vmem>>, vector<1x16x16x128xf32>
    tpu.vector_store %arg7[%c0_40, %c1_41, %c0_42, %c0_43], %76 {strides = array<i32>} : memref<1x18x16x128xf32, #tpu.memory_space<vmem>>, vector<1x16x16x128xf32>,
    return
  }
  func.func @transform_0(%arg0: i32, %arg1: i32) -> (i32, i32, i32, i32, i32) {
    %c0_i32 = arith.constant 0 : i32
    %c0_i32_0 = arith.constant 0 : i32
    %c0_i32_1 = arith.constant 0 : i32
    %c0_i32_2 = arith.constant 0 : i32
    return %arg0, %arg1, %c0_i32, %c0_i32_0, %c0_i32_1 : i32, i32, i32, i32, i32
  }
  func.func @transform_1(%arg0: i32, %arg1: i32) -> (i32, i32) {
    %c0_i32 = arith.constant 0 : i32
    %c0_i32_0 = arith.constant 0 : i32
    %c0_i32_1 = arith.constant 0 : i32
    return %c0_i32, %c0_i32_0 : i32, i32
  }
  func.func @transform_2(%arg0: i32, %arg1: i32) -> (i32, i32) {
    %c0_i32 = arith.constant 0 : i32
    %c0_i32_0 = arith.constant 0 : i32
    %c0_i32_1 = arith.constant 0 : i32
    return %c0_i32, %c0_i32_0 : i32, i32
  }
  func.func @transform_3(%arg0: i32, %arg1: i32) -> (i32, i32, i32) {
    %c0_i32 = arith.constant 0 : i32
    %c0_i32_0 = arith.constant 0 : i32
    %c0_i32_1 = arith.constant 0 : i32
    %c0_i32_2 = arith.constant 0 : i32
    return %c0_i32, %c0_i32_0, %c0_i32_1 : i32, i32, i32
  }
  func.func @transform_4(%arg0: i32, %arg1: i32) -> (i32, i32, i32, i32, i32) {
    %c0_i32 = arith.constant 0 : i32
    %c0_i32_0 = arith.constant 0 : i32
    %c0_i32_1 = arith.constant 0 : i32
    %c0_i32_2 = arith.constant 0 : i32
    return %arg0, %arg1, %c0_i32, %c0_i32_0, %c0_i32_1 : i32, i32, i32, i32, i32
  }
}

</mosaic_0001>

<llo_original>
// kernel: temporal_encoder_pallas.1
$region0: #{temporal_encoder_pallas.1}
  #allocation0 [shape = 'u32[]', space=smem, size = 0x4, offset = 0x4, fixed_abs, tag = 'smem constant byte address 0x4 - core index']
  #allocation1 [shape = 'u32[144,128]{1,0:T(1,128)}', space=vmem, size = 0x12000, scoped, tag = 'internal scratch']
  #allocation2 [shape = 'f32[1,18,16,128]{3,2,1,0:T(8,128)}', space=vmem, size = 0x24000, scoped, tag = 'scratch operand']
  #allocation3 [shape = 'bf16[256,1152]{1,0:T(8,128)(2,1)}', space=vmem, size = 0x90000, scoped, tag = 'scratch operand']
  %s0 = inlined_call_operand.vmem [shape: bf16[2,6,16,16,384], index: 0, kind: input, shape index: {}]
  %s1 = inlined_call_operand.vmem [shape: bf16[1152,384], index: 1, kind: input, shape index: {}]
  %s2 = inlined_call_operand.vmem [shape: f32[1,128], index: 2, kind: input, shape index: {}]
  %s3 = inlined_call_operand.vmem [shape: f32[2,16,128], index: 3, kind: input, shape index: {}]
  %s4 = inlined_call_operand.vmem [shape: f32[2,6,16,16,128], index: 4, kind: output, shape index: {}]
  %s5 = sld [smem:[#allocation0]]
  $region53: #{temporal_encoder_pallas.1} parent=0
    _
  %s7 = ssub.s32 1, %s5
  %s8 = scalar_select 0, %s7, %s5
  loop: start=0, step=1, limit=14
  $region2: #{temporal_encoder_pallas.1} parent=0 // loop_pre_header
    _
  $region3: #{temporal_encoder_pallas.1} parent=0 // loop_header
    %s10 = sphi 0, %s14
    %p11 = scmp.ge.s32.totalorder %s10, 14
    %s17 = sphi 0, %s29
    %s18 = sphi 0, %s25
    %s19 = sphi 0, %s17
    %s20 = sphi 0, %s18
    %s21 = sphi 0, %s19
    %s22 = sphi 0, %s20
    %s34 = sphi 0, %s36
    %s37 = sphi 0, %s34
    %s38 = sphi 0, %s37
    %s54 = sphi 0, %s38
    %s58 = sphi 0, %s58
    %s60 = sphi 0, %s58
    %s61 = sphi 0, %s60
    %s75 = sphi 0, %s61
    %s79 = sphi 0, %s79
    %s81 = sphi 0, %s79
    %s82 = sphi 0, %s81
    %s96 = sphi 0, %s82
    %s100 = sphi 0, %s100
    %s102 = sphi 0, %s100
    %s103 = sphi 0, %s102
    %s117 = sphi 0, %s103
    %s125 = sphi 0, %s127
    %s128 = sphi 0, %s125
    %s129 = sphi 0, %s128
    %s145 = sphi 0, %s129
  $region4: #{temporal_encoder_pallas.1} parent=0 // loop_header_branch
    %13 = sbr.rel (%p11) target = $region8
  $region5: #{temporal_encoder_pallas.1} parent=0 // loop_body
    %s15 = ssub.s32 %s10, 1
    %s16 = ssub.s32 %s10, 2
    %s23 = sadd.s32 1, %s18
    %p24 = scmp.ge.s32.totalorder %s23, 6
    %s25 = scalar_select %p24, 0, %s23
    %s26 = sadd.s32 1, %s17
    %s27 = scalar_select %p24, %s26, %s17
    %p28 = scmp.ge.s32.totalorder %s27, 2
    %s29 = scalar_select %p28, 0, %s27
    %s30 = ssub.s32 %s17, %s29
    %s31 = ssub.s32 %s18, %s25
    %s32 = sor.u32 %s30, %s31
    %p33 = scmp.eq.s32.totalorder %s32, 0
    %s35 = sadd.s32 %s34, 1
    %s36 = scalar_select %p33, %s34, %s35
    %p39 = pneg %p33
    %p40 = scmp.eq.s32.totalorder %s10, 11
    %p41 = por %p39, %p40
    %p42 = scmp.ne.s32.totalorder %s34, %s37
    %p43 = scmp.eq.s32.totalorder %s10, 0
    %p44 = por %p42, %p43
    %p45 = scmp.ne.s32.totalorder %s34, %s37
    %p46 = scmp.eq.s32.totalorder %s15, 11
    %p47 = por %p45, %p46
    %p48 = scmp.ne.s32.totalorder %s37, %s38
    %p49 = scmp.eq.s32.totalorder %s15, 0
    %p50 = por %p48, %p49
    %p51 = scmp.ne.s32.totalorder %s37, %s38
    %p52 = scmp.eq.s32.totalorder %s16, 11
    %p53 = por %p51, %p52
    %p55 = scmp.ne.s32.totalorder %s38, %s54
    %p56 = scmp.eq.s32.totalorder %s16, 0
    %p57 = por %p55, %p56
    %s59 = sadd.s32 %s58, 1
    %p62 = scmp.eq.s32.totalorder %s10, 11
    %p63 = scmp.ne.s32.totalorder %s58, %s60
    %p64 = scmp.eq.s32.totalorder %s10, 0
    %p65 = por %p63, %p64
    %p66 = scmp.ne.s32.totalorder %s58, %s60
    %p67 = scmp.eq.s32.totalorder %s15, 11
    %p68 = por %p66, %p67
    %p69 = scmp.ne.s32.totalorder %s60, %s61
    %p70 = scmp.eq.s32.totalorder %s15, 0
    %p71 = por %p69, %p70
    %p72 = scmp.ne.s32.totalorder %s60, %s61
    %p73 = scmp.eq.s32.totalorder %s16, 11
    %p74 = por %p72, %p73
    %p76 = scmp.ne.s32.totalorder %s61, %s75
    %p77 = scmp.eq.s32.totalorder %s16, 0
    %p78 = por %p76, %p77
    %s80 = sadd.s32 %s79, 1
    %p83 = scmp.eq.s32.totalorder %s10, 11
    %p84 = scmp.ne.s32.totalorder %s79, %s81
    %p85 = scmp.eq.s32.totalorder %s10, 0
    %p86 = por %p84, %p85
    %p87 = scmp.ne.s32.totalorder %s79, %s81
    %p88 = scmp.eq.s32.totalorder %s15, 11
    %p89 = por %p87, %p88
    %p90 = scmp.ne.s32.totalorder %s81, %s82
    %p91 = scmp.eq.s32.totalorder %s15, 0
    %p92 = por %p90, %p91
    %p93 = scmp.ne.s32.totalorder %s81, %s82
    %p94 = scmp.eq.s32.totalorder %s16, 11
    %p95 = por %p93, %p94
    %p97 = scmp.ne.s32.totalorder %s82, %s96
    %p98 = scmp.eq.s32.totalorder %s16, 0
    %p99 = por %p97, %p98
    %s101 = sadd.s32 %s100, 1
    %p104 = scmp.eq.s32.totalorder %s10, 11
    %p105 = scmp.ne.s32.totalorder %s100, %s102
    %p106 = scmp.eq.s32.totalorder %s10, 0
    %p107 = por %p105, %p106
    %p108 = scmp.ne.s32.totalorder %s100, %s102
    %p109 = scmp.eq.s32.totalorder %s15, 11
    %p110 = por %p108, %p109
    %p111 = scmp.ne.s32.totalorder %s102, %s103
    %p112 = scmp.eq.s32.totalorder %s15, 0
    %p113 = por %p111, %p112
    %p114 = scmp.ne.s32.totalorder %s102, %s103
    %p115 = scmp.eq.s32.totalorder %s16, 11
    %p116 = por %p114, %p115
    %p118 = scmp.ne.s32.totalorder %s103, %s117
    %p119 = scmp.eq.s32.totalorder %s16, 0
    %p120 = por %p118, %p119
    %s121 = ssub.s32 %s17, %s29
    %s122 = ssub.s32 %s18, %s25
    %s123 = sor.u32 %s121, %s122
    %p124 = scmp.eq.s32.totalorder %s123, 0
    %s126 = sadd.s32 %s125, 1
    %s127 = scalar_select %p124, %s125, %s126
    %p130 = pneg %p124
    %p131 = scmp.eq.s32.totalorder %s10, 11
    %p132 = por %p130, %p131
    %p133 = scmp.ne.s32.totalorder %s125, %s128
    %p134 = scmp.eq.s32.totalorder %s10, 0
    %p135 = por %p133, %p134
    %p136 = scmp.ne.s32.totalorder %s125, %s128
    %p137 = scmp.eq.s32.totalorder %s15, 11
    %p138 = por %p136, %p137
    %p139 = scmp.ne.s32.totalorder %s128, %s129
    %p140 = scmp.eq.s32.totalorder %s15, 0
    %p141 = por %p139, %p140
    %p142 = scmp.ne.s32.totalorder %s128, %s129
    %p143 = scmp.eq.s32.totalorder %s16, 11
    %p144 = por %p142, %p143
    %p146 = scmp.ne.s32.totalorder %s129, %s145
    %p147 = scmp.eq.s32.totalorder %s16, 0
    %p148 = por %p146, %p147
    %p149 = scmp.le.s32.totalorder 1, %s10
    %p150 = scmp.lt.s32.totalorder %s10, 13
    %p151 = pnand %p149, %p150
    %p152 = pneg %p151
    // Predicated region
    $region9: #{temporal_encoder_pallas.1} parent=5 // pred_check
      _
    $region10: #{temporal_encoder_pallas.1} parent=5 // pred_check_branch
      %154 = sbr.rel (%p151) target = $region12
    $region11: #{temporal_encoder_pallas.1} parent=5 // pred_region
      %s155 = ssub.s32 %s10, 1
      // Predicated region
      $region13: #{temporal_encoder_pallas.1} parent=11 // pred_check
        %p156 = pneg %p71
      $region14: #{temporal_encoder_pallas.1} parent=11 // pred_check_branch
        %158 = sbr.rel (%p156) target = $region16
      $region15: #{temporal_encoder_pallas.1} parent=11 // pred_region
        _
      $region16: #{temporal_encoder_pallas.1} parent=11 // pred_fallthru
        _
      // Predicated region
      $region17: #{temporal_encoder_pallas.1} parent=11 // pred_check
        %p159 = pneg %p92
      $region18: #{temporal_encoder_pallas.1} parent=11 // pred_check_branch
        %161 = sbr.rel (%p159) target = $region20
      $region19: #{temporal_encoder_pallas.1} parent=11 // pred_region
        _
      $region20: #{temporal_encoder_pallas.1} parent=11 // pred_fallthru
        _
      // Predicated region
      $region21: #{temporal_encoder_pallas.1} parent=11 // pred_check
        %p162 = pneg %p113
      $region22: #{temporal_encoder_pallas.1} parent=11 // pred_check_branch
        %164 = sbr.rel (%p162) target = $region24
      $region23: #{temporal_encoder_pallas.1} parent=11 // pred_region
        _
      $region24: #{temporal_encoder_pallas.1} parent=11 // pred_fallthru
        _
    $region12: #{temporal_encoder_pallas.1} parent=5 // pred_fallthru
      _
    %p165 = scmp.lt.s32.totalorder %s10, 12
    // Predicated region
    $region25: #{temporal_encoder_pallas.1} parent=5 // pred_check
      %p166 = pneg %p165
    $region26: #{temporal_encoder_pallas.1} parent=5 // pred_check_branch
      %168 = sbr.rel (%p166) target = $region28
    $region27: #{temporal_encoder_pallas.1} parent=5 // pred_region
      // Predicated region
      $region29: #{temporal_encoder_pallas.1} parent=27 // pred_check
        %p169 = pneg %p44
      $region30: #{temporal_encoder_pallas.1} parent=27 // pred_check_branch
        %171 = sbr.rel (%p169) target = $region32
      $region31: #{temporal_encoder_pallas.1} parent=27 // pred_region
        %p172 = scmp.lt.s32.totalorder %s17, 1
        %s173 = scalar_select %p172, %s17, 1
        %p174 = scmp.lt.s32.totalorder %s18, 5
        %s175 = scalar_select %p174, %s18, 5
        %s176 = smul.addr %s175, 96
        %s177 = smul.addr %s173, 576
        %s178 = sadd.s32 %s176, %s177
        %s179 = smul.addr %s178, 4
        %s180 = scalar_lea.vmem %s0, %s179
      $region32: #{temporal_encoder_pallas.1} parent=27 // pred_fallthru
        _
    $region28: #{temporal_encoder_pallas.1} parent=5 // pred_fallthru
      _
    %p181 = scmp.le.s32.totalorder 1, %s10
    %p182 = scmp.lt.s32.totalorder %s10, 13
    %p183 = pnand %p181, %p182
    %p184 = pneg %p183
    // Predicated region
    $region33: #{temporal_encoder_pallas.1} parent=5 // pred_check
      _
    $region34: #{temporal_encoder_pallas.1} parent=5 // pred_check_branch
      %186 = sbr.rel (%p183) target = $region36
    $region35: #{temporal_encoder_pallas.1} parent=5 // pred_region
      %s187 = ssub.s32 %s10, 1
      %p188 = scmp.lt.s32.totalorder %s19, 1
      %s189 = scalar_select %p188, %s19, 1
      %p190 = scmp.lt.s32.totalorder %s20, 5
      %s191 = scalar_select %p190, %s20, 5
      %s192 = smul.addr %s191, 96
      %s193 = smul.addr %s189, 576
      %s194 = sadd.s32 %s192, %s193
      %s195 = smul.addr %s194, 4
      %s196 = scalar_lea.vmem %s0, %s195
      %p197 = pneg %p50
      %p198 = pneg %p47
      %p199 = pneg %p71
      %p200 = pneg %p68
      %p201 = pneg %p92
      %p202 = pneg %p89
      %p203 = pneg %p113
      %p204 = pneg %p110
      %p205 = pneg %p141
      %p206 = pneg %p138
      %p207 = scmp.lt.s32.totalorder %s19, 1
      %s208 = scalar_select %p207, %s19, 1
      %p209 = scmp.lt.s32.totalorder %s20, 5
      %s210 = scalar_select %p209, %s20, 5
      %s211 = smul.addr %s210, 32
      %s212 = smul.addr %s208, 192
      %s213 = sadd.s32 %s211, %s212
      %s214 = smul.addr %s213, 8
      %s215 = scalar_lea.vmem %s4, %s214
      %p216 = scmp.lt.s32.totalorder %s19, 1
      %s217 = scalar_select %p216, %s19, 1
      %p218 = scmp.lt.s32.totalorder %s20, 5
      %s219 = scalar_select %p218, %s20, 5
      %s220 = smul.addr %s219, 96
      %s221 = smul.addr %s217, 576
      %s222 = sadd.s32 %s220, %s221
      %s223 = smul.addr %s222, 4
      %s224 = scalar_lea.vmem %s0, %s223
      %p225 = scmp.lt.s32.totalorder %s19, 1
      %s226 = scalar_select %p225, %s19, 1
      %p227 = scmp.lt.s32.totalorder %s20, 5
      %s228 = scalar_select %p227, %s20, 5
      %s229 = smul.addr %s228, 32
      %s230 = smul.addr %s226, 192
      %s231 = sadd.s32 %s229, %s230
      %s232 = smul.addr %s231, 8
      %s233 = scalar_lea.vmem %s4, %s232
      %p235 = scmp.eq.s32.totalorder %s20, 0
      // Predicated region
      $region37: #{temporal_encoder_pallas.1} parent=35 // pred_check
        %p236 = pneg %p235
      $region38: #{temporal_encoder_pallas.1} parent=35 // pred_check_branch
        %238 = sbr.rel (%p236) target = $region40
      $region39: #{temporal_encoder_pallas.1} parent=35 // pred_region
        %239 = vst [vmem:[#allocation2] sm:$0xff] 0.0
        %240 = vst [vmem:[#allocation2 + $0x8] sm:$0xff] 0.0
        %241 = vst [vmem:[#allocation2 + $0x10] sm:$0xff] 0.0
        %242 = vst [vmem:[#allocation2 + $0x18] sm:$0xff] 0.0
        %243 = vst [vmem:[#allocation2 + $0x20] sm:$0xff] 0.0
        %244 = vst [vmem:[#allocation2 + $0x28] sm:$0xff] 0.0
        %245 = vst [vmem:[#allocation2 + $0x30] sm:$0xff] 0.0
        %246 = vst [vmem:[#allocation2 + $0x38] sm:$0xff] 0.0
        %247 = vst [vmem:[#allocation2 + $0x40] sm:$0xff] 0.0
        %248 = vst [vmem:[#allocation2 + $0x48] sm:$0xff] 0.0
        %249 = vst [vmem:[#allocation2 + $0x50] sm:$0xff] 0.0
        %250 = vst [vmem:[#allocation2 + $0x58] sm:$0xff] 0.0
        %251 = vst [vmem:[#allocation2 + $0x60] sm:$0xff] 0.0
        %252 = vst [vmem:[#allocation2 + $0x68] sm:$0xff] 0.0
        %253 = vst [vmem:[#allocation2 + $0x70] sm:$0xff] 0.0
        %254 = vst [vmem:[#allocation2 + $0x78] sm:$0xff] 0.0
        %255 = vst [vmem:[#allocation2 + $0x80] sm:$0xff] 0.0
        %256 = vst [vmem:[#allocation2 + $0x88] sm:$0xff] 0.0
        %257 = vst [vmem:[#allocation2 + $0x90] sm:$0xff] 0.0
        %258 = vst [vmem:[#allocation2 + $0x98] sm:$0xff] 0.0
        %259 = vst [vmem:[#allocation2 + $0xa0] sm:$0xff] 0.0
        %260 = vst [vmem:[#allocation2 + $0xa8] sm:$0xff] 0.0
        %261 = vst [vmem:[#allocation2 + $0xb0] sm:$0xff] 0.0
        %262 = vst [vmem:[#allocation2 + $0xb8] sm:$0xff] 0.0
        %263 = vst [vmem:[#allocation2 + $0xc0] sm:$0xff] 0.0
        %264 = vst [vmem:[#allocation2 + $0xc8] sm:$0xff] 0.0
        %265 = vst [vmem:[#allocation2 + $0xd0] sm:$0xff] 0.0
        %266 = vst [vmem:[#allocation2 + $0xd8] sm:$0xff] 0.0
        %267 = vst [vmem:[#allocation2 + $0xe0] sm:$0xff] 0.0
        %268 = vst [vmem:[#allocation2 + $0xe8] sm:$0xff] 0.0
        %269 = vst [vmem:[#allocation2 + $0xf0] sm:$0xff] 0.0
        %270 = vst [vmem:[#allocation2 + $0xf8] sm:$0xff] 0.0
        %271 = vst [vmem:[#allocation2 + $0x100] sm:$0xff] 0.0
        %272 = vst [vmem:[#allocation2 + $0x108] sm:$0xff] 0.0
        %273 = vst [vmem:[#allocation2 + $0x110] sm:$0xff] 0.0
        %274 = vst [vmem:[#allocation2 + $0x118] sm:$0xff] 0.0
      $region40: #{temporal_encoder_pallas.1} parent=35 // pred_fallthru
        _
      %v275 = vld [vmem:[#allocation2] sm:$0xff]
      %v276 = vld [vmem:[#allocation2 + $0x8] sm:$0xff]
      %v277 = vld [vmem:[#allocation2 + $0x10] sm:$0xff]
      %v278 = vld [vmem:[#allocation2 + $0x18] sm:$0xff]
      %v279 = vld [vmem:[#allocation2 + $0x20] sm:$0xff]
      %v280 = vld [vmem:[#allocation2 + $0x28] sm:$0xff]
      %v281 = vld [vmem:[#allocation2 + $0x30] sm:$0xff]
      %v282 = vld [vmem:[#allocation2 + $0x38] sm:$0xff]
      %v283 = vld [vmem:[#allocation2 + $0x40] sm:$0xff]
      %v284 = vld [vmem:[#allocation2 + $0x48] sm:$0xff]
      %v285 = vld [vmem:[#allocation2 + $0x50] sm:$0xff]
      %v286 = vld [vmem:[#allocation2 + $0x58] sm:$0xff]
      %v287 = vld [vmem:[#allocation2 + $0x60] sm:$0xff]
      %v288 = vld [vmem:[#allocation2 + $0x68] sm:$0xff]
      %v289 = vld [vmem:[#allocation2 + $0x70] sm:$0xff]
      %v290 = vld [vmem:[#allocation2 + $0x78] sm:$0xff]
      %v291 = vld [vmem:[#allocation2 + $0x80] sm:$0xff]
      %v292 = vld [vmem:[#allocation2 + $0x88] sm:$0xff]
      %v293 = vld [vmem:[#allocation2 + $0x90] sm:$0xff]
      %v294 = vld [vmem:[#allocation2 + $0x98] sm:$0xff]
      %v295 = vld [vmem:[#allocation2 + $0xa0] sm:$0xff]
      %v296 = vld [vmem:[#allocation2 + $0xa8] sm:$0xff]
      %v297 = vld [vmem:[#allocation2 + $0xb0] sm:$0xff]
      %v298 = vld [vmem:[#allocation2 + $0xb8] sm:$0xff]
      %v299 = vld [vmem:[#allocation2 + $0xc0] sm:$0xff]
      %v300 = vld [vmem:[#allocation2 + $0xc8] sm:$0xff]
      %v301 = vld [vmem:[#allocation2 + $0xd0] sm:$0xff]
      %v302 = vld [vmem:[#allocation2 + $0xd8] sm:$0xff]
      %v303 = vld [vmem:[#allocation2 + $0xe0] sm:$0xff]
      %v304 = vld [vmem:[#allocation2 + $0xe8] sm:$0xff]
      %v305 = vld [vmem:[#allocation2 + $0xf0] sm:$0xff]
      %v306 = vld [vmem:[#allocation2 + $0xf8] sm:$0xff]
      %v307 = vld [vmem:[#allocation2 + $0x100] sm:$0xff]
      %v308 = vld [vmem:[#allocation2 + $0x108] sm:$0xff]
      %v309 = vld [vmem:[#allocation2 + $0x110] sm:$0xff]
      %v310 = vld [vmem:[#allocation2 + $0x118] sm:$0xff]
      %v311 = vld [vmem:[%s3] sm:$0xff]
      %v312 = vld [vmem:[%s3 + $0x8] sm:$0xff]
      %s313 = scalar_lea.vmem %s3, 16
      %v314 = vld [vmem:[%s313] sm:$0xff]
      %v315 = vld [vmem:[%s313 + $0x8] sm:$0xff]
      %v316 = vrot.slane %v275, 7
      %v317 = vrot.slane %v277, 7
      %v318 = vrot.slane %v279, 7
      %v319 = vrot.slane %v281, 7
      %v320 = vrot.slane %v283, 7
      %v321 = vrot.slane %v285, 7
      %v322 = vrot.slane %v287, 7
      %v323 = vrot.slane %v289, 7
      %v324 = vrot.slane %v291, 7
      %v325 = vrot.slane %v293, 7
      %v326 = vrot.slane %v295, 7
      %v327 = vrot.slane %v297, 7
      %v328 = vrot.slane %v299, 7
      %v329 = vrot.slane %v301, 7
      %v330 = vrot.slane %v303, 7
      %v331 = vrot.slane %v305, 7
      %v332 = vrot.slane %v307, 7
      %v333 = vrot.slane %v309, 7
      %v334 = vrot.slane %v276, 7
      %v335 = vrot.slane %v278, 7
      %v336 = vrot.slane %v280, 7
      %v337 = vrot.slane %v282, 7
      %v338 = vrot.slane %v284, 7
      %v339 = vrot.slane %v286, 7
      %v340 = vrot.slane %v288, 7
      %v341 = vrot.slane %v290, 7
      %v342 = vrot.slane %v292, 7
      %v343 = vrot.slane %v294, 7
      %v344 = vrot.slane %v296, 7
      %v345 = vrot.slane %v298, 7
      %v346 = vrot.slane %v300, 7
      %v347 = vrot.slane %v302, 7
      %v348 = vrot.slane %v304, 7
      %v349 = vrot.slane %v306, 7
      %v350 = vrot.slane %v308, 7
      %v351 = vrot.slane %v310, 7
      %v352 = vlaneseq
      %v353 = vshrl.u32 %v352, 7
      %vm354 = vcmp.lt.s32.totalorder %v353, 1
      %v355 = vsel %vm354, %v316, %v334
      %v356 = vsel %vm354, %v317, %v335
      %v357 = vsel %vm354, %v318, %v336
      %v358 = vsel %vm354, %v319, %v337
      %v359 = vsel %vm354, %v320, %v338
      %v360 = vsel %vm354, %v321, %v339
      %v361 = vsel %vm354, %v322, %v340
      %v362 = vsel %vm354, %v323, %v341
      %v363 = vsel %vm354, %v324, %v342
      %v364 = vsel %vm354, %v325, %v343
      %v365 = vsel %vm354, %v326, %v344
      %v366 = vsel %vm354, %v327, %v345
      %v367 = vsel %vm354, %v328, %v346
      %v368 = vsel %vm354, %v329, %v347
      %v369 = vsel %vm354, %v330, %v348
      %v370 = vsel %vm354, %v331, %v349
      %v371 = vsel %vm354, %v332, %v350
      %v372 = vsel %vm354, %v333, %v351
      %v373 = vsel %vm354, %v334, %v316
      %v374 = vsel %vm354, %v335, %v317
      %v375 = vsel %vm354, %v336, %v318
      %v376 = vsel %vm354, %v337, %v319
      %v377 = vsel %vm354, %v338, %v320
      %v378 = vsel %vm354, %v339, %v321
      %v379 = vsel %vm354, %v340, %v322
      %v380 = vsel %vm354, %v341, %v323
      %v381 = vsel %vm354, %v342, %v324
      %v382 = vsel %vm354, %v343, %v325
      %v383 = vsel %vm354, %v344, %v326
      %v384 = vsel %vm354, %v345, %v327
      %v385 = vsel %vm354, %v346, %v328
      %v386 = vsel %vm354, %v347, %v329
      %v387 = vsel %vm354, %v348, %v330
      %v388 = vsel %vm354, %v349, %v331
      %v389 = vsel %vm354, %v350, %v332
      %v390 = vsel %vm354, %v351, %v333
      %v391 = vmul.f32 %v373, %v311
      %v392 = vmul.f32 %v355, %v312
      %v393 = vmul.f32 %v374, %v311
      %v394 = vmul.f32 %v356, %v312
      %v395 = vmul.f32 %v375, %v311
      %v396 = vmul.f32 %v357, %v312
      %v397 = vmul.f32 %v376, %v311
      %v398 = vmul.f32 %v358, %v312
      %v399 = vmul.f32 %v377, %v311
      %v400 = vmul.f32 %v359, %v312
      %v401 = vmul.f32 %v378, %v311
      %v402 = vmul.f32 %v360, %v312
      %v403 = vmul.f32 %v379, %v311
      %v404 = vmul.f32 %v361, %v312
      %v405 = vmul.f32 %v380, %v311
      %v406 = vmul.f32 %v362, %v312
      %v407 = vmul.f32 %v381, %v311
      %v408 = vmul.f32 %v363, %v312
      %v409 = vmul.f32 %v382, %v311
      %v410 = vmul.f32 %v364, %v312
      %v411 = vmul.f32 %v383, %v311
      %v412 = vmul.f32 %v365, %v312
      %v413 = vmul.f32 %v384, %v311
      %v414 = vmul.f32 %v366, %v312
      %v415 = vmul.f32 %v385, %v311
      %v416 = vmul.f32 %v367, %v312
      %v417 = vmul.f32 %v386, %v311
      %v418 = vmul.f32 %v368, %v312
      %v419 = vmul.f32 %v387, %v311
      %v420 = vmul.f32 %v369, %v312
      %v421 = vmul.f32 %v388, %v311
      %v422 = vmul.f32 %v370, %v312
      %v423 = vmul.f32 %v389, %v311
      %v424 = vmul.f32 %v371, %v312
      %v425 = vmul.f32 %v390, %v311
      %v426 = vmul.f32 %v372, %v312
      %v427 = vpack.c.bf16 %v392, %v391
      %v428 = vpack.c.bf16 %v394, %v393
      %v429 = vpack.c.bf16 %v396, %v395
      %v430 = vpack.c.bf16 %v398, %v397
      %v431 = vpack.c.bf16 %v400, %v399
      %v432 = vpack.c.bf16 %v402, %v401
      %v433 = vpack.c.bf16 %v404, %v403
      %v434 = vpack.c.bf16 %v406, %v405
      %v435 = vpack.c.bf16 %v408, %v407
      %v436 = vpack.c.bf16 %v410, %v409
      %v437 = vpack.c.bf16 %v412, %v411
      %v438 = vpack.c.bf16 %v414, %v413
      %v439 = vpack.c.bf16 %v416, %v415
      %v440 = vpack.c.bf16 %v418, %v417
      %v441 = vpack.c.bf16 %v420, %v419
      %v442 = vpack.c.bf16 %v422, %v421
      %v443 = vpack.c.bf16 %v424, %v423
      %v444 = vpack.c.bf16 %v426, %v425
      %v461 = vunpack.c.l.b16 %v427
      %v462 = vunpack.c.h.b16 %v427
      %v463 = vunpack.c.l.b16 %v428
      %v464 = vunpack.c.h.b16 %v428
      %v465 = vunpack.c.l.b16 %v429
      %v466 = vunpack.c.h.b16 %v429
      %v467 = vunpack.c.l.b16 %v430
      %v468 = vunpack.c.h.b16 %v430
      %v469 = vunpack.c.l.b16 %v431
      %v470 = vunpack.c.h.b16 %v431
      %v471 = vunpack.c.l.b16 %v432
      %v472 = vunpack.c.h.b16 %v432
      %v473 = vunpack.c.l.b16 %v433
      %v474 = vunpack.c.h.b16 %v433
      %v475 = vunpack.c.l.b16 %v434
      %v476 = vunpack.c.h.b16 %v434
      %v477 = vunpack.c.l.b16 %v435
      %v478 = vunpack.c.h.b16 %v435
      %v479 = vunpack.c.l.b16 %v436
      %v480 = vunpack.c.h.b16 %v436
      %v481 = vunpack.c.l.b16 %v437
      %v482 = vunpack.c.h.b16 %v437
      %v483 = vunpack.c.l.b16 %v438
      %v484 = vunpack.c.h.b16 %v438
      %v485 = vunpack.c.l.b16 %v439
      %v486 = vunpack.c.h.b16 %v439
      %v487 = vunpack.c.l.b16 %v440
      %v488 = vunpack.c.h.b16 %v440
      %v489 = vunpack.c.l.b16 %v441
      %v490 = vunpack.c.h.b16 %v441
      %v491 = vunpack.c.l.b16 %v442
      %v492 = vunpack.c.h.b16 %v442
      %v493 = vpack.c.b16 %v461, %v461
      %v494 = vpack.c.b16 %v462, %v462
      %v495 = vpack.c.b16 %v463, %v463
      %v496 = vpack.c.b16 %v464, %v464
      %v497 = vpack.c.b16 %v465, %v465
      %v498 = vpack.c.b16 %v466, %v466
      %v499 = vpack.c.b16 %v467, %v467
      %v500 = vpack.c.b16 %v468, %v468
      %v501 = vpack.c.b16 %v469, %v469
      %v502 = vpack.c.b16 %v470, %v470
      %v503 = vpack.c.b16 %v471, %v471
      %v504 = vpack.c.b16 %v472, %v472
      %v505 = vpack.c.b16 %v473, %v473
      %v506 = vpack.c.b16 %v474, %v474
      %v507 = vpack.c.b16 %v475, %v475
      %v508 = vpack.c.b16 %v476, %v476
      %v509 = vpack.c.b16 %v477, %v477
      %v510 = vpack.c.b16 %v478, %v478
      %v511 = vpack.c.b16 %v479, %v479
      %v512 = vpack.c.b16 %v480, %v480
      %v513 = vpack.c.b16 %v481, %v481
      %v514 = vpack.c.b16 %v482, %v482
      %v515 = vpack.c.b16 %v483, %v483
      %v516 = vpack.c.b16 %v484, %v484
      %v517 = vpack.c.b16 %v485, %v485
      %v518 = vpack.c.b16 %v486, %v486
      %v519 = vpack.c.b16 %v487, %v487
      %v520 = vpack.c.b16 %v488, %v488
      %v521 = vpack.c.b16 %v489, %v489
      %v522 = vpack.c.b16 %v490, %v490
      %v523 = vpack.c.b16 %v491, %v491
      %v524 = vpack.c.b16 %v492, %v492
      %557 = vst [vmem:[#allocation3] sm:$0xf] %v493
      %558 = vst [vmem:[#allocation3 + $0x24] sm:$0xf] %v494
      %559 = vst [vmem:[#allocation3 + $0x48] sm:$0xf] %v495
      %560 = vst [vmem:[#allocation3 + $0x6c] sm:$0xf] %v496
      %561 = vst [vmem:[#allocation3 + $0x90] sm:$0xf] %v497
      %562 = vst [vmem:[#allocation3 + $0xb4] sm:$0xf] %v498
      %563 = vst [vmem:[#allocation3 + $0xd8] sm:$0xf] %v499
      %564 = vst [vmem:[#allocation3 + $0xfc] sm:$0xf] %v500
      %565 = vst [vmem:[#allocation3 + $0x120] sm:$0xf] %v501
      %566 = vst [vmem:[#allocation3 + $0x144] sm:$0xf] %v502
      %567 = vst [vmem:[#allocation3 + $0x168] sm:$0xf] %v503
      %568 = vst [vmem:[#allocation3 + $0x18c] sm:$0xf] %v504
      %569 = vst [vmem:[#allocation3 + $0x1b0] sm:$0xf] %v505
      %570 = vst [vmem:[#allocation3 + $0x1d4] sm:$0xf] %v506
      %571 = vst [vmem:[#allocation3 + $0x1f8] sm:$0xf] %v507
      %572 = vst [vmem:[#allocation3 + $0x21c] sm:$0xf] %v508
      %573 = vst [vmem:[#allocation3 + $0x240] sm:$0xf] %v509
      %574 = vst [vmem:[#allocation3 + $0x264] sm:$0xf] %v510
      %575 = vst [vmem:[#allocation3 + $0x288] sm:$0xf] %v511
      %576 = vst [vmem:[#allocation3 + $0x2ac] sm:$0xf] %v512
      %577 = vst [vmem:[#allocation3 + $0x2d0] sm:$0xf] %v513
      %578 = vst [vmem:[#allocation3 + $0x2f4] sm:$0xf] %v514
      %579 = vst [vmem:[#allocation3 + $0x318] sm:$0xf] %v515
      %580 = vst [vmem:[#allocation3 + $0x33c] sm:$0xf] %v516
      %581 = vst [vmem:[#allocation3 + $0x360] sm:$0xf] %v517
      %582 = vst [vmem:[#allocation3 + $0x384] sm:$0xf] %v518
      %583 = vst [vmem:[#allocation3 + $0x3a8] sm:$0xf] %v519
      %584 = vst [vmem:[#allocation3 + $0x3cc] sm:$0xf] %v520
      %585 = vst [vmem:[#allocation3 + $0x3f0] sm:$0xf] %v521
      %586 = vst [vmem:[#allocation3 + $0x414] sm:$0xf] %v522
      %587 = vst [vmem:[#allocation3 + $0x438] sm:$0xf] %v523
      %588 = vst [vmem:[#allocation3 + $0x45c] sm:$0xf] %v524
      %v590 = vunpack.c.l.b16 %v443
      %v591 = vunpack.c.h.b16 %v443
      %v592 = vpack.c.b16 %v590, %v590
      %v593 = vpack.c.b16 %v591, %v591
      %596 = vst [vmem:[#allocation3 + $0xc] sm:$0xf] %v495
      %597 = vst [vmem:[#allocation3 + $0x30] sm:$0xf] %v496
      %598 = vst [vmem:[#allocation3 + $0x54] sm:$0xf] %v497
      %599 = vst [vmem:[#allocation3 + $0x78] sm:$0xf] %v498
      %600 = vst [vmem:[#allocation3 + $0x9c] sm:$0xf] %v499
      %601 = vst [vmem:[#allocation3 + $0xc0] sm:$0xf] %v500
      %602 = vst [vmem:[#allocation3 + $0xe4] sm:$0xf] %v501
      %603 = vst [vmem:[#allocation3 + $0x108] sm:$0xf] %v502
      %604 = vst [vmem:[#allocation3 + $0x12c] sm:$0xf] %v503
      %605 = vst [vmem:[#allocation3 + $0x150] sm:$0xf] %v504
      %606 = vst [vmem:[#allocation3 + $0x174] sm:$0xf] %v505
      %607 = vst [vmem:[#allocation3 + $0x198] sm:$0xf] %v506
      %608 = vst [vmem:[#allocation3 + $0x1bc] sm:$0xf] %v507
      %609 = vst [vmem:[#allocation3 + $0x1e0] sm:$0xf] %v508
      %610 = vst [vmem:[#allocation3 + $0x204] sm:$0xf] %v509
      %611 = vst [vmem:[#allocation3 + $0x228] sm:$0xf] %v510
      %612 = vst [vmem:[#allocation3 + $0x24c] sm:$0xf] %v511
      %613 = vst [vmem:[#allocation3 + $0x270] sm:$0xf] %v512
      %614 = vst [vmem:[#allocation3 + $0x294] sm:$0xf] %v513
      %615 = vst [vmem:[#allocation3 + $0x2b8] sm:$0xf] %v514
      %616 = vst [vmem:[#allocation3 + $0x2dc] sm:$0xf] %v515
      %617 = vst [vmem:[#allocation3 + $0x300] sm:$0xf] %v516
      %618 = vst [vmem:[#allocation3 + $0x324] sm:$0xf] %v517
      %619 = vst [vmem:[#allocation3 + $0x348] sm:$0xf] %v518
      %620 = vst [vmem:[#allocation3 + $0x36c] sm:$0xf] %v519
      %621 = vst [vmem:[#allocation3 + $0x390] sm:$0xf] %v520
      %622 = vst [vmem:[#allocation3 + $0x3b4] sm:$0xf] %v521
      %623 = vst [vmem:[#allocation3 + $0x3d8] sm:$0xf] %v522
      %624 = vst [vmem:[#allocation3 + $0x3fc] sm:$0xf] %v523
      %625 = vst [vmem:[#allocation3 + $0x420] sm:$0xf] %v524
      %626 = vst [vmem:[#allocation3 + $0x444] sm:$0xf] %v592
      %627 = vst [vmem:[#allocation3 + $0x468] sm:$0xf] %v593
      %v629 = vunpack.c.l.b16 %v444
      %v630 = vunpack.c.h.b16 %v444
      %v631 = vpack.c.b16 %v629, %v629
      %v632 = vpack.c.b16 %v630, %v630
      %635 = vst [vmem:[#allocation3 + $0x18] sm:$0xf] %v497
      %636 = vst [vmem:[#allocation3 + $0x3c] sm:$0xf] %v498
      %637 = vst [vmem:[#allocation3 + $0x60] sm:$0xf] %v499
      %638 = vst [vmem:[#allocation3 + $0x84] sm:$0xf] %v500
      %639 = vst [vmem:[#allocation3 + $0xa8] sm:$0xf] %v501
      %640 = vst [vmem:[#allocation3 + $0xcc] sm:$0xf] %v502
      %641 = vst [vmem:[#allocation3 + $0xf0] sm:$0xf] %v503
      %642 = vst [vmem:[#allocation3 + $0x114] sm:$0xf] %v504
      %643 = vst [vmem:[#allocation3 + $0x138] sm:$0xf] %v505
      %644 = vst [vmem:[#allocation3 + $0x15c] sm:$0xf] %v506
      %645 = vst [vmem:[#allocation3 + $0x180] sm:$0xf] %v507
      %646 = vst [vmem:[#allocation3 + $0x1a4] sm:$0xf] %v508
      %647 = vst [vmem:[#allocation3 + $0x1c8] sm:$0xf] %v509
      %648 = vst [vmem:[#allocation3 + $0x1ec] sm:$0xf] %v510
      %649 = vst [vmem:[#allocation3 + $0x210] sm:$0xf] %v511
      %650 = vst [vmem:[#allocation3 + $0x234] sm:$0xf] %v512
      %651 = vst [vmem:[#allocation3 + $0x258] sm:$0xf] %v513
      %652 = vst [vmem:[#allocation3 + $0x27c] sm:$0xf] %v514
      %653 = vst [vmem:[#allocation3 + $0x2a0] sm:$0xf] %v515
      %654 = vst [vmem:[#allocation3 + $0x2c4] sm:$0xf] %v516
      %655 = vst [vmem:[#allocation3 + $0x2e8] sm:$0xf] %v517
      %656 = vst [vmem:[#allocation3 + $0x30c] sm:$0xf] %v518
      %657 = vst [vmem:[#allocation3 + $0x330] sm:$0xf] %v519
      %658 = vst [vmem:[#allocation3 + $0x354] sm:$0xf] %v520
      %659 = vst [vmem:[#allocation3 + $0x378] sm:$0xf] %v521
      %660 = vst [vmem:[#allocation3 + $0x39c] sm:$0xf] %v522
      %661 = vst [vmem:[#allocation3 + $0x3c0] sm:$0xf] %v523
      %662 = vst [vmem:[#allocation3 + $0x3e4] sm:$0xf] %v524
      %663 = vst [vmem:[#allocation3 + $0x408] sm:$0xf] %v592
      %664 = vst [vmem:[#allocation3 + $0x42c] sm:$0xf] %v593
      %665 = vst [vmem:[#allocation3 + $0x450] sm:$0xf] %v631
      %666 = vst [vmem:[#allocation3 + $0x474] sm:$0xf] %v632
      %v667 = vpack.c.bf16 %v276, %v275
      %v668 = vpack.c.bf16 %v278, %v277
      %v669 = vpack.c.bf16 %v280, %v279
      %v670 = vpack.c.bf16 %v282, %v281
      %v671 = vpack.c.bf16 %v284, %v283
      %v672 = vpack.c.bf16 %v286, %v285
      %v673 = vpack.c.bf16 %v288, %v287
      %v674 = vpack.c.bf16 %v290, %v289
      %v675 = vpack.c.bf16 %v292, %v291
      %v676 = vpack.c.bf16 %v294, %v293
      %v677 = vpack.c.bf16 %v296, %v295
      %v678 = vpack.c.bf16 %v298, %v297
      %v679 = vpack.c.bf16 %v300, %v299
      %v680 = vpack.c.bf16 %v302, %v301
      %v681 = vpack.c.bf16 %v304, %v303
      %v682 = vpack.c.bf16 %v306, %v305
      %v683 = vpack.c.bf16 %v308, %v307
      %v684 = vpack.c.bf16 %v310, %v309
      %v701 = vunpack.c.l.b16 %v667
      %v702 = vunpack.c.h.b16 %v667
      %v703 = vunpack.c.l.b16 %v668
      %v704 = vunpack.c.h.b16 %v668
      %v705 = vunpack.c.l.b16 %v669
      %v706 = vunpack.c.h.b16 %v669
      %v707 = vunpack.c.l.b16 %v670
      %v708 = vunpack.c.h.b16 %v670
      %v709 = vunpack.c.l.b16 %v671
      %v710 = vunpack.c.h.b16 %v671
      %v711 = vunpack.c.l.b16 %v672
      %v712 = vunpack.c.h.b16 %v672
      %v713 = vunpack.c.l.b16 %v673
      %v714 = vunpack.c.h.b16 %v673
      %v715 = vunpack.c.l.b16 %v674
      %v716 = vunpack.c.h.b16 %v674
      %v717 = vunpack.c.l.b16 %v675
      %v718 = vunpack.c.h.b16 %v675
      %v719 = vunpack.c.l.b16 %v676
      %v720 = vunpack.c.h.b16 %v676
      %v721 = vunpack.c.l.b16 %v677
      %v722 = vunpack.c.h.b16 %v677
      %v723 = vunpack.c.l.b16 %v678
      %v724 = vunpack.c.h.b16 %v678
      %v725 = vunpack.c.l.b16 %v679
      %v726 = vunpack.c.h.b16 %v679
      %v727 = vunpack.c.l.b16 %v680
      %v728 = vunpack.c.h.b16 %v680
      %v729 = vunpack.c.l.b16 %v681
      %v730 = vunpack.c.h.b16 %v681
      %v731 = vunpack.c.l.b16 %v682
      %v732 = vunpack.c.h.b16 %v682
      %v733 = vpack.c.b16 %v701, %v701
      %v734 = vpack.c.b16 %v702, %v702
      %v735 = vpack.c.b16 %v703, %v703
      %v736 = vpack.c.b16 %v704, %v704
      %v737 = vpack.c.b16 %v705, %v705
      %v738 = vpack.c.b16 %v706, %v706
      %v739 = vpack.c.b16 %v707, %v707
      %v740 = vpack.c.b16 %v708, %v708
      %v741 = vpack.c.b16 %v709, %v709
      %v742 = vpack.c.b16 %v710, %v710
      %v743 = vpack.c.b16 %v711, %v711
      %v744 = vpack.c.b16 %v712, %v712
      %v745 = vpack.c.b16 %v713, %v713
      %v746 = vpack.c.b16 %v714, %v714
      %v747 = vpack.c.b16 %v715, %v715
      %v748 = vpack.c.b16 %v716, %v716
      %v749 = vpack.c.b16 %v717, %v717
      %v750 = vpack.c.b16 %v718, %v718
      %v751 = vpack.c.b16 %v719, %v719
      %v752 = vpack.c.b16 %v720, %v720
      %v753 = vpack.c.b16 %v721, %v721
      %v754 = vpack.c.b16 %v722, %v722
      %v755 = vpack.c.b16 %v723, %v723
      %v756 = vpack.c.b16 %v724, %v724
      %v757 = vpack.c.b16 %v725, %v725
      %v758 = vpack.c.b16 %v726, %v726
      %v759 = vpack.c.b16 %v727, %v727
      %v760 = vpack.c.b16 %v728, %v728
      %v761 = vpack.c.b16 %v729, %v729
      %v762 = vpack.c.b16 %v730, %v730
      %v763 = vpack.c.b16 %v731, %v731
      %v764 = vpack.c.b16 %v732, %v732
      %797 = vst [vmem:[#allocation3 + $0x4] sm:$0xf] %v733
      %798 = vst [vmem:[#allocation3 + $0x28] sm:$0xf] %v734
      %799 = vst [vmem:[#allocation3 + $0x4c] sm:$0xf] %v735
      %800 = vst [vmem:[#allocation3 + $0x70] sm:$0xf] %v736
      %801 = vst [vmem:[#allocation3 + $0x94] sm:$0xf] %v737
      %802 = vst [vmem:[#allocation3 + $0xb8] sm:$0xf] %v738
      %803 = vst [vmem:[#allocation3 + $0xdc] sm:$0xf] %v739
      %804 = vst [vmem:[#allocation3 + $0x100] sm:$0xf] %v740
      %805 = vst [vmem:[#allocation3 + $0x124] sm:$0xf] %v741
      %806 = vst [vmem:[#allocation3 + $0x148] sm:$0xf] %v742
      %807 = vst [vmem:[#allocation3 + $0x16c] sm:$0xf] %v743
      %808 = vst [vmem:[#allocation3 + $0x190] sm:$0xf] %v744
      %809 = vst [vmem:[#allocation3 + $0x1b4] sm:$0xf] %v745
      %810 = vst [vmem:[#allocation3 + $0x1d8] sm:$0xf] %v746
      %811 = vst [vmem:[#allocation3 + $0x1fc] sm:$0xf] %v747
      %812 = vst [vmem:[#allocation3 + $0x220] sm:$0xf] %v748
      %813 = vst [vmem:[#allocation3 + $0x244] sm:$0xf] %v749
      %814 = vst [vmem:[#allocation3 + $0x268] sm:$0xf] %v750
      %815 = vst [vmem:[#allocation3 + $0x28c] sm:$0xf] %v751
      %816 = vst [vmem:[#allocation3 + $0x2b0] sm:$0xf] %v752
      %817 = vst [vmem:[#allocation3 + $0x2d4] sm:$0xf] %v753
      %818 = vst [vmem:[#allocation3 + $0x2f8] sm:$0xf] %v754
      %819 = vst [vmem:[#allocation3 + $0x31c] sm:$0xf] %v755
      %820 = vst [vmem:[#allocation3 + $0x340] sm:$0xf] %v756
      %821 = vst [vmem:[#allocation3 + $0x364] sm:$0xf] %v757
      %822 = vst [vmem:[#allocation3 + $0x388] sm:$0xf] %v758
      %823 = vst [vmem:[#allocation3 + $0x3ac] sm:$0xf] %v759
      %824 = vst [vmem:[#allocation3 + $0x3d0] sm:$0xf] %v760
      %825 = vst [vmem:[#allocation3 + $0x3f4] sm:$0xf] %v761
      %826 = vst [vmem:[#allocation3 + $0x418] sm:$0xf] %v762
      %827 = vst [vmem:[#allocation3 + $0x43c] sm:$0xf] %v763
      %828 = vst [vmem:[#allocation3 + $0x460] sm:$0xf] %v764
      %v830 = vunpack.c.l.b16 %v683
      %v831 = vunpack.c.h.b16 %v683
      %v832 = vpack.c.b16 %v830, %v830
      %v833 = vpack.c.b16 %v831, %v831
      %836 = vst [vmem:[#allocation3 + $0x10] sm:$0xf] %v735
      %837 = vst [vmem:[#allocation3 + $0x34] sm:$0xf] %v736
      %838 = vst [vmem:[#allocation3 + $0x58] sm:$0xf] %v737
      %839 = vst [vmem:[#allocation3 + $0x7c] sm:$0xf] %v738
      %840 = vst [vmem:[#allocation3 + $0xa0] sm:$0xf] %v739
      %841 = vst [vmem:[#allocation3 + $0xc4] sm:$0xf] %v740
      %842 = vst [vmem:[#allocation3 + $0xe8] sm:$0xf] %v741
      %843 = vst [vmem:[#allocation3 + $0x10c] sm:$0xf] %v742
      %844 = vst [vmem:[#allocation3 + $0x130] sm:$0xf] %v743
      %845 = vst [vmem:[#allocation3 + $0x154] sm:$0xf] %v744
      %846 = vst [vmem:[#allocation3 + $0x178] sm:$0xf] %v745
      %847 = vst [vmem:[#allocation3 + $0x19c] sm:$0xf] %v746
      %848 = vst [vmem:[#allocation3 + $0x1c0] sm:$0xf] %v747
      %849 = vst [vmem:[#allocation3 + $0x1e4] sm:$0xf] %v748
      %850 = vst [vmem:[#allocation3 + $0x208] sm:$0xf] %v749
      %851 = vst [vmem:[#allocation3 + $0x22c] sm:$0xf] %v750
      %852 = vst [vmem:[#allocation3 + $0x250] sm:$0xf] %v751
      %853 = vst [vmem:[#allocation3 + $0x274] sm:$0xf] %v752
      %854 = vst [vmem:[#allocation3 + $0x298] sm:$0xf] %v753
      %855 = vst [vmem:[#allocation3 + $0x2bc] sm:$0xf] %v754
      %856 = vst [vmem:[#allocation3 + $0x2e0] sm:$0xf] %v755
      %857 = vst [vmem:[#allocation3 + $0x304] sm:$0xf] %v756
      %858 = vst [vmem:[#allocation3 + $0x328] sm:$0xf] %v757
      %859 = vst [vmem:[#allocation3 + $0x34c] sm:$0xf] %v758
      %860 = vst [vmem:[#allocation3 + $0x370] sm:$0xf] %v759
      %861 = vst [vmem:[#allocation3 + $0x394] sm:$0xf] %v760
      %862 = vst [vmem:[#allocation3 + $0x3b8] sm:$0xf] %v761
      %863 = vst [vmem:[#allocation3 + $0x3dc] sm:$0xf] %v762
      %864 = vst [vmem:[#allocation3 + $0x400] sm:$0xf] %v763
      %865 = vst [vmem:[#allocation3 + $0x424] sm:$0xf] %v764
      %866 = vst [vmem:[#allocation3 + $0x448] sm:$0xf] %v832
      %867 = vst [vmem:[#allocation3 + $0x46c] sm:$0xf] %v833
      %v869 = vunpack.c.l.b16 %v684
      %v870 = vunpack.c.h.b16 %v684
      %v871 = vpack.c.b16 %v869, %v869
      %v872 = vpack.c.b16 %v870, %v870
      %875 = vst [vmem:[#allocation3 + $0x1c] sm:$0xf] %v737
      %876 = vst [vmem:[#allocation3 + $0x40] sm:$0xf] %v738
      %877 = vst [vmem:[#allocation3 + $0x64] sm:$0xf] %v739
      %878 = vst [vmem:[#allocation3 + $0x88] sm:$0xf] %v740
      %879 = vst [vmem:[#allocation3 + $0xac] sm:$0xf] %v741
      %880 = vst [vmem:[#allocation3 + $0xd0] sm:$0xf] %v742
      %881 = vst [vmem:[#allocation3 + $0xf4] sm:$0xf] %v743
      %882 = vst [vmem:[#allocation3 + $0x118] sm:$0xf] %v744
      %883 = vst [vmem:[#allocation3 + $0x13c] sm:$0xf] %v745
      %884 = vst [vmem:[#allocation3 + $0x160] sm:$0xf] %v746
      %885 = vst [vmem:[#allocation3 + $0x184] sm:$0xf] %v747
      %886 = vst [vmem:[#allocation3 + $0x1a8] sm:$0xf] %v748
      %887 = vst [vmem:[#allocation3 + $0x1cc] sm:$0xf] %v749
      %888 = vst [vmem:[#allocation3 + $0x1f0] sm:$0xf] %v750
      %889 = vst [vmem:[#allocation3 + $0x214] sm:$0xf] %v751
      %890 = vst [vmem:[#allocation3 + $0x238] sm:$0xf] %v752
      %891 = vst [vmem:[#allocation3 + $0x25c] sm:$0xf] %v753
      %892 = vst [vmem:[#allocation3 + $0x280] sm:$0xf] %v754
      %893 = vst [vmem:[#allocation3 + $0x2a4] sm:$0xf] %v755
      %894 = vst [vmem:[#allocation3 + $0x2c8] sm:$0xf] %v756
      %895 = vst [vmem:[#allocation3 + $0x2ec] sm:$0xf] %v757
      %896 = vst [vmem:[#allocation3 + $0x310] sm:$0xf] %v758
      %897 = vst [vmem:[#allocation3 + $0x334] sm:$0xf] %v759
      %898 = vst [vmem:[#allocation3 + $0x358] sm:$0xf] %v760
      %899 = vst [vmem:[#allocation3 + $0x37c] sm:$0xf] %v761
      %900 = vst [vmem:[#allocation3 + $0x3a0] sm:$0xf] %v762
      %901 = vst [vmem:[#allocation3 + $0x3c4] sm:$0xf] %v763
      %902 = vst [vmem:[#allocation3 + $0x3e8] sm:$0xf] %v764
      %903 = vst [vmem:[#allocation3 + $0x40c] sm:$0xf] %v832
      %904 = vst [vmem:[#allocation3 + $0x430] sm:$0xf] %v833
      %905 = vst [vmem:[#allocation3 + $0x454] sm:$0xf] %v871
      %906 = vst [vmem:[#allocation3 + $0x478] sm:$0xf] %v872
      %v907 = vrot.slane %v275, 1
      %v908 = vrot.slane %v277, 1
      %v909 = vrot.slane %v279, 1
      %v910 = vrot.slane %v281, 1
      %v911 = vrot.slane %v283, 1
      %v912 = vrot.slane %v285, 1
      %v913 = vrot.slane %v287, 1
      %v914 = vrot.slane %v289, 1
      %v915 = vrot.slane %v291, 1
      %v916 = vrot.slane %v293, 1
      %v917 = vrot.slane %v295, 1
      %v918 = vrot.slane %v297, 1
      %v919 = vrot.slane %v299, 1
      %v920 = vrot.slane %v301, 1
      %v921 = vrot.slane %v303, 1
      %v922 = vrot.slane %v305, 1
      %v923 = vrot.slane %v307, 1
      %v924 = vrot.slane %v309, 1
      %v925 = vrot.slane %v276, 1
      %v926 = vrot.slane %v278, 1
      %v927 = vrot.slane %v280, 1
      %v928 = vrot.slane %v282, 1
      %v929 = vrot.slane %v284, 1
      %v930 = vrot.slane %v286, 1
      %v931 = vrot.slane %v288, 1
      %v932 = vrot.slane %v290, 1
      %v933 = vrot.slane %v292, 1
      %v934 = vrot.slane %v294, 1
      %v935 = vrot.slane %v296, 1
      %v936 = vrot.slane %v298, 1
      %v937 = vrot.slane %v300, 1
      %v938 = vrot.slane %v302, 1
      %v939 = vrot.slane %v304, 1
      %v940 = vrot.slane %v306, 1
      %v941 = vrot.slane %v308, 1
      %v942 = vrot.slane %v310, 1
      %vm943 = vcmp.lt.s32.totalorder %v353, 7
      %v944 = vsel %vm943, %v907, %v925
      %v945 = vsel %vm943, %v908, %v926
      %v946 = vsel %vm943, %v909, %v927
      %v947 = vsel %vm943, %v910, %v928
      %v948 = vsel %vm943, %v911, %v929
      %v949 = vsel %vm943, %v912, %v930
      %v950 = vsel %vm943, %v913, %v931
      %v951 = vsel %vm943, %v914, %v932
      %v952 = vsel %vm943, %v915, %v933
      %v953 = vsel %vm943, %v916, %v934
      %v954 = vsel %vm943, %v917, %v935
      %v955 = vsel %vm943, %v918, %v936
      %v956 = vsel %vm943, %v919, %v937
      %v957 = vsel %vm943, %v920, %v938
      %v958 = vsel %vm943, %v921, %v939
      %v959 = vsel %vm943, %v922, %v940
      %v960 = vsel %vm943, %v923, %v941
      %v961 = vsel %vm943, %v924, %v942
      %v962 = vsel %vm943, %v925, %v907
      %v963 = vsel %vm943, %v926, %v908
      %v964 = vsel %vm943, %v927, %v909
      %v965 = vsel %vm943, %v928, %v910
      %v966 = vsel %vm943, %v929, %v911
      %v967 = vsel %vm943, %v930, %v912
      %v968 = vsel %vm943, %v931, %v913
      %v969 = vsel %vm943, %v932, %v914
      %v970 = vsel %vm943, %v933, %v915
      %v971 = vsel %vm943, %v934, %v916
      %v972 = vsel %vm943, %v935, %v917
      %v973 = vsel %vm943, %v936, %v918
      %v974 = vsel %vm943, %v937, %v919
      %v975 = vsel %vm943, %v938, %v920
      %v976 = vsel %vm943, %v939, %v921
      %v977 = vsel %vm943, %v940, %v922
      %v978 = vsel %vm943, %v941, %v923
      %v979 = vsel %vm943, %v942, %v924
      %v980 = vmul.f32 %v944, %v314
      %v981 = vmul.f32 %v962, %v315
      %v982 = vmul.f32 %v945, %v314
      %v983 = vmul.f32 %v963, %v315
      %v984 = vmul.f32 %v946, %v314
      %v985 = vmul.f32 %v964, %v315
      %v986 = vmul.f32 %v947, %v314
      %v987 = vmul.f32 %v965, %v315
      %v988 = vmul.f32 %v948, %v314
      %v989 = vmul.f32 %v966, %v315
      %v990 = vmul.f32 %v949, %v314
      %v991 = vmul.f32 %v967, %v315
      %v992 = vmul.f32 %v950, %v314
      %v993 = vmul.f32 %v968, %v315
      %v994 = vmul.f32 %v951, %v314
      %v995 = vmul.f32 %v969, %v315
      %v996 = vmul.f32 %v952, %v314
      %v997 = vmul.f32 %v970, %v315
      %v998 = vmul.f32 %v953, %v314
      %v999 = vmul.f32 %v971, %v315
      %v1000 = vmul.f32 %v954, %v314
      %v1001 = vmul.f32 %v972, %v315
      %v1002 = vmul.f32 %v955, %v314
      %v1003 = vmul.f32 %v973, %v315
      %v1004 = vmul.f32 %v956, %v314
      %v1005 = vmul.f32 %v974, %v315
      %v1006 = vmul.f32 %v957, %v314
      %v1007 = vmul.f32 %v975, %v315
      %v1008 = vmul.f32 %v958, %v314
      %v1009 = vmul.f32 %v976, %v315
      %v1010 = vmul.f32 %v959, %v314
      %v1011 = vmul.f32 %v977, %v315
      %v1012 = vmul.f32 %v960, %v314
      %v1013 = vmul.f32 %v978, %v315
      %v1014 = vmul.f32 %v961, %v314
      %v1015 = vmul.f32 %v979, %v315
      %v1016 = vpack.c.bf16 %v981, %v980
      %v1017 = vpack.c.bf16 %v983, %v982
      %v1018 = vpack.c.bf16 %v985, %v984
      %v1019 = vpack.c.bf16 %v987, %v986
      %v1020 = vpack.c.bf16 %v989, %v988
      %v1021 = vpack.c.bf16 %v991, %v990
      %v1022 = vpack.c.bf16 %v993, %v992
      %v1023 = vpack.c.bf16 %v995, %v994
      %v1024 = vpack.c.bf16 %v997, %v996
      %v1025 = vpack.c.bf16 %v999, %v998
      %v1026 = vpack.c.bf16 %v1001, %v1000
      %v1027 = vpack.c.bf16 %v1003, %v1002
      %v1028 = vpack.c.bf16 %v1005, %v1004
      %v1029 = vpack.c.bf16 %v1007, %v1006
      %v1030 = vpack.c.bf16 %v1009, %v1008
      %v1031 = vpack.c.bf16 %v1011, %v1010
      %v1032 = vpack.c.bf16 %v1013, %v1012
      %v1033 = vpack.c.bf16 %v1015, %v1014
      %v1050 = vunpack.c.l.b16 %v1016
      %v1051 = vunpack.c.h.b16 %v1016
      %v1052 = vunpack.c.l.b16 %v1017
      %v1053 = vunpack.c.h.b16 %v1017
      %v1054 = vunpack.c.l.b16 %v1018
      %v1055 = vunpack.c.h.b16 %v1018
      %v1056 = vunpack.c.l.b16 %v1019
      %v1057 = vunpack.c.h.b16 %v1019
      %v1058 = vunpack.c.l.b16 %v1020
      %v1059 = vunpack.c.h.b16 %v1020
      %v1060 = vunpack.c.l.b16 %v1021
      %v1061 = vunpack.c.h.b16 %v1021
      %v1062 = vunpack.c.l.b16 %v1022
      %v1063 = vunpack.c.h.b16 %v1022
      %v1064 = vunpack.c.l.b16 %v1023
      %v1065 = vunpack.c.h.b16 %v1023
      %v1066 = vunpack.c.l.b16 %v1024
      %v1067 = vunpack.c.h.b16 %v1024
      %v1068 = vunpack.c.l.b16 %v1025
      %v1069 = vunpack.c.h.b16 %v1025
      %v1070 = vunpack.c.l.b16 %v1026
      %v1071 = vunpack.c.h.b16 %v1026
      %v1072 = vunpack.c.l.b16 %v1027
      %v1073 = vunpack.c.h.b16 %v1027
      %v1074 = vunpack.c.l.b16 %v1028
      %v1075 = vunpack.c.h.b16 %v1028
      %v1076 = vunpack.c.l.b16 %v1029
      %v1077 = vunpack.c.h.b16 %v1029
      %v1078 = vunpack.c.l.b16 %v1030
      %v1079 = vunpack.c.h.b16 %v1030
      %v1080 = vunpack.c.l.b16 %v1031
      %v1081 = vunpack.c.h.b16 %v1031
      %v1082 = vpack.c.b16 %v1050, %v1050
      %v1083 = vpack.c.b16 %v1051, %v1051
      %v1084 = vpack.c.b16 %v1052, %v1052
      %v1085 = vpack.c.b16 %v1053, %v1053
      %v1086 = vpack.c.b16 %v1054, %v1054
      %v1087 = vpack.c.b16 %v1055, %v1055
      %v1088 = vpack.c.b16 %v1056, %v1056
      %v1089 = vpack.c.b16 %v1057, %v1057
      %v1090 = vpack.c.b16 %v1058, %v1058
      %v1091 = vpack.c.b16 %v1059, %v1059
      %v1092 = vpack.c.b16 %v1060, %v1060
      %v1093 = vpack.c.b16 %v1061, %v1061
      %v1094 = vpack.c.b16 %v1062, %v1062
      %v1095 = vpack.c.b16 %v1063, %v1063
      %v1096 = vpack.c.b16 %v1064, %v1064
      %v1097 = vpack.c.b16 %v1065, %v1065
      %v1098 = vpack.c.b16 %v1066, %v1066
      %v1099 = vpack.c.b16 %v1067, %v1067
      %v1100 = vpack.c.b16 %v1068, %v1068
      %v1101 = vpack.c.b16 %v1069, %v1069
      %v1102 = vpack.c.b16 %v1070, %v1070
      %v1103 = vpack.c.b16 %v1071, %v1071
      %v1104 = vpack.c.b16 %v1072, %v1072
      %v1105 = vpack.c.b16 %v1073, %v1073
      %v1106 = vpack.c.b16 %v1074, %v1074
      %v1107 = vpack.c.b16 %v1075, %v1075
      %v1108 = vpack.c.b16 %v1076, %v1076
      %v1109 = vpack.c.b16 %v1077, %v1077
      %v1110 = vpack.c.b16 %v1078, %v1078
      %v1111 = vpack.c.b16 %v1079, %v1079
      %v1112 = vpack.c.b16 %v1080, %v1080
      %v1113 = vpack.c.b16 %v1081, %v1081
      %1146 = vst [vmem:[#allocation3 + $0x8] sm:$0xf] %v1082
      %1147 = vst [vmem:[#allocation3 + $0x2c] sm:$0xf] %v1083
      %1148 = vst [vmem:[#allocation3 + $0x50] sm:$0xf] %v1084
      %1149 = vst [vmem:[#allocation3 + $0x74] sm:$0xf] %v1085
      %1150 = vst [vmem:[#allocation3 + $0x98] sm:$0xf] %v1086
      %1151 = vst [vmem:[#allocation3 + $0xbc] sm:$0xf] %v1087
      %1152 = vst [vmem:[#allocation3 + $0xe0] sm:$0xf] %v1088
      %1153 = vst [vmem:[#allocation3 + $0x104] sm:$0xf] %v1089
      %1154 = vst [vmem:[#allocation3 + $0x128] sm:$0xf] %v1090
      %1155 = vst [vmem:[#allocation3 + $0x14c] sm:$0xf] %v1091
      %1156 = vst [vmem:[#allocation3 + $0x170] sm:$0xf] %v1092
      %1157 = vst [vmem:[#allocation3 + $0x194] sm:$0xf] %v1093
      %1158 = vst [vmem:[#allocation3 + $0x1b8] sm:$0xf] %v1094
      %1159 = vst [vmem:[#allocation3 + $0x1dc] sm:$0xf] %v1095
      %1160 = vst [vmem:[#allocation3 + $0x200] sm:$0xf] %v1096
      %1161 = vst [vmem:[#allocation3 + $0x224] sm:$0xf] %v1097
      %1162 = vst [vmem:[#allocation3 + $0x248] sm:$0xf] %v1098
      %1163 = vst [vmem:[#allocation3 + $0x26c] sm:$0xf] %v1099
      %1164 = vst [vmem:[#allocation3 + $0x290] sm:$0xf] %v1100
      %1165 = vst [vmem:[#allocation3 + $0x2b4] sm:$0xf] %v1101
      %1166 = vst [vmem:[#allocation3 + $0x2d8] sm:$0xf] %v1102
      %1167 = vst [vmem:[#allocation3 + $0x2fc] sm:$0xf] %v1103
      %1168 = vst [vmem:[#allocation3 + $0x320] sm:$0xf] %v1104
      %1169 = vst [vmem:[#allocation3 + $0x344] sm:$0xf] %v1105
      %1170 = vst [vmem:[#allocation3 + $0x368] sm:$0xf] %v1106
      %1171 = vst [vmem:[#allocation3 + $0x38c] sm:$0xf] %v1107
      %1172 = vst [vmem:[#allocation3 + $0x3b0] sm:$0xf] %v1108
      %1173 = vst [vmem:[#allocation3 + $0x3d4] sm:$0xf] %v1109
      %1174 = vst [vmem:[#allocation3 + $0x3f8] sm:$0xf] %v1110
      %1175 = vst [vmem:[#allocation3 + $0x41c] sm:$0xf] %v1111
      %1176 = vst [vmem:[#allocation3 + $0x440] sm:$0xf] %v1112
      %1177 = vst [vmem:[#allocation3 + $0x464] sm:$0xf] %v1113
      %v1179 = vunpack.c.l.b16 %v1032
      %v1180 = vunpack.c.h.b16 %v1032
      %v1181 = vpack.c.b16 %v1179, %v1179
      %v1182 = vpack.c.b16 %v1180, %v1180
      %1185 = vst [vmem:[#allocation3 + $0x14] sm:$0xf] %v1084
      %1186 = vst [vmem:[#allocation3 + $0x38] sm:$0xf] %v1085
      %1187 = vst [vmem:[#allocation3 + $0x5c] sm:$0xf] %v1086
      %1188 = vst [vmem:[#allocation3 + $0x80] sm:$0xf] %v1087
      %1189 = vst [vmem:[#allocation3 + $0xa4] sm:$0xf] %v1088
      %1190 = vst [vmem:[#allocation3 + $0xc8] sm:$0xf] %v1089
      %1191 = vst [vmem:[#allocation3 + $0xec] sm:$0xf] %v1090
      %1192 = vst [vmem:[#allocation3 + $0x110] sm:$0xf] %v1091
      %1193 = vst [vmem:[#allocation3 + $0x134] sm:$0xf] %v1092
      %1194 = vst [vmem:[#allocation3 + $0x158] sm:$0xf] %v1093
      %1195 = vst [vmem:[#allocation3 + $0x17c] sm:$0xf] %v1094
      %1196 = vst [vmem:[#allocation3 + $0x1a0] sm:$0xf] %v1095
      %1197 = vst [vmem:[#allocation3 + $0x1c4] sm:$0xf] %v1096
      %1198 = vst [vmem:[#allocation3 + $0x1e8] sm:$0xf] %v1097
      %1199 = vst [vmem:[#allocation3 + $0x20c] sm:$0xf] %v1098
      %1200 = vst [vmem:[#allocation3 + $0x230] sm:$0xf] %v1099
      %1201 = vst [vmem:[#allocation3 + $0x254] sm:$0xf] %v1100
      %1202 = vst [vmem:[#allocation3 + $0x278] sm:$0xf] %v1101
      %1203 = vst [vmem:[#allocation3 + $0x29c] sm:$0xf] %v1102
      %1204 = vst [vmem:[#allocation3 + $0x2c0] sm:$0xf] %v1103
      %1205 = vst [vmem:[#allocation3 + $0x2e4] sm:$0xf] %v1104
      %1206 = vst [vmem:[#allocation3 + $0x308] sm:$0xf] %v1105
      %1207 = vst [vmem:[#allocation3 + $0x32c] sm:$0xf] %v1106
      %1208 = vst [vmem:[#allocation3 + $0x350] sm:$0xf] %v1107
      %1209 = vst [vmem:[#allocation3 + $0x374] sm:$0xf] %v1108
      %1210 = vst [vmem:[#allocation3 + $0x398] sm:$0xf] %v1109
      %1211 = vst [vmem:[#allocation3 + $0x3bc] sm:$0xf] %v1110
      %1212 = vst [vmem:[#allocation3 + $0x3e0] sm:$0xf] %v1111
      %1213 = vst [vmem:[#allocation3 + $0x404] sm:$0xf] %v1112
      %1214 = vst [vmem:[#allocation3 + $0x428] sm:$0xf] %v1113
      %1215 = vst [vmem:[#allocation3 + $0x44c] sm:$0xf] %v1181
      %1216 = vst [vmem:[#allocation3 + $0x470] sm:$0xf] %v1182
      %v1218 = vunpack.c.l.b16 %v1033
      %v1219 = vunpack.c.h.b16 %v1033
      %v1220 = vpack.c.b16 %v1218, %v1218
      %v1221 = vpack.c.b16 %v1219, %v1219
      %1224 = vst [vmem:[#allocation3 + $0x20] sm:$0xf] %v1086
      %1225 = vst [vmem:[#allocation3 + $0x44] sm:$0xf] %v1087
      %1226 = vst [vmem:[#allocation3 + $0x68] sm:$0xf] %v1088
      %1227 = vst [vmem:[#allocation3 + $0x8c] sm:$0xf] %v1089
      %1228 = vst [vmem:[#allocation3 + $0xb0] sm:$0xf] %v1090
      %1229 = vst [vmem:[#allocation3 + $0xd4] sm:$0xf] %v1091
      %1230 = vst [vmem:[#allocation3 + $0xf8] sm:$0xf] %v1092
      %1231 = vst [vmem:[#allocation3 + $0x11c] sm:$0xf] %v1093
      %1232 = vst [vmem:[#allocation3 + $0x140] sm:$0xf] %v1094
      %1233 = vst [vmem:[#allocation3 + $0x164] sm:$0xf] %v1095
      %1234 = vst [vmem:[#allocation3 + $0x188] sm:$0xf] %v1096
      %1235 = vst [vmem:[#allocation3 + $0x1ac] sm:$0xf] %v1097
      %1236 = vst [vmem:[#allocation3 + $0x1d0] sm:$0xf] %v1098
      %1237 = vst [vmem:[#allocation3 + $0x1f4] sm:$0xf] %v1099
      %1238 = vst [vmem:[#allocation3 + $0x218] sm:$0xf] %v1100
      %1239 = vst [vmem:[#allocation3 + $0x23c] sm:$0xf] %v1101
      %1240 = vst [vmem:[#allocation3 + $0x260] sm:$0xf] %v1102
      %1241 = vst [vmem:[#allocation3 + $0x284] sm:$0xf] %v1103
      %1242 = vst [vmem:[#allocation3 + $0x2a8] sm:$0xf] %v1104
      %1243 = vst [vmem:[#allocation3 + $0x2cc] sm:$0xf] %v1105
      %1244 = vst [vmem:[#allocation3 + $0x2f0] sm:$0xf] %v1106
      %1245 = vst [vmem:[#allocation3 + $0x314] sm:$0xf] %v1107
      %1246 = vst [vmem:[#allocation3 + $0x338] sm:$0xf] %v1108
      %1247 = vst [vmem:[#allocation3 + $0x35c] sm:$0xf] %v1109
      %1248 = vst [vmem:[#allocation3 + $0x380] sm:$0xf] %v1110
      %1249 = vst [vmem:[#allocation3 + $0x3a4] sm:$0xf] %v1111
      %1250 = vst [vmem:[#allocation3 + $0x3c8] sm:$0xf] %v1112
      %1251 = vst [vmem:[#allocation3 + $0x3ec] sm:$0xf] %v1113
      %1252 = vst [vmem:[#allocation3 + $0x410] sm:$0xf] %v1181
      %1253 = vst [vmem:[#allocation3 + $0x434] sm:$0xf] %v1182
      %1254 = vst [vmem:[#allocation3 + $0x458] sm:$0xf] %v1220
      %1255 = vst [vmem:[#allocation3 + $0x47c] sm:$0xf] %v1221
      %v1256 = vld [vmem:[#allocation3] sm:$0xff]
      %v1257 = vld [vmem:[#allocation3 + $0x8] sm:$0xff]
      %v1258 = vld [vmem:[#allocation3 + $0x10] sm:$0xff]
      %v1259 = vld [vmem:[#allocation3 + $0x18] sm:$0xff]
      %v1260 = vld [vmem:[#allocation3 + $0x20] sm:$0xf]
      %v1261 = vld [vmem:[#allocation3 + $0x24] sm:$0xff]
      %v1262 = vld [vmem:[#allocation3 + $0x2c] sm:$0xff]
      %v1263 = vld [vmem:[#allocation3 + $0x34] sm:$0xff]
      %v1264 = vld [vmem:[#allocation3 + $0x3c] sm:$0xff]
      %v1265 = vld [vmem:[#allocation3 + $0x44] sm:$0xf]
      %v1266 = vld [vmem:[#allocation3 + $0x48] sm:$0xff]
      %v1267 = vld [vmem:[#allocation3 + $0x50] sm:$0xff]
      %v1268 = vld [vmem:[#allocation3 + $0x58] sm:$0xff]
      %v1269 = vld [vmem:[#allocation3 + $0x60] sm:$0xff]
      %v1270 = vld [vmem:[#allocation3 + $0x68] sm:$0xf]
      %v1271 = vld [vmem:[#allocation3 + $0x6c] sm:$0xff]
      %v1272 = vld [vmem:[#allocation3 + $0x74] sm:$0xff]
      %v1273 = vld [vmem:[#allocation3 + $0x7c] sm:$0xff]
      %v1274 = vld [vmem:[#allocation3 + $0x84] sm:$0xff]
      %v1275 = vld [vmem:[#allocation3 + $0x8c] sm:$0xf]
      %v1276 = vld [vmem:[#allocation3 + $0x90] sm:$0xff]
      %v1277 = vld [vmem:[#allocation3 + $0x98] sm:$0xff]
      %v1278 = vld [vmem:[#allocation3 + $0xa0] sm:$0xff]
      %v1279 = vld [vmem:[#allocation3 + $0xa8] sm:$0xff]
      %v1280 = vld [vmem:[#allocation3 + $0xb0] sm:$0xf]
      %v1281 = vld [vmem:[#allocation3 + $0xb4] sm:$0xff]
      %v1282 = vld [vmem:[#allocation3 + $0xbc] sm:$0xff]
      %v1283 = vld [vmem:[#allocation3 + $0xc4] sm:$0xff]
      %v1284 = vld [vmem:[#allocation3 + $0xcc] sm:$0xff]
      %v1285 = vld [vmem:[#allocation3 + $0xd4] sm:$0xf]
      %v1286 = vld [vmem:[#allocation3 + $0xd8] sm:$0xff]
      %v1287 = vld [vmem:[#allocation3 + $0xe0] sm:$0xff]
      %v1288 = vld [vmem:[#allocation3 + $0xe8] sm:$0xff]
      %v1289 = vld [vmem:[#allocation3 + $0xf0] sm:$0xff]
      %v1290 = vld [vmem:[#allocation3 + $0xf8] sm:$0xf]
      %v1291 = vld [vmem:[#allocation3 + $0xfc] sm:$0xff]
      %v1292 = vld [vmem:[#allocation3 + $0x104] sm:$0xff]
      %v1293 = vld [vmem:[#allocation3 + $0x10c] sm:$0xff]
      %v1294 = vld [vmem:[#allocation3 + $0x114] sm:$0xff]
      %v1295 = vld [vmem:[#allocation3 + $0x11c] sm:$0xf]
      %v1296 = vld [vmem:[#allocation3 + $0x120] sm:$0xff]
      %v1297 = vld [vmem:[#allocation3 + $0x128] sm:$0xff]
      %v1298 = vld [vmem:[#allocation3 + $0x130] sm:$0xff]
      %v1299 = vld [vmem:[#allocation3 + $0x138] sm:$0xff]
      %v1300 = vld [vmem:[#allocation3 + $0x140] sm:$0xf]
      %v1301 = vld [vmem:[#allocation3 + $0x144] sm:$0xff]
      %v1302 = vld [vmem:[#allocation3 + $0x14c] sm:$0xff]
      %v1303 = vld [vmem:[#allocation3 + $0x154] sm:$0xff]
      %v1304 = vld [vmem:[#allocation3 + $0x15c] sm:$0xff]
      %v1305 = vld [vmem:[#allocation3 + $0x164] sm:$0xf]
      %v1306 = vld [vmem:[#allocation3 + $0x168] sm:$0xff]
      %v1307 = vld [vmem:[#allocation3 + $0x170] sm:$0xff]
      %v1308 = vld [vmem:[#allocation3 + $0x178] sm:$0xff]
      %v1309 = vld [vmem:[#allocation3 + $0x180] sm:$0xff]
      %v1310 = vld [vmem:[#allocation3 + $0x188] sm:$0xf]
      %v1311 = vld [vmem:[#allocation3 + $0x18c] sm:$0xff]
      %v1312 = vld [vmem:[#allocation3 + $0x194] sm:$0xff]
      %v1313 = vld [vmem:[#allocation3 + $0x19c] sm:$0xff]
      %v1314 = vld [vmem:[#allocation3 + $0x1a4] sm:$0xff]
      %v1315 = vld [vmem:[#allocation3 + $0x1ac] sm:$0xf]
      %v1316 = vld [vmem:[#allocation3 + $0x1b0] sm:$0xff]
      %v1317 = vld [vmem:[#allocation3 + $0x1b8] sm:$0xff]
      %v1318 = vld [vmem:[#allocation3 + $0x1c0] sm:$0xff]
      %v1319 = vld [vmem:[#allocation3 + $0x1c8] sm:$0xff]
      %v1320 = vld [vmem:[#allocation3 + $0x1d0] sm:$0xf]
      %v1321 = vld [vmem:[#allocation3 + $0x1d4] sm:$0xff]
      %v1322 = vld [vmem:[#allocation3 + $0x1dc] sm:$0xff]
      %v1323 = vld [vmem:[#allocation3 + $0x1e4] sm:$0xff]
      %v1324 = vld [vmem:[#allocation3 + $0x1ec] sm:$0xff]
      %v1325 = vld [vmem:[#allocation3 + $0x1f4] sm:$0xf]
      %v1326 = vld [vmem:[#allocation3 + $0x1f8] sm:$0xff]
      %v1327 = vld [vmem:[#allocation3 + $0x200] sm:$0xff]
      %v1328 = vld [vmem:[#allocation3 + $0x208] sm:$0xff]
      %v1329 = vld [vmem:[#allocation3 + $0x210] sm:$0xff]
      %v1330 = vld [vmem:[#allocation3 + $0x218] sm:$0xf]
      %v1331 = vld [vmem:[#allocation3 + $0x21c] sm:$0xff]
      %v1332 = vld [vmem:[#allocation3 + $0x224] sm:$0xff]
      %v1333 = vld [vmem:[#allocation3 + $0x22c] sm:$0xff]
      %v1334 = vld [vmem:[#allocation3 + $0x234] sm:$0xff]
      %v1335 = vld [vmem:[#allocation3 + $0x23c] sm:$0xf]
      %v1336 = vld [vmem:[#allocation3 + $0x240] sm:$0xff]
      %v1337 = vld [vmem:[#allocation3 + $0x248] sm:$0xff]
      %v1338 = vld [vmem:[#allocation3 + $0x250] sm:$0xff]
      %v1339 = vld [vmem:[#allocation3 + $0x258] sm:$0xff]
      %v1340 = vld [vmem:[#allocation3 + $0x260] sm:$0xf]
      %v1341 = vld [vmem:[#allocation3 + $0x264] sm:$0xff]
      %v1342 = vld [vmem:[#allocation3 + $0x26c] sm:$0xff]
      %v1343 = vld [vmem:[#allocation3 + $0x274] sm:$0xff]
      %v1344 = vld [vmem:[#allocation3 + $0x27c] sm:$0xff]
      %v1345 = vld [vmem:[#allocation3 + $0x284] sm:$0xf]
      %v1346 = vld [vmem:[#allocation3 + $0x288] sm:$0xff]
      %v1347 = vld [vmem:[#allocation3 + $0x290] sm:$0xff]
      %v1348 = vld [vmem:[#allocation3 + $0x298] sm:$0xff]
      %v1349 = vld [vmem:[#allocation3 + $0x2a0] sm:$0xff]
      %v1350 = vld [vmem:[#allocation3 + $0x2a8] sm:$0xf]
      %v1351 = vld [vmem:[#allocation3 + $0x2ac] sm:$0xff]
      %v1352 = vld [vmem:[#allocation3 + $0x2b4] sm:$0xff]
      %v1353 = vld [vmem:[#allocation3 + $0x2bc] sm:$0xff]
      %v1354 = vld [vmem:[#allocation3 + $0x2c4] sm:$0xff]
      %v1355 = vld [vmem:[#allocation3 + $0x2cc] sm:$0xf]
      %v1356 = vld [vmem:[#allocation3 + $0x2d0] sm:$0xff]
      %v1357 = vld [vmem:[#allocation3 + $0x2d8] sm:$0xff]
      %v1358 = vld [vmem:[#allocation3 + $0x2e0] sm:$0xff]
      %v1359 = vld [vmem:[#allocation3 + $0x2e8] sm:$0xff]
      %v1360 = vld [vmem:[#allocation3 + $0x2f0] sm:$0xf]
      %v1361 = vld [vmem:[#allocation3 + $0x2f4] sm:$0xff]
      %v1362 = vld [vmem:[#allocation3 + $0x2fc] sm:$0xff]
      %v1363 = vld [vmem:[#allocation3 + $0x304] sm:$0xff]
      %v1364 = vld [vmem:[#allocation3 + $0x30c] sm:$0xff]
      %v1365 = vld [vmem:[#allocation3 + $0x314] sm:$0xf]
      %v1366 = vld [vmem:[#allocation3 + $0x318] sm:$0xff]
      %v1367 = vld [vmem:[#allocation3 + $0x320] sm:$0xff]
      %v1368 = vld [vmem:[#allocation3 + $0x328] sm:$0xff]
      %v1369 = vld [vmem:[#allocation3 + $0x330] sm:$0xff]
      %v1370 = vld [vmem:[#allocation3 + $0x338] sm:$0xf]
      %v1371 = vld [vmem:[#allocation3 + $0x33c] sm:$0xff]
      %v1372 = vld [vmem:[#allocation3 + $0x344] sm:$0xff]
      %v1373 = vld [vmem:[#allocation3 + $0x34c] sm:$0xff]
      %v1374 = vld [vmem:[#allocation3 + $0x354] sm:$0xff]
      %v1375 = vld [vmem:[#allocation3 + $0x35c] sm:$0xf]
      %v1376 = vld [vmem:[#allocation3 + $0x360] sm:$0xff]
      %v1377 = vld [vmem:[#allocation3 + $0x368] sm:$0xff]
      %v1378 = vld [vmem:[#allocation3 + $0x370] sm:$0xff]
      %v1379 = vld [vmem:[#allocation3 + $0x378] sm:$0xff]
      %v1380 = vld [vmem:[#allocation3 + $0x380] sm:$0xf]
      %v1381 = vld [vmem:[#allocation3 + $0x384] sm:$0xff]
      %v1382 = vld [vmem:[#allocation3 + $0x38c] sm:$0xff]
      %v1383 = vld [vmem:[#allocation3 + $0x394] sm:$0xff]
      %v1384 = vld [vmem:[#allocation3 + $0x39c] sm:$0xff]
      %v1385 = vld [vmem:[#allocation3 + $0x3a4] sm:$0xf]
      %v1386 = vld [vmem:[#allocation3 + $0x3a8] sm:$0xff]
      %v1387 = vld [vmem:[#allocation3 + $0x3b0] sm:$0xff]
      %v1388 = vld [vmem:[#allocation3 + $0x3b8] sm:$0xff]
      %v1389 = vld [vmem:[#allocation3 + $0x3c0] sm:$0xff]
      %v1390 = vld [vmem:[#allocation3 + $0x3c8] sm:$0xf]
      %v1391 = vld [vmem:[#allocation3 + $0x3cc] sm:$0xff]
      %v1392 = vld [vmem:[#allocation3 + $0x3d4] sm:$0xff]
      %v1393 = vld [vmem:[#allocation3 + $0x3dc] sm:$0xff]
      %v1394 = vld [vmem:[#allocation3 + $0x3e4] sm:$0xff]
      %v1395 = vld [vmem:[#allocation3 + $0x3ec] sm:$0xf]
      %v1396 = vld [vmem:[#allocation3 + $0x3f0] sm:$0xff]
      %v1397 = vld [vmem:[#allocation3 + $0x3f8] sm:$0xff]
      %v1398 = vld [vmem:[#allocation3 + $0x400] sm:$0xff]
      %v1399 = vld [vmem:[#allocation3 + $0x408] sm:$0xff]
      %v1400 = vld [vmem:[#allocation3 + $0x410] sm:$0xf]
      %v1401 = vld [vmem:[#allocation3 + $0x414] sm:$0xff]
      %v1402 = vld [vmem:[#allocation3 + $0x41c] sm:$0xff]
      %v1403 = vld [vmem:[#allocation3 + $0x424] sm:$0xff]
      %v1404 = vld [vmem:[#allocation3 + $0x42c] sm:$0xff]
      %v1405 = vld [vmem:[#allocation3 + $0x434] sm:$0xf]
      %v1406 = vld [vmem:[#allocation3 + $0x438] sm:$0xff]
      %v1407 = vld [vmem:[#allocation3 + $0x440] sm:$0xff]
      %v1408 = vld [vmem:[#allocation3 + $0x448] sm:$0xff]
      %v1409 = vld [vmem:[#allocation3 + $0x450] sm:$0xff]
      %v1410 = vld [vmem:[#allocation3 + $0x458] sm:$0xf]
      %v1411 = vld [vmem:[#allocation3 + $0x45c] sm:$0xff]
      %v1412 = vld [vmem:[#allocation3 + $0x464] sm:$0xff]
      %v1413 = vld [vmem:[#allocation3 + $0x46c] sm:$0xff]
      %v1414 = vld [vmem:[#allocation3 + $0x474] sm:$0xff]
      %v1415 = vld [vmem:[#allocation3 + $0x47c] sm:$0xf]
      %v1416 = vld [vmem:[%s1] sm:$0xff]
      %v1417 = vld [vmem:[%s1 + $0x8] sm:$0xf]
      %v1418 = vld [vmem:[%s1 + $0xc] sm:$0xff]
      %v1419 = vld [vmem:[%s1 + $0x14] sm:$0xf]
      %v1420 = vld [vmem:[%s1 + $0x18] sm:$0xff]
      %v1421 = vld [vmem:[%s1 + $0x20] sm:$0xf]
      %v1422 = vld [vmem:[%s1 + $0x24] sm:$0xff]
      %v1423 = vld [vmem:[%s1 + $0x2c] sm:$0xf]
      %v1424 = vld [vmem:[%s1 + $0x30] sm:$0xff]
      %v1425 = vld [vmem:[%s1 + $0x38] sm:$0xf]
      %v1426 = vld [vmem:[%s1 + $0x3c] sm:$0xff]
      %v1427 = vld [vmem:[%s1 + $0x44] sm:$0xf]
      %v1428 = vld [vmem:[%s1 + $0x48] sm:$0xff]
      %v1429 = vld [vmem:[%s1 + $0x50] sm:$0xf]
      %v1430 = vld [vmem:[%s1 + $0x54] sm:$0xff]
      %v1431 = vld [vmem:[%s1 + $0x5c] sm:$0xf]
      %v1432 = vld [vmem:[%s1 + $0x60] sm:$0xff]
      %v1433 = vld [vmem:[%s1 + $0x68] sm:$0xf]
      %v1434 = vld [vmem:[%s1 + $0x6c] sm:$0xff]
      %v1435 = vld [vmem:[%s1 + $0x74] sm:$0xf]
      %v1436 = vld [vmem:[%s1 + $0x78] sm:$0xff]
      %v1437 = vld [vmem:[%s1 + $0x80] sm:$0xf]
      %v1438 = vld [vmem:[%s1 + $0x84] sm:$0xff]
      %v1439 = vld [vmem:[%s1 + $0x8c] sm:$0xf]
      %v1440 = vld [vmem:[%s1 + $0x90] sm:$0xff]
      %v1441 = vld [vmem:[%s1 + $0x98] sm:$0xf]
      %v1442 = vld [vmem:[%s1 + $0x9c] sm:$0xff]
      %v1443 = vld [vmem:[%s1 + $0xa4] sm:$0xf]
      %v1444 = vld [vmem:[%s1 + $0xa8] sm:$0xff]
      %v1445 = vld [vmem:[%s1 + $0xb0] sm:$0xf]
      %v1446 = vld [vmem:[%s1 + $0xb4] sm:$0xff]
      %v1447 = vld [vmem:[%s1 + $0xbc] sm:$0xf]
      %v1448 = vld [vmem:[%s1 + $0xc0] sm:$0xff]
      %v1449 = vld [vmem:[%s1 + $0xc8] sm:$0xf]
      %v1450 = vld [vmem:[%s1 + $0xcc] sm:$0xff]
      %v1451 = vld [vmem:[%s1 + $0xd4] sm:$0xf]
      %v1452 = vld [vmem:[%s1 + $0xd8] sm:$0xff]
      %v1453 = vld [vmem:[%s1 + $0xe0] sm:$0xf]
      %v1454 = vld [vmem:[%s1 + $0xe4] sm:$0xff]
      %v1455 = vld [vmem:[%s1 + $0xec] sm:$0xf]
      %v1456 = vld [vmem:[%s1 + $0xf0] sm:$0xff]
      %v1457 = vld [vmem:[%s1 + $0xf8] sm:$0xf]
      %v1458 = vld [vmem:[%s1 + $0xfc] sm:$0xff]
      %v1459 = vld [vmem:[%s1 + $0x104] sm:$0xf]
      %v1460 = vld [vmem:[%s1 + $0x108] sm:$0xff]
      %v1461 = vld [vmem:[%s1 + $0x110] sm:$0xf]
      %v1462 = vld [vmem:[%s1 + $0x114] sm:$0xff]
      %v1463 = vld [vmem:[%s1 + $0x11c] sm:$0xf]
      %v1464 = vld [vmem:[%s1 + $0x120] sm:$0xff]
      %v1465 = vld [vmem:[%s1 + $0x128] sm:$0xf]
      %v1466 = vld [vmem:[%s1 + $0x12c] sm:$0xff]
      %v1467 = vld [vmem:[%s1 + $0x134] sm:$0xf]
      %v1468 = vld [vmem:[%s1 + $0x138] sm:$0xff]
      %v1469 = vld [vmem:[%s1 + $0x140] sm:$0xf]
      %v1470 = vld [vmem:[%s1 + $0x144] sm:$0xff]
      %v1471 = vld [vmem:[%s1 + $0x14c] sm:$0xf]
      %v1472 = vld [vmem:[%s1 + $0x150] sm:$0xff]
      %v1473 = vld [vmem:[%s1 + $0x158] sm:$0xf]
      %v1474 = vld [vmem:[%s1 + $0x15c] sm:$0xff]
      %v1475 = vld [vmem:[%s1 + $0x164] sm:$0xf]
      %v1476 = vld [vmem:[%s1 + $0x168] sm:$0xff]
      %v1477 = vld [vmem:[%s1 + $0x170] sm:$0xf]
      %v1478 = vld [vmem:[%s1 + $0x174] sm:$0xff]
      %v1479 = vld [vmem:[%s1 + $0x17c] sm:$0xf]
      %v1480 = vld [vmem:[%s1 + $0x180] sm:$0xff]
      %v1481 = vld [vmem:[%s1 + $0x188] sm:$0xf]
      %v1482 = vld [vmem:[%s1 + $0x18c] sm:$0xff]
      %v1483 = vld [vmem:[%s1 + $0x194] sm:$0xf]
      %v1484 = vld [vmem:[%s1 + $0x198] sm:$0xff]
      %v1485 = vld [vmem:[%s1 + $0x1a0] sm:$0xf]
      %v1486 = vld [vmem:[%s1 + $0x1a4] sm:$0xff]
      %v1487 = vld [vmem:[%s1 + $0x1ac] sm:$0xf]
      %v1488 = vld [vmem:[%s1 + $0x1b0] sm:$0xff]
      %v1489 = vld [vmem:[%s1 + $0x1b8] sm:$0xf]
      %v1490 = vld [vmem:[%s1 + $0x1bc] sm:$0xff]
      %v1491 = vld [vmem:[%s1 + $0x1c4] sm:$0xf]
      %v1492 = vld [vmem:[%s1 + $0x1c8] sm:$0xff]
      %v1493 = vld [vmem:[%s1 + $0x1d0] sm:$0xf]
      %v1494 = vld [vmem:[%s1 + $0x1d4] sm:$0xff]
      %v1495 = vld [vmem:[%s1 + $0x1dc] sm:$0xf]
      %v1496 = vld [vmem:[%s1 + $0x1e0] sm:$0xff]
      %v1497 = vld [vmem:[%s1 + $0x1e8] sm:$0xf]
      %v1498 = vld [vmem:[%s1 + $0x1ec] sm:$0xff]
      %v1499 = vld [vmem:[%s1 + $0x1f4] sm:$0xf]
      %v1500 = vld [vmem:[%s1 + $0x1f8] sm:$0xff]
      %v1501 = vld [vmem:[%s1 + $0x200] sm:$0xf]
      %v1502 = vld [vmem:[%s1 + $0x204] sm:$0xff]
      %v1503 = vld [vmem:[%s1 + $0x20c] sm:$0xf]
      %v1504 = vld [vmem:[%s1 + $0x210] sm:$0xff]
      %v1505 = vld [vmem:[%s1 + $0x218] sm:$0xf]
      %v1506 = vld [vmem:[%s1 + $0x21c] sm:$0xff]
      %v1507 = vld [vmem:[%s1 + $0x224] sm:$0xf]
      %v1508 = vld [vmem:[%s1 + $0x228] sm:$0xff]
      %v1509 = vld [vmem:[%s1 + $0x230] sm:$0xf]
      %v1510 = vld [vmem:[%s1 + $0x234] sm:$0xff]
      %v1511 = vld [vmem:[%s1 + $0x23c] sm:$0xf]
      %v1512 = vld [vmem:[%s1 + $0x240] sm:$0xff]
      %v1513 = vld [vmem:[%s1 + $0x248] sm:$0xf]
      %v1514 = vld [vmem:[%s1 + $0x24c] sm:$0xff]
      %v1515 = vld [vmem:[%s1 + $0x254] sm:$0xf]
      %v1516 = vld [vmem:[%s1 + $0x258] sm:$0xff]
      %v1517 = vld [vmem:[%s1 + $0x260] sm:$0xf]
      %v1518 = vld [vmem:[%s1 + $0x264] sm:$0xff]
      %v1519 = vld [vmem:[%s1 + $0x26c] sm:$0xf]
      %v1520 = vld [vmem:[%s1 + $0x270] sm:$0xff]
      %v1521 = vld [vmem:[%s1 + $0x278] sm:$0xf]
      %v1522 = vld [vmem:[%s1 + $0x27c] sm:$0xff]
      %v1523 = vld [vmem:[%s1 + $0x284] sm:$0xf]
      %v1524 = vld [vmem:[%s1 + $0x288] sm:$0xff]
      %v1525 = vld [vmem:[%s1 + $0x290] sm:$0xf]
      %v1526 = vld [vmem:[%s1 + $0x294] sm:$0xff]
      %v1527 = vld [vmem:[%s1 + $0x29c] sm:$0xf]
      %v1528 = vld [vmem:[%s1 + $0x2a0] sm:$0xff]
      %v1529 = vld [vmem:[%s1 + $0x2a8] sm:$0xf]
      %v1530 = vld [vmem:[%s1 + $0x2ac] sm:$0xff]
      %v1531 = vld [vmem:[%s1 + $0x2b4] sm:$0xf]
      %v1532 = vld [vmem:[%s1 + $0x2b8] sm:$0xff]
      %v1533 = vld [vmem:[%s1 + $0x2c0] sm:$0xf]
      %v1534 = vld [vmem:[%s1 + $0x2c4] sm:$0xff]
      %v1535 = vld [vmem:[%s1 + $0x2cc] sm:$0xf]
      %v1536 = vld [vmem:[%s1 + $0x2d0] sm:$0xff]
      %v1537 = vld [vmem:[%s1 + $0x2d8] sm:$0xf]
      %v1538 = vld [vmem:[%s1 + $0x2dc] sm:$0xff]
      %v1539 = vld [vmem:[%s1 + $0x2e4] sm:$0xf]
      %v1540 = vld [vmem:[%s1 + $0x2e8] sm:$0xff]
      %v1541 = vld [vmem:[%s1 + $0x2f0] sm:$0xf]
      %v1542 = vld [vmem:[%s1 + $0x2f4] sm:$0xff]
      %v1543 = vld [vmem:[%s1 + $0x2fc] sm:$0xf]
      %v1544 = vld [vmem:[%s1 + $0x300] sm:$0xff]
      %v1545 = vld [vmem:[%s1 + $0x308] sm:$0xf]
      %v1546 = vld [vmem:[%s1 + $0x30c] sm:$0xff]
      %v1547 = vld [vmem:[%s1 + $0x314] sm:$0xf]
      %v1548 = vld [vmem:[%s1 + $0x318] sm:$0xff]
      %v1549 = vld [vmem:[%s1 + $0x320] sm:$0xf]
      %v1550 = vld [vmem:[%s1 + $0x324] sm:$0xff]
      %v1551 = vld [vmem:[%s1 + $0x32c] sm:$0xf]
      %v1552 = vld [vmem:[%s1 + $0x330] sm:$0xff]
      %v1553 = vld [vmem:[%s1 + $0x338] sm:$0xf]
      %v1554 = vld [vmem:[%s1 + $0x33c] sm:$0xff]
      %v1555 = vld [vmem:[%s1 + $0x344] sm:$0xf]
      %v1556 = vld [vmem:[%s1 + $0x348] sm:$0xff]
      %v1557 = vld [vmem:[%s1 + $0x350] sm:$0xf]
      %v1558 = vld [vmem:[%s1 + $0x354] sm:$0xff]
      %v1559 = vld [vmem:[%s1 + $0x35c] sm:$0xf]
      %v1560 = vld [vmem:[%s1 + $0x360] sm:$0xff]
      %v1561 = vld [vmem:[%s1 + $0x368] sm:$0xf]
      %v1562 = vld [vmem:[%s1 + $0x36c] sm:$0xff]
      %v1563 = vld [vmem:[%s1 + $0x374] sm:$0xf]
      %v1564 = vld [vmem:[%s1 + $0x378] sm:$0xff]
      %v1565 = vld [vmem:[%s1 + $0x380] sm:$0xf]
      %v1566 = vld [vmem:[%s1 + $0x384] sm:$0xff]
      %v1567 = vld [vmem:[%s1 + $0x38c] sm:$0xf]
      %v1568 = vld [vmem:[%s1 + $0x390] sm:$0xff]
      %v1569 = vld [vmem:[%s1 + $0x398] sm:$0xf]
      %v1570 = vld [vmem:[%s1 + $0x39c] sm:$0xff]
      %v1571 = vld [vmem:[%s1 + $0x3a4] sm:$0xf]
      %v1572 = vld [vmem:[%s1 + $0x3a8] sm:$0xff]
      %v1573 = vld [vmem:[%s1 + $0x3b0] sm:$0xf]
      %v1574 = vld [vmem:[%s1 + $0x3b4] sm:$0xff]
      %v1575 = vld [vmem:[%s1 + $0x3bc] sm:$0xf]
      %v1576 = vld [vmem:[%s1 + $0x3c0] sm:$0xff]
      %v1577 = vld [vmem:[%s1 + $0x3c8] sm:$0xf]
      %v1578 = vld [vmem:[%s1 + $0x3cc] sm:$0xff]
      %v1579 = vld [vmem:[%s1 + $0x3d4] sm:$0xf]
      %v1580 = vld [vmem:[%s1 + $0x3d8] sm:$0xff]
      %v1581 = vld [vmem:[%s1 + $0x3e0] sm:$0xf]
      %v1582 = vld [vmem:[%s1 + $0x3e4] sm:$0xff]
      %v1583 = vld [vmem:[%s1 + $0x3ec] sm:$0xf]
      %v1584 = vld [vmem:[%s1 + $0x3f0] sm:$0xff]
      %v1585 = vld [vmem:[%s1 + $0x3f8] sm:$0xf]
      %v1586 = vld [vmem:[%s1 + $0x3fc] sm:$0xff]
      %v1587 = vld [vmem:[%s1 + $0x404] sm:$0xf]
      %v1588 = vld [vmem:[%s1 + $0x408] sm:$0xff]
      %v1589 = vld [vmem:[%s1 + $0x410] sm:$0xf]
      %v1590 = vld [vmem:[%s1 + $0x414] sm:$0xff]
      %v1591 = vld [vmem:[%s1 + $0x41c] sm:$0xf]
      %v1592 = vld [vmem:[%s1 + $0x420] sm:$0xff]
      %v1593 = vld [vmem:[%s1 + $0x428] sm:$0xf]
      %v1594 = vld [vmem:[%s1 + $0x42c] sm:$0xff]
      %v1595 = vld [vmem:[%s1 + $0x434] sm:$0xf]
      %v1596 = vld [vmem:[%s1 + $0x438] sm:$0xff]
      %v1597 = vld [vmem:[%s1 + $0x440] sm:$0xf]
      %v1598 = vld [vmem:[%s1 + $0x444] sm:$0xff]
      %v1599 = vld [vmem:[%s1 + $0x44c] sm:$0xf]
      %v1600 = vld [vmem:[%s1 + $0x450] sm:$0xff]
      %v1601 = vld [vmem:[%s1 + $0x458] sm:$0xf]
      %v1602 = vld [vmem:[%s1 + $0x45c] sm:$0xff]
      %v1603 = vld [vmem:[%s1 + $0x464] sm:$0xf]
      %v1604 = vld [vmem:[%s1 + $0x468] sm:$0xff]
      %v1605 = vld [vmem:[%s1 + $0x470] sm:$0xf]
      %v1606 = vld [vmem:[%s1 + $0x474] sm:$0xff]
      %v1607 = vld [vmem:[%s1 + $0x47c] sm:$0xf]
      %v1608 = vld [vmem:[%s1 + $0x480] sm:$0xff]
      %v1609 = vld [vmem:[%s1 + $0x488] sm:$0xf]
      %v1610 = vld [vmem:[%s1 + $0x48c] sm:$0xff]
      %v1611 = vld [vmem:[%s1 + $0x494] sm:$0xf]
      %v1612 = vld [vmem:[%s1 + $0x498] sm:$0xff]
      %v1613 = vld [vmem:[%s1 + $0x4a0] sm:$0xf]
      %v1614 = vld [vmem:[%s1 + $0x4a4] sm:$0xff]
      %v1615 = vld [vmem:[%s1 + $0x4ac] sm:$0xf]
      %v1616 = vld [vmem:[%s1 + $0x4b0] sm:$0xff]
      %v1617 = vld [vmem:[%s1 + $0x4b8] sm:$0xf]
      %v1618 = vld [vmem:[%s1 + $0x4bc] sm:$0xff]
      %v1619 = vld [vmem:[%s1 + $0x4c4] sm:$0xf]
      %v1620 = vld [vmem:[%s1 + $0x4c8] sm:$0xff]
      %v1621 = vld [vmem:[%s1 + $0x4d0] sm:$0xf]
      %v1622 = vld [vmem:[%s1 + $0x4d4] sm:$0xff]
      %v1623 = vld [vmem:[%s1 + $0x4dc] sm:$0xf]
      %v1624 = vld [vmem:[%s1 + $0x4e0] sm:$0xff]
      %v1625 = vld [vmem:[%s1 + $0x4e8] sm:$0xf]
      %v1626 = vld [vmem:[%s1 + $0x4ec] sm:$0xff]
      %v1627 = vld [vmem:[%s1 + $0x4f4] sm:$0xf]
      %v1628 = vld [vmem:[%s1 + $0x4f8] sm:$0xff]
      %v1629 = vld [vmem:[%s1 + $0x500] sm:$0xf]
      %v1630 = vld [vmem:[%s1 + $0x504] sm:$0xff]
      %v1631 = vld [vmem:[%s1 + $0x50c] sm:$0xf]
      %v1632 = vld [vmem:[%s1 + $0x510] sm:$0xff]
      %v1633 = vld [vmem:[%s1 + $0x518] sm:$0xf]
      %v1634 = vld [vmem:[%s1 + $0x51c] sm:$0xff]
      %v1635 = vld [vmem:[%s1 + $0x524] sm:$0xf]
      %v1636 = vld [vmem:[%s1 + $0x528] sm:$0xff]
      %v1637 = vld [vmem:[%s1 + $0x530] sm:$0xf]
      %v1638 = vld [vmem:[%s1 + $0x534] sm:$0xff]
      %v1639 = vld [vmem:[%s1 + $0x53c] sm:$0xf]
      %v1640 = vld [vmem:[%s1 + $0x540] sm:$0xff]
      %v1641 = vld [vmem:[%s1 + $0x548] sm:$0xf]
      %v1642 = vld [vmem:[%s1 + $0x54c] sm:$0xff]
      %v1643 = vld [vmem:[%s1 + $0x554] sm:$0xf]
      %v1644 = vld [vmem:[%s1 + $0x558] sm:$0xff]
      %v1645 = vld [vmem:[%s1 + $0x560] sm:$0xf]
      %v1646 = vld [vmem:[%s1 + $0x564] sm:$0xff]
      %v1647 = vld [vmem:[%s1 + $0x56c] sm:$0xf]
      %v1648 = vld [vmem:[%s1 + $0x570] sm:$0xff]
      %v1649 = vld [vmem:[%s1 + $0x578] sm:$0xf]
      %v1650 = vld [vmem:[%s1 + $0x57c] sm:$0xff]
      %v1651 = vld [vmem:[%s1 + $0x584] sm:$0xf]
      %v1652 = vld [vmem:[%s1 + $0x588] sm:$0xff]
      %v1653 = vld [vmem:[%s1 + $0x590] sm:$0xf]
      %v1654 = vld [vmem:[%s1 + $0x594] sm:$0xff]
      %v1655 = vld [vmem:[%s1 + $0x59c] sm:$0xf]
      %v1656 = vld [vmem:[%s1 + $0x5a0] sm:$0xff]
      %v1657 = vld [vmem:[%s1 + $0x5a8] sm:$0xf]
      %v1658 = vld [vmem:[%s1 + $0x5ac] sm:$0xff]
      %v1659 = vld [vmem:[%s1 + $0x5b4] sm:$0xf]
      %v1660 = vld [vmem:[%s1 + $0x5b8] sm:$0xff]
      %v1661 = vld [vmem:[%s1 + $0x5c0] sm:$0xf]
      %v1662 = vld [vmem:[%s1 + $0x5c4] sm:$0xff]
      %v1663 = vld [vmem:[%s1 + $0x5cc] sm:$0xf]
      %v1664 = vld [vmem:[%s1 + $0x5d0] sm:$0xff]
      %v1665 = vld [vmem:[%s1 + $0x5d8] sm:$0xf]
      %v1666 = vld [vmem:[%s1 + $0x5dc] sm:$0xff]
      %v1667 = vld [vmem:[%s1 + $0x5e4] sm:$0xf]
      %v1668 = vld [vmem:[%s1 + $0x5e8] sm:$0xff]
      %v1669 = vld [vmem:[%s1 + $0x5f0] sm:$0xf]
      %v1670 = vld [vmem:[%s1 + $0x5f4] sm:$0xff]
      %v1671 = vld [vmem:[%s1 + $0x5fc] sm:$0xf]
      %v1672 = vld [vmem:[%s1 + $0x600] sm:$0xff]
      %v1673 = vld [vmem:[%s1 + $0x608] sm:$0xf]
      %v1674 = vld [vmem:[%s1 + $0x60c] sm:$0xff]
      %v1675 = vld [vmem:[%s1 + $0x614] sm:$0xf]
      %v1676 = vld [vmem:[%s1 + $0x618] sm:$0xff]
      %v1677 = vld [vmem:[%s1 + $0x620] sm:$0xf]
      %v1678 = vld [vmem:[%s1 + $0x624] sm:$0xff]
      %v1679 = vld [vmem:[%s1 + $0x62c] sm:$0xf]
      %v1680 = vld [vmem:[%s1 + $0x630] sm:$0xff]
      %v1681 = vld [vmem:[%s1 + $0x638] sm:$0xf]
      %v1682 = vld [vmem:[%s1 + $0x63c] sm:$0xff]
      %v1683 = vld [vmem:[%s1 + $0x644] sm:$0xf]
      %v1684 = vld [vmem:[%s1 + $0x648] sm:$0xff]
      %v1685 = vld [vmem:[%s1 + $0x650] sm:$0xf]
      %v1686 = vld [vmem:[%s1 + $0x654] sm:$0xff]
      %v1687 = vld [vmem:[%s1 + $0x65c] sm:$0xf]
      %v1688 = vld [vmem:[%s1 + $0x660] sm:$0xff]
      %v1689 = vld [vmem:[%s1 + $0x668] sm:$0xf]
      %v1690 = vld [vmem:[%s1 + $0x66c] sm:$0xff]
      %v1691 = vld [vmem:[%s1 + $0x674] sm:$0xf]
      %v1692 = vld [vmem:[%s1 + $0x678] sm:$0xff]
      %v1693 = vld [vmem:[%s1 + $0x680] sm:$0xf]
      %v1694 = vld [vmem:[%s1 + $0x684] sm:$0xff]
      %v1695 = vld [vmem:[%s1 + $0x68c] sm:$0xf]
      %v1696 = vld [vmem:[%s1 + $0x690] sm:$0xff]
      %v1697 = vld [vmem:[%s1 + $0x698] sm:$0xf]
      %v1698 = vld [vmem:[%s1 + $0x69c] sm:$0xff]
      %v1699 = vld [vmem:[%s1 + $0x6a4] sm:$0xf]
      %v1700 = vld [vmem:[%s1 + $0x6a8] sm:$0xff]
      %v1701 = vld [vmem:[%s1 + $0x6b0] sm:$0xf]
      %v1702 = vld [vmem:[%s1 + $0x6b4] sm:$0xff]
      %v1703 = vld [vmem:[%s1 + $0x6bc] sm:$0xf]
      %v1864 = vunpack.c.l.b16 %v1256
      %v1865 = vunpack.c.h.b16 %v1256
      %v1866 = vunpack.c.l.b16 %v1257
      %v1867 = vunpack.c.h.b16 %v1257
      %v1868 = vunpack.c.l.b16 %v1258
      %v1869 = vunpack.c.h.b16 %v1258
      %v1870 = vunpack.c.l.b16 %v1259
      %v1871 = vunpack.c.h.b16 %v1259
      %v1872 = vunpack.c.l.b16 %v1260
      %v1873 = vunpack.c.l.b16 %v1261
      %v1874 = vunpack.c.h.b16 %v1261
      %v1875 = vunpack.c.l.b16 %v1262
      %v1876 = vunpack.c.h.b16 %v1262
      %v1877 = vunpack.c.l.b16 %v1263
      %v1878 = vunpack.c.h.b16 %v1263
      %v1879 = vunpack.c.l.b16 %v1264
      %v1880 = vunpack.c.h.b16 %v1264
      %v1881 = vunpack.c.l.b16 %v1265
      %v1882 = vunpack.c.l.b16 %v1266
      %v1883 = vunpack.c.h.b16 %v1266
      %v1884 = vunpack.c.l.b16 %v1267
      %v1885 = vunpack.c.h.b16 %v1267
      %v1886 = vunpack.c.l.b16 %v1268
      %v1887 = vunpack.c.h.b16 %v1268
      %v1888 = vunpack.c.l.b16 %v1269
      %v1889 = vunpack.c.h.b16 %v1269
      %v1890 = vunpack.c.l.b16 %v1270
      %v1891 = vunpack.c.l.b16 %v1271
      %v1892 = vunpack.c.h.b16 %v1271
      %v1893 = vunpack.c.l.b16 %v1272
      %v1894 = vunpack.c.h.b16 %v1272
      %v1895 = vunpack.c.l.b16 %v1273
      %v1896 = vunpack.c.h.b16 %v1273
      %v1897 = vunpack.c.l.b16 %v1274
      %v1898 = vunpack.c.h.b16 %v1274
      %v1899 = vunpack.c.l.b16 %v1275
      %v1900 = vunpack.c.l.b16 %v1276
      %v1901 = vunpack.c.h.b16 %v1276
      %v1902 = vunpack.c.l.b16 %v1277
      %v1903 = vunpack.c.h.b16 %v1277
      %v1904 = vunpack.c.l.b16 %v1278
      %v1905 = vunpack.c.h.b16 %v1278
      %v1906 = vunpack.c.l.b16 %v1279
      %v1907 = vunpack.c.h.b16 %v1279
      %v1908 = vunpack.c.l.b16 %v1280
      %v1909 = vunpack.c.l.b16 %v1281
      %v1910 = vunpack.c.h.b16 %v1281
      %v1911 = vunpack.c.l.b16 %v1282
      %v1912 = vunpack.c.h.b16 %v1282
      %v1913 = vunpack.c.l.b16 %v1283
      %v1914 = vunpack.c.h.b16 %v1283
      %v1915 = vunpack.c.l.b16 %v1284
      %v1916 = vunpack.c.h.b16 %v1284
      %v1917 = vunpack.c.l.b16 %v1285
      %v1918 = vunpack.c.l.b16 %v1286
      %v1919 = vunpack.c.h.b16 %v1286
      %v1920 = vunpack.c.l.b16 %v1287
      %v1921 = vunpack.c.h.b16 %v1287
      %v1922 = vunpack.c.l.b16 %v1288
      %v1923 = vunpack.c.h.b16 %v1288
      %v1924 = vunpack.c.l.b16 %v1289
      %v1925 = vunpack.c.h.b16 %v1289
      %v1926 = vunpack.c.l.b16 %v1290
      %v1927 = vunpack.c.l.b16 %v1291
      %v1928 = vunpack.c.h.b16 %v1291
      %v1929 = vunpack.c.l.b16 %v1292
      %v1930 = vunpack.c.h.b16 %v1292
      %v1931 = vunpack.c.l.b16 %v1293
      %v1932 = vunpack.c.h.b16 %v1293
      %v1933 = vunpack.c.l.b16 %v1294
      %v1934 = vunpack.c.h.b16 %v1294
      %v1935 = vunpack.c.l.b16 %v1295
      %v1936 = vunpack.c.l.b16 %v1296
      %v1937 = vunpack.c.h.b16 %v1296
      %v1938 = vunpack.c.l.b16 %v1297
      %v1939 = vunpack.c.h.b16 %v1297
      %v1940 = vunpack.c.l.b16 %v1298
      %v1941 = vunpack.c.h.b16 %v1298
      %v1942 = vunpack.c.l.b16 %v1299
      %v1943 = vunpack.c.h.b16 %v1299
      %v1944 = vunpack.c.l.b16 %v1300
      %v1945 = vunpack.c.l.b16 %v1301
      %v1946 = vunpack.c.h.b16 %v1301
      %v1947 = vunpack.c.l.b16 %v1302
      %v1948 = vunpack.c.h.b16 %v1302
      %v1949 = vunpack.c.l.b16 %v1303
      %v1950 = vunpack.c.h.b16 %v1303
      %v1951 = vunpack.c.l.b16 %v1304
      %v1952 = vunpack.c.h.b16 %v1304
      %v1953 = vunpack.c.l.b16 %v1305
      %v1954 = vunpack.c.l.b16 %v1306
      %v1955 = vunpack.c.h.b16 %v1306
      %v1956 = vunpack.c.l.b16 %v1307
      %v1957 = vunpack.c.h.b16 %v1307
      %v1958 = vunpack.c.l.b16 %v1308
      %v1959 = vunpack.c.h.b16 %v1308
      %v1960 = vunpack.c.l.b16 %v1309
      %v1961 = vunpack.c.h.b16 %v1309
      %v1962 = vunpack.c.l.b16 %v1310
      %v1963 = vunpack.c.l.b16 %v1311
      %v1964 = vunpack.c.h.b16 %v1311
      %v1965 = vunpack.c.l.b16 %v1312
      %v1966 = vunpack.c.h.b16 %v1312
      %v1967 = vunpack.c.l.b16 %v1313
      %v1968 = vunpack.c.h.b16 %v1313
      %v1969 = vunpack.c.l.b16 %v1314
      %v1970 = vunpack.c.h.b16 %v1314
      %v1971 = vunpack.c.l.b16 %v1315
      %v1972 = vunpack.c.l.b16 %v1316
      %v1973 = vunpack.c.h.b16 %v1316
      %v1974 = vunpack.c.l.b16 %v1317
      %v1975 = vunpack.c.h.b16 %v1317
      %v1976 = vunpack.c.l.b16 %v1318
      %v1977 = vunpack.c.h.b16 %v1318
      %v1978 = vunpack.c.l.b16 %v1319
      %v1979 = vunpack.c.h.b16 %v1319
      %v1980 = vunpack.c.l.b16 %v1320
      %v1981 = vunpack.c.l.b16 %v1321
      %v1982 = vunpack.c.h.b16 %v1321
      %v1983 = vunpack.c.l.b16 %v1322
      %v1984 = vunpack.c.h.b16 %v1322
      %v1985 = vunpack.c.l.b16 %v1323
      %v1986 = vunpack.c.h.b16 %v1323
      %v1987 = vunpack.c.l.b16 %v1324
      %v1988 = vunpack.c.h.b16 %v1324
      %v1989 = vunpack.c.l.b16 %v1325
      %v1990 = vunpack.c.l.b16 %v1326
      %v1991 = vunpack.c.h.b16 %v1326
      %v1992 = vunpack.c.l.b16 %v1327
      %v1993 = vunpack.c.h.b16 %v1327
      %v1994 = vunpack.c.l.b16 %v1328
      %v1995 = vunpack.c.h.b16 %v1328
      %v1996 = vunpack.c.l.b16 %v1329
      %v1997 = vunpack.c.h.b16 %v1329
      %v1998 = vunpack.c.l.b16 %v1330
      %v1999 = vunpack.c.l.b16 %v1331
      %v2000 = vunpack.c.h.b16 %v1331
      %v2001 = vunpack.c.l.b16 %v1332
      %v2002 = vunpack.c.h.b16 %v1332
      %v2003 = vunpack.c.l.b16 %v1333
      %v2004 = vunpack.c.h.b16 %v1333
      %v2005 = vunpack.c.l.b16 %v1334
      %v2006 = vunpack.c.h.b16 %v1334
      %v2007 = vunpack.c.l.b16 %v1335
      %v2008 = vunpack.c.l.b16 %v1336
      %v2009 = vunpack.c.h.b16 %v1336
      %v2010 = vunpack.c.l.b16 %v1337
      %v2011 = vunpack.c.h.b16 %v1337
      %v2012 = vunpack.c.l.b16 %v1338
      %v2013 = vunpack.c.h.b16 %v1338
      %v2014 = vunpack.c.l.b16 %v1339
      %v2015 = vunpack.c.h.b16 %v1339
      %v2016 = vunpack.c.l.b16 %v1340
      %v2017 = vunpack.c.l.b16 %v1341
      %v2018 = vunpack.c.h.b16 %v1341
      %v2019 = vunpack.c.l.b16 %v1342
      %v2020 = vunpack.c.h.b16 %v1342
      %v2021 = vunpack.c.l.b16 %v1343
      %v2022 = vunpack.c.h.b16 %v1343
      %v2023 = vunpack.c.l.b16 %v1344
      %v2024 = vunpack.c.h.b16 %v1344
      %v2025 = vunpack.c.l.b16 %v1345
      %v2026 = vunpack.c.l.b16 %v1346
      %v2027 = vunpack.c.h.b16 %v1346
      %v2028 = vunpack.c.l.b16 %v1347
      %v2029 = vunpack.c.h.b16 %v1347
      %v2030 = vunpack.c.l.b16 %v1348
      %v2031 = vunpack.c.h.b16 %v1348
      %v2032 = vunpack.c.l.b16 %v1349
      %v2033 = vunpack.c.h.b16 %v1349
      %v2034 = vunpack.c.l.b16 %v1350
      %v2035 = vunpack.c.l.b16 %v1351
      %v2036 = vunpack.c.h.b16 %v1351
      %v2037 = vunpack.c.l.b16 %v1352
      %v2038 = vunpack.c.h.b16 %v1352
      %v2039 = vunpack.c.l.b16 %v1353
      %v2040 = vunpack.c.h.b16 %v1353
      %v2041 = vunpack.c.l.b16 %v1354
      %v2042 = vunpack.c.h.b16 %v1354
      %v2043 = vunpack.c.l.b16 %v1355
      %v2044 = vunpack.c.l.b16 %v1356
      %v2045 = vunpack.c.h.b16 %v1356
      %v2046 = vunpack.c.l.b16 %v1357
      %v2047 = vunpack.c.h.b16 %v1357
      %v2048 = vunpack.c.l.b16 %v1358
      %v2049 = vunpack.c.h.b16 %v1358
      %v2050 = vunpack.c.l.b16 %v1359
      %v2051 = vunpack.c.h.b16 %v1359
      %v2052 = vunpack.c.l.b16 %v1360
      %v2053 = vunpack.c.l.b16 %v1361
      %v2054 = vunpack.c.h.b16 %v1361
      %v2055 = vunpack.c.l.b16 %v1362
      %v2056 = vunpack.c.h.b16 %v1362
      %v2057 = vunpack.c.l.b16 %v1363
      %v2058 = vunpack.c.h.b16 %v1363
      %v2059 = vunpack.c.l.b16 %v1364
      %v2060 = vunpack.c.h.b16 %v1364
      %v2061 = vunpack.c.l.b16 %v1365
      %v2062 = vunpack.c.l.b16 %v1366
      %v2063 = vunpack.c.h.b16 %v1366
      %v2064 = vunpack.c.l.b16 %v1367
      %v2065 = vunpack.c.h.b16 %v1367
      %v2066 = vunpack.c.l.b16 %v1368
      %v2067 = vunpack.c.h.b16 %v1368
      %v2068 = vunpack.c.l.b16 %v1369
      %v2069 = vunpack.c.h.b16 %v1369
      %v2070 = vunpack.c.l.b16 %v1370
      %v2071 = vunpack.c.l.b16 %v1371
      %v2072 = vunpack.c.h.b16 %v1371
      %v2073 = vunpack.c.l.b16 %v1372
      %v2074 = vunpack.c.h.b16 %v1372
      %v2075 = vunpack.c.l.b16 %v1373
      %v2076 = vunpack.c.h.b16 %v1373
      %v2077 = vunpack.c.l.b16 %v1374
      %v2078 = vunpack.c.h.b16 %v1374
      %v2079 = vunpack.c.l.b16 %v1375
      %v2080 = vunpack.c.l.b16 %v1376
      %v2081 = vunpack.c.h.b16 %v1376
      %v2082 = vunpack.c.l.b16 %v1377
      %v2083 = vunpack.c.h.b16 %v1377
      %v2084 = vunpack.c.l.b16 %v1378
      %v2085 = vunpack.c.h.b16 %v1378
      %v2086 = vunpack.c.l.b16 %v1379
      %v2087 = vunpack.c.h.b16 %v1379
      %v2088 = vunpack.c.l.b16 %v1380
      %v2089 = vunpack.c.l.b16 %v1381
      %v2090 = vunpack.c.h.b16 %v1381
      %v2091 = vunpack.c.l.b16 %v1382
      %v2092 = vunpack.c.h.b16 %v1382
      %v2093 = vunpack.c.l.b16 %v1383
      %v2094 = vunpack.c.h.b16 %v1383
      %v2095 = vunpack.c.l.b16 %v1384
      %v2096 = vunpack.c.h.b16 %v1384
      %v2097 = vunpack.c.l.b16 %v1385
      %v2098 = vunpack.c.l.b16 %v1386
      %v2099 = vunpack.c.h.b16 %v1386
      %v2100 = vunpack.c.l.b16 %v1387
      %v2101 = vunpack.c.h.b16 %v1387
      %v2102 = vunpack.c.l.b16 %v1388
      %v2103 = vunpack.c.h.b16 %v1388
      %v2104 = vunpack.c.l.b16 %v1389
      %v2105 = vunpack.c.h.b16 %v1389
      %v2106 = vunpack.c.l.b16 %v1390
      %v2107 = vunpack.c.l.b16 %v1391
      %v2108 = vunpack.c.h.b16 %v1391
      %v2109 = vunpack.c.l.b16 %v1392
      %v2110 = vunpack.c.h.b16 %v1392
      %v2111 = vunpack.c.l.b16 %v1393
      %v2112 = vunpack.c.h.b16 %v1393
      %v2113 = vunpack.c.l.b16 %v1394
      %v2114 = vunpack.c.h.b16 %v1394
      %v2115 = vunpack.c.l.b16 %v1395
      %v2116 = vunpack.c.l.b16 %v1396
      %v2117 = vunpack.c.h.b16 %v1396
      %v2118 = vunpack.c.l.b16 %v1397
      %v2119 = vunpack.c.h.b16 %v1397
      %v2120 = vunpack.c.l.b16 %v1398
      %v2121 = vunpack.c.h.b16 %v1398
      %v2122 = vunpack.c.l.b16 %v1399
      %v2123 = vunpack.c.h.b16 %v1399
      %v2124 = vunpack.c.l.b16 %v1400
      %v2125 = vunpack.c.l.b16 %v1401
      %v2126 = vunpack.c.h.b16 %v1401
      %v2127 = vunpack.c.l.b16 %v1402
      %v2128 = vunpack.c.h.b16 %v1402
      %v2129 = vunpack.c.l.b16 %v1403
      %v2130 = vunpack.c.h.b16 %v1403
      %v2131 = vunpack.c.l.b16 %v1404
      %v2132 = vunpack.c.h.b16 %v1404
      %v2133 = vunpack.c.l.b16 %v1405
      %v2134 = vunpack.c.l.b16 %v1406
      %v2135 = vunpack.c.h.b16 %v1406
      %v2136 = vunpack.c.l.b16 %v1407
      %v2137 = vunpack.c.h.b16 %v1407
      %v2138 = vunpack.c.l.b16 %v1408
      %v2139 = vunpack.c.h.b16 %v1408
      %v2140 = vunpack.c.l.b16 %v1409
      %v2141 = vunpack.c.h.b16 %v1409
      %v2142 = vunpack.c.l.b16 %v1410
      %v2143 = vunpack.c.l.b16 %v1411
      %v2144 = vunpack.c.h.b16 %v1411
      %v2145 = vunpack.c.l.b16 %v1412
      %v2146 = vunpack.c.h.b16 %v1412
      %v2147 = vunpack.c.l.b16 %v1413
      %v2148 = vunpack.c.h.b16 %v1413
      %v2149 = vunpack.c.l.b16 %v1414
      %v2150 = vunpack.c.h.b16 %v1414
      %v2151 = vunpack.c.l.b16 %v1415
      %v2152 = vpack.c.b16 %v1873, %v1864
      %v2153 = vpack.c.b16 %v1874, %v1865
      %v2154 = vpack.c.b16 %v1875, %v1866
      %v2155 = vpack.c.b16 %v1876, %v1867
      %v2156 = vpack.c.b16 %v1877, %v1868
      %v2157 = vpack.c.b16 %v1878, %v1869
      %v2158 = vpack.c.b16 %v1879, %v1870
      %v2159 = vpack.c.b16 %v1880, %v1871
      %v2160 = vpack.c.b16 %v1881, %v1872
      %v2161 = vpack.c.b16 %v1891, %v1882
      %v2162 = vpack.c.b16 %v1892, %v1883
      %v2163 = vpack.c.b16 %v1893, %v1884
      %v2164 = vpack.c.b16 %v1894, %v1885
      %v2165 = vpack.c.b16 %v1895, %v1886
      %v2166 = vpack.c.b16 %v1896, %v1887
      %v2167 = vpack.c.b16 %v1897, %v1888
      %v2168 = vpack.c.b16 %v1898, %v1889
      %v2169 = vpack.c.b16 %v1899, %v1890
      %v2170 = vpack.c.b16 %v1909, %v1900
      %v2171 = vpack.c.b16 %v1910, %v1901
      %v2172 = vpack.c.b16 %v1911, %v1902
      %v2173 = vpack.c.b16 %v1912, %v1903
      %v2174 = vpack.c.b16 %v1913, %v1904
      %v2175 = vpack.c.b16 %v1914, %v1905
      %v2176 = vpack.c.b16 %v1915, %v1906
      %v2177 = vpack.c.b16 %v1916, %v1907
      %v2178 = vpack.c.b16 %v1917, %v1908
      %v2179 = vpack.c.b16 %v1927, %v1918
      %v2180 = vpack.c.b16 %v1928, %v1919
      %v2181 = vpack.c.b16 %v1929, %v1920
      %v2182 = vpack.c.b16 %v1930, %v1921
      %v2183 = vpack.c.b16 %v1931, %v1922
      %v2184 = vpack.c.b16 %v1932, %v1923
      %v2185 = vpack.c.b16 %v1933, %v1924
      %v2186 = vpack.c.b16 %v1934, %v1925
      %v2187 = vpack.c.b16 %v1935, %v1926
      %v2188 = vpack.c.b16 %v1945, %v1936
      %v2189 = vpack.c.b16 %v1946, %v1937
      %v2190 = vpack.c.b16 %v1947, %v1938
      %v2191 = vpack.c.b16 %v1948, %v1939
      %v2192 = vpack.c.b16 %v1949, %v1940
      %v2193 = vpack.c.b16 %v1950, %v1941
      %v2194 = vpack.c.b16 %v1951, %v1942
      %v2195 = vpack.c.b16 %v1952, %v1943
      %v2196 = vpack.c.b16 %v1953, %v1944
      %v2197 = vpack.c.b16 %v1963, %v1954
      %v2198 = vpack.c.b16 %v1964, %v1955
      %v2199 = vpack.c.b16 %v1965, %v1956
      %v2200 = vpack.c.b16 %v1966, %v1957
      %v2201 = vpack.c.b16 %v1967, %v1958
      %v2202 = vpack.c.b16 %v1968, %v1959
      %v2203 = vpack.c.b16 %v1969, %v1960
      %v2204 = vpack.c.b16 %v1970, %v1961
      %v2205 = vpack.c.b16 %v1971, %v1962
      %v2206 = vpack.c.b16 %v1981, %v1972
      %v2207 = vpack.c.b16 %v1982, %v1973
      %v2208 = vpack.c.b16 %v1983, %v1974
      %v2209 = vpack.c.b16 %v1984, %v1975
      %v2210 = vpack.c.b16 %v1985, %v1976
      %v2211 = vpack.c.b16 %v1986, %v1977
      %v2212 = vpack.c.b16 %v1987, %v1978
      %v2213 = vpack.c.b16 %v1988, %v1979
      %v2214 = vpack.c.b16 %v1989, %v1980
      %v2215 = vpack.c.b16 %v1999, %v1990
      %v2216 = vpack.c.b16 %v2000, %v1991
      %v2217 = vpack.c.b16 %v2001, %v1992
      %v2218 = vpack.c.b16 %v2002, %v1993
      %v2219 = vpack.c.b16 %v2003, %v1994
      %v2220 = vpack.c.b16 %v2004, %v1995
      %v2221 = vpack.c.b16 %v2005, %v1996
      %v2222 = vpack.c.b16 %v2006, %v1997
      %v2223 = vpack.c.b16 %v2007, %v1998
      %v2224 = vpack.c.b16 %v2017, %v2008
      %v2225 = vpack.c.b16 %v2018, %v2009
      %v2226 = vpack.c.b16 %v2019, %v2010
      %v2227 = vpack.c.b16 %v2020, %v2011
      %v2228 = vpack.c.b16 %v2021, %v2012
      %v2229 = vpack.c.b16 %v2022, %v2013
      %v2230 = vpack.c.b16 %v2023, %v2014
      %v2231 = vpack.c.b16 %v2024, %v2015
      %v2232 = vpack.c.b16 %v2025, %v2016
      %v2233 = vpack.c.b16 %v2035, %v2026
      %v2234 = vpack.c.b16 %v2036, %v2027
      %v2235 = vpack.c.b16 %v2037, %v2028
      %v2236 = vpack.c.b16 %v2038, %v2029
      %v2237 = vpack.c.b16 %v2039, %v2030
      %v2238 = vpack.c.b16 %v2040, %v2031
      %v2239 = vpack.c.b16 %v2041, %v2032
      %v2240 = vpack.c.b16 %v2042, %v2033
      %v2241 = vpack.c.b16 %v2043, %v2034
      %v2242 = vpack.c.b16 %v2053, %v2044
      %v2243 = vpack.c.b16 %v2054, %v2045
      %v2244 = vpack.c.b16 %v2055, %v2046
      %v2245 = vpack.c.b16 %v2056, %v2047
      %v2246 = vpack.c.b16 %v2057, %v2048
      %v2247 = vpack.c.b16 %v2058, %v2049
      %v2248 = vpack.c.b16 %v2059, %v2050
      %v2249 = vpack.c.b16 %v2060, %v2051
      %v2250 = vpack.c.b16 %v2061, %v2052
      %v2251 = vpack.c.b16 %v2071, %v2062
      %v2252 = vpack.c.b16 %v2072, %v2063
      %v2253 = vpack.c.b16 %v2073, %v2064
      %v2254 = vpack.c.b16 %v2074, %v2065
      %v2255 = vpack.c.b16 %v2075, %v2066
      %v2256 = vpack.c.b16 %v2076, %v2067
      %v2257 = vpack.c.b16 %v2077, %v2068
      %v2258 = vpack.c.b16 %v2078, %v2069
      %v2259 = vpack.c.b16 %v2079, %v2070
      %v2260 = vpack.c.b16 %v2089, %v2080
      %v2261 = vpack.c.b16 %v2090, %v2081
      %v2262 = vpack.c.b16 %v2091, %v2082
      %v2263 = vpack.c.b16 %v2092, %v2083
      %v2264 = vpack.c.b16 %v2093, %v2084
      %v2265 = vpack.c.b16 %v2094, %v2085
      %v2266 = vpack.c.b16 %v2095, %v2086
      %v2267 = vpack.c.b16 %v2096, %v2087
      %v2268 = vpack.c.b16 %v2097, %v2088
      %v2269 = vpack.c.b16 %v2107, %v2098
      %v2270 = vpack.c.b16 %v2108, %v2099
      %v2271 = vpack.c.b16 %v2109, %v2100
      %v2272 = vpack.c.b16 %v2110, %v2101
      %v2273 = vpack.c.b16 %v2111, %v2102
      %v2274 = vpack.c.b16 %v2112, %v2103
      %v2275 = vpack.c.b16 %v2113, %v2104
      %v2276 = vpack.c.b16 %v2114, %v2105
      %v2277 = vpack.c.b16 %v2115, %v2106
      %v2278 = vpack.c.b16 %v2125, %v2116
      %v2279 = vpack.c.b16 %v2126, %v2117
      %v2280 = vpack.c.b16 %v2127, %v2118
      %v2281 = vpack.c.b16 %v2128, %v2119
      %v2282 = vpack.c.b16 %v2129, %v2120
      %v2283 = vpack.c.b16 %v2130, %v2121
      %v2284 = vpack.c.b16 %v2131, %v2122
      %v2285 = vpack.c.b16 %v2132, %v2123
      %v2286 = vpack.c.b16 %v2133, %v2124
      %v2287 = vpack.c.b16 %v2143, %v2134
      %v2288 = vpack.c.b16 %v2144, %v2135
      %v2289 = vpack.c.b16 %v2145, %v2136
      %v2290 = vpack.c.b16 %v2146, %v2137
      %v2291 = vpack.c.b16 %v2147, %v2138
      %v2292 = vpack.c.b16 %v2148, %v2139
      %v2293 = vpack.c.b16 %v2149, %v2140
      %v2294 = vpack.c.b16 %v2150, %v2141
      %v2295 = vpack.c.b16 %v2151, %v2142
      %v2728 = vunpack.c.l.b16 %v1416
      %v2729 = vunpack.c.h.b16 %v1416
      %v2730 = vunpack.c.l.b16 %v1417
      %v2731 = vunpack.c.l.b16 %v1418
      %v2732 = vunpack.c.h.b16 %v1418
      %v2733 = vunpack.c.l.b16 %v1419
      %v2734 = vunpack.c.l.b16 %v1420
      %v2735 = vunpack.c.h.b16 %v1420
      %v2736 = vunpack.c.l.b16 %v1421
      %v2737 = vunpack.c.l.b16 %v1422
      %v2738 = vunpack.c.h.b16 %v1422
      %v2739 = vunpack.c.l.b16 %v1423
      %v2740 = vunpack.c.l.b16 %v1424
      %v2741 = vunpack.c.h.b16 %v1424
      %v2742 = vunpack.c.l.b16 %v1425
      %v2743 = vunpack.c.l.b16 %v1426
      %v2744 = vunpack.c.h.b16 %v1426
      %v2745 = vunpack.c.l.b16 %v1427
      %v2746 = vunpack.c.l.b16 %v1428
      %v2747 = vunpack.c.h.b16 %v1428
      %v2748 = vunpack.c.l.b16 %v1429
      %v2749 = vunpack.c.l.b16 %v1430
      %v2750 = vunpack.c.h.b16 %v1430
      %v2751 = vunpack.c.l.b16 %v1431
      %v2752 = vunpack.c.l.b16 %v1432
      %v2753 = vunpack.c.h.b16 %v1432
      %v2754 = vunpack.c.l.b16 %v1433
      %v2755 = vunpack.c.l.b16 %v1434
      %v2756 = vunpack.c.h.b16 %v1434
      %v2757 = vunpack.c.l.b16 %v1435
      %v2758 = vunpack.c.l.b16 %v1436
      %v2759 = vunpack.c.h.b16 %v1436
      %v2760 = vunpack.c.l.b16 %v1437
      %v2761 = vunpack.c.l.b16 %v1438
      %v2762 = vunpack.c.h.b16 %v1438
      %v2763 = vunpack.c.l.b16 %v1439
      %v2764 = vunpack.c.l.b16 %v1440
      %v2765 = vunpack.c.h.b16 %v1440
      %v2766 = vunpack.c.l.b16 %v1441
      %v2767 = vunpack.c.l.b16 %v1442
      %v2768 = vunpack.c.h.b16 %v1442
      %v2769 = vunpack.c.l.b16 %v1443
      %v2770 = vunpack.c.l.b16 %v1444
      %v2771 = vunpack.c.h.b16 %v1444
      %v2772 = vunpack.c.l.b16 %v1445
      %v2773 = vunpack.c.l.b16 %v1446
      %v2774 = vunpack.c.h.b16 %v1446
      %v2775 = vunpack.c.l.b16 %v1447
      %v2776 = vunpack.c.l.b16 %v1448
      %v2777 = vunpack.c.h.b16 %v1448
      %v2778 = vunpack.c.l.b16 %v1449
      %v2779 = vunpack.c.l.b16 %v1450
      %v2780 = vunpack.c.h.b16 %v1450
      %v2781 = vunpack.c.l.b16 %v1451
      %v2782 = vunpack.c.l.b16 %v1452
      %v2783 = vunpack.c.h.b16 %v1452
      %v2784 = vunpack.c.l.b16 %v1453
      %v2785 = vunpack.c.l.b16 %v1454
      %v2786 = vunpack.c.h.b16 %v1454
      %v2787 = vunpack.c.l.b16 %v1455
      %v2788 = vunpack.c.l.b16 %v1456
      %v2789 = vunpack.c.h.b16 %v1456
      %v2790 = vunpack.c.l.b16 %v1457
      %v2791 = vunpack.c.l.b16 %v1458
      %v2792 = vunpack.c.h.b16 %v1458
      %v2793 = vunpack.c.l.b16 %v1459
      %v2794 = vunpack.c.l.b16 %v1460
      %v2795 = vunpack.c.h.b16 %v1460
      %v2796 = vunpack.c.l.b16 %v1461
      %v2797 = vunpack.c.l.b16 %v1462
      %v2798 = vunpack.c.h.b16 %v1462
      %v2799 = vunpack.c.l.b16 %v1463
      %v2800 = vunpack.c.l.b16 %v1464
      %v2801 = vunpack.c.h.b16 %v1464
      %v2802 = vunpack.c.l.b16 %v1465
      %v2803 = vunpack.c.l.b16 %v1466
      %v2804 = vunpack.c.h.b16 %v1466
      %v2805 = vunpack.c.l.b16 %v1467
      %v2806 = vunpack.c.l.b16 %v1468
      %v2807 = vunpack.c.h.b16 %v1468
      %v2808 = vunpack.c.l.b16 %v1469
      %v2809 = vunpack.c.l.b16 %v1470
      %v2810 = vunpack.c.h.b16 %v1470
      %v2811 = vunpack.c.l.b16 %v1471
      %v2812 = vunpack.c.l.b16 %v1472
      %v2813 = vunpack.c.h.b16 %v1472
      %v2814 = vunpack.c.l.b16 %v1473
      %v2815 = vunpack.c.l.b16 %v1474
      %v2816 = vunpack.c.h.b16 %v1474
      %v2817 = vunpack.c.l.b16 %v1475
      %v2818 = vunpack.c.l.b16 %v1476
      %v2819 = vunpack.c.h.b16 %v1476
      %v2820 = vunpack.c.l.b16 %v1477
      %v2821 = vunpack.c.l.b16 %v1478
      %v2822 = vunpack.c.h.b16 %v1478
      %v2823 = vunpack.c.l.b16 %v1479
      %v2824 = vunpack.c.l.b16 %v1480
      %v2825 = vunpack.c.h.b16 %v1480
      %v2826 = vunpack.c.l.b16 %v1481
      %v2827 = vunpack.c.l.b16 %v1482
      %v2828 = vunpack.c.h.b16 %v1482
      %v2829 = vunpack.c.l.b16 %v1483
      %v2830 = vunpack.c.l.b16 %v1484
      %v2831 = vunpack.c.h.b16 %v1484
      %v2832 = vunpack.c.l.b16 %v1485
      %v2833 = vunpack.c.l.b16 %v1486
      %v2834 = vunpack.c.h.b16 %v1486
      %v2835 = vunpack.c.l.b16 %v1487
      %v2836 = vunpack.c.l.b16 %v1488
      %v2837 = vunpack.c.h.b16 %v1488
      %v2838 = vunpack.c.l.b16 %v1489
      %v2839 = vunpack.c.l.b16 %v1490
      %v2840 = vunpack.c.h.b16 %v1490
      %v2841 = vunpack.c.l.b16 %v1491
      %v2842 = vunpack.c.l.b16 %v1492
      %v2843 = vunpack.c.h.b16 %v1492
      %v2844 = vunpack.c.l.b16 %v1493
      %v2845 = vunpack.c.l.b16 %v1494
      %v2846 = vunpack.c.h.b16 %v1494
      %v2847 = vunpack.c.l.b16 %v1495
      %v2848 = vunpack.c.l.b16 %v1496
      %v2849 = vunpack.c.h.b16 %v1496
      %v2850 = vunpack.c.l.b16 %v1497
      %v2851 = vunpack.c.l.b16 %v1498
      %v2852 = vunpack.c.h.b16 %v1498
      %v2853 = vunpack.c.l.b16 %v1499
      %v2854 = vunpack.c.l.b16 %v1500
      %v2855 = vunpack.c.h.b16 %v1500
      %v2856 = vunpack.c.l.b16 %v1501
      %v2857 = vunpack.c.l.b16 %v1502
      %v2858 = vunpack.c.h.b16 %v1502
      %v2859 = vunpack.c.l.b16 %v1503
      %v2860 = vunpack.c.l.b16 %v1504
      %v2861 = vunpack.c.h.b16 %v1504
      %v2862 = vunpack.c.l.b16 %v1505
      %v2863 = vunpack.c.l.b16 %v1506
      %v2864 = vunpack.c.h.b16 %v1506
      %v2865 = vunpack.c.l.b16 %v1507
      %v2866 = vunpack.c.l.b16 %v1508
      %v2867 = vunpack.c.h.b16 %v1508
      %v2868 = vunpack.c.l.b16 %v1509
      %v2869 = vunpack.c.l.b16 %v1510
      %v2870 = vunpack.c.h.b16 %v1510
      %v2871 = vunpack.c.l.b16 %v1511
      %v2872 = vunpack.c.l.b16 %v1512
      %v2873 = vunpack.c.h.b16 %v1512
      %v2874 = vunpack.c.l.b16 %v1513
      %v2875 = vunpack.c.l.b16 %v1514
      %v2876 = vunpack.c.h.b16 %v1514
      %v2877 = vunpack.c.l.b16 %v1515
      %v2878 = vunpack.c.l.b16 %v1516
      %v2879 = vunpack.c.h.b16 %v1516
      %v2880 = vunpack.c.l.b16 %v1517
      %v2881 = vunpack.c.l.b16 %v1518
      %v2882 = vunpack.c.h.b16 %v1518
      %v2883 = vunpack.c.l.b16 %v1519
      %v2884 = vunpack.c.l.b16 %v1520
      %v2885 = vunpack.c.h.b16 %v1520
      %v2886 = vunpack.c.l.b16 %v1521
      %v2887 = vunpack.c.l.b16 %v1522
      %v2888 = vunpack.c.h.b16 %v1522
      %v2889 = vunpack.c.l.b16 %v1523
      %v2890 = vunpack.c.l.b16 %v1524
      %v2891 = vunpack.c.h.b16 %v1524
      %v2892 = vunpack.c.l.b16 %v1525
      %v2893 = vunpack.c.l.b16 %v1526
      %v2894 = vunpack.c.h.b16 %v1526
      %v2895 = vunpack.c.l.b16 %v1527
      %v2896 = vunpack.c.l.b16 %v1528
      %v2897 = vunpack.c.h.b16 %v1528
      %v2898 = vunpack.c.l.b16 %v1529
      %v2899 = vunpack.c.l.b16 %v1530
      %v2900 = vunpack.c.h.b16 %v1530
      %v2901 = vunpack.c.l.b16 %v1531
      %v2902 = vunpack.c.l.b16 %v1532
      %v2903 = vunpack.c.h.b16 %v1532
      %v2904 = vunpack.c.l.b16 %v1533
      %v2905 = vunpack.c.l.b16 %v1534
      %v2906 = vunpack.c.h.b16 %v1534
      %v2907 = vunpack.c.l.b16 %v1535
      %v2908 = vunpack.c.l.b16 %v1536
      %v2909 = vunpack.c.h.b16 %v1536
      %v2910 = vunpack.c.l.b16 %v1537
      %v2911 = vunpack.c.l.b16 %v1538
      %v2912 = vunpack.c.h.b16 %v1538
      %v2913 = vunpack.c.l.b16 %v1539
      %v2914 = vunpack.c.l.b16 %v1540
      %v2915 = vunpack.c.h.b16 %v1540
      %v2916 = vunpack.c.l.b16 %v1541
      %v2917 = vunpack.c.l.b16 %v1542
      %v2918 = vunpack.c.h.b16 %v1542
      %v2919 = vunpack.c.l.b16 %v1543
      %v2920 = vunpack.c.l.b16 %v1544
      %v2921 = vunpack.c.h.b16 %v1544
      %v2922 = vunpack.c.l.b16 %v1545
      %v2923 = vunpack.c.l.b16 %v1546
      %v2924 = vunpack.c.h.b16 %v1546
      %v2925 = vunpack.c.l.b16 %v1547
      %v2926 = vunpack.c.l.b16 %v1548
      %v2927 = vunpack.c.h.b16 %v1548
      %v2928 = vunpack.c.l.b16 %v1549
      %v2929 = vunpack.c.l.b16 %v1550
      %v2930 = vunpack.c.h.b16 %v1550
      %v2931 = vunpack.c.l.b16 %v1551
      %v2932 = vunpack.c.l.b16 %v1552
      %v2933 = vunpack.c.h.b16 %v1552
      %v2934 = vunpack.c.l.b16 %v1553
      %v2935 = vunpack.c.l.b16 %v1554
      %v2936 = vunpack.c.h.b16 %v1554
      %v2937 = vunpack.c.l.b16 %v1555
      %v2938 = vunpack.c.l.b16 %v1556
      %v2939 = vunpack.c.h.b16 %v1556
      %v2940 = vunpack.c.l.b16 %v1557
      %v2941 = vunpack.c.l.b16 %v1558
      %v2942 = vunpack.c.h.b16 %v1558
      %v2943 = vunpack.c.l.b16 %v1559
      %v2944 = vunpack.c.l.b16 %v1560
      %v2945 = vunpack.c.h.b16 %v1560
      %v2946 = vunpack.c.l.b16 %v1561
      %v2947 = vunpack.c.l.b16 %v1562
      %v2948 = vunpack.c.h.b16 %v1562
      %v2949 = vunpack.c.l.b16 %v1563
      %v2950 = vunpack.c.l.b16 %v1564
      %v2951 = vunpack.c.h.b16 %v1564
      %v2952 = vunpack.c.l.b16 %v1565
      %v2953 = vunpack.c.l.b16 %v1566
      %v2954 = vunpack.c.h.b16 %v1566
      %v2955 = vunpack.c.l.b16 %v1567
      %v2956 = vunpack.c.l.b16 %v1568
      %v2957 = vunpack.c.h.b16 %v1568
      %v2958 = vunpack.c.l.b16 %v1569
      %v2959 = vunpack.c.l.b16 %v1570
      %v2960 = vunpack.c.h.b16 %v1570
      %v2961 = vunpack.c.l.b16 %v1571
      %v2962 = vunpack.c.l.b16 %v1572
      %v2963 = vunpack.c.h.b16 %v1572
      %v2964 = vunpack.c.l.b16 %v1573
      %v2965 = vunpack.c.l.b16 %v1574
      %v2966 = vunpack.c.h.b16 %v1574
      %v2967 = vunpack.c.l.b16 %v1575
      %v2968 = vunpack.c.l.b16 %v1576
      %v2969 = vunpack.c.h.b16 %v1576
      %v2970 = vunpack.c.l.b16 %v1577
      %v2971 = vunpack.c.l.b16 %v1578
      %v2972 = vunpack.c.h.b16 %v1578
      %v2973 = vunpack.c.l.b16 %v1579
      %v2974 = vunpack.c.l.b16 %v1580
      %v2975 = vunpack.c.h.b16 %v1580
      %v2976 = vunpack.c.l.b16 %v1581
      %v2977 = vunpack.c.l.b16 %v1582
      %v2978 = vunpack.c.h.b16 %v1582
      %v2979 = vunpack.c.l.b16 %v1583
      %v2980 = vunpack.c.l.b16 %v1584
      %v2981 = vunpack.c.h.b16 %v1584
      %v2982 = vunpack.c.l.b16 %v1585
      %v2983 = vunpack.c.l.b16 %v1586
      %v2984 = vunpack.c.h.b16 %v1586
      %v2985 = vunpack.c.l.b16 %v1587
      %v2986 = vunpack.c.l.b16 %v1588
      %v2987 = vunpack.c.h.b16 %v1588
      %v2988 = vunpack.c.l.b16 %v1589
      %v2989 = vunpack.c.l.b16 %v1590
      %v2990 = vunpack.c.h.b16 %v1590
      %v2991 = vunpack.c.l.b16 %v1591
      %v2992 = vunpack.c.l.b16 %v1592
      %v2993 = vunpack.c.h.b16 %v1592
      %v2994 = vunpack.c.l.b16 %v1593
      %v2995 = vunpack.c.l.b16 %v1594
      %v2996 = vunpack.c.h.b16 %v1594
      %v2997 = vunpack.c.l.b16 %v1595
      %v2998 = vunpack.c.l.b16 %v1596
      %v2999 = vunpack.c.h.b16 %v1596
      %v3000 = vunpack.c.l.b16 %v1597
      %v3001 = vunpack.c.l.b16 %v1598
      %v3002 = vunpack.c.h.b16 %v1598
      %v3003 = vunpack.c.l.b16 %v1599
      %v3004 = vunpack.c.l.b16 %v1600
      %v3005 = vunpack.c.h.b16 %v1600
      %v3006 = vunpack.c.l.b16 %v1601
      %v3007 = vunpack.c.l.b16 %v1602
      %v3008 = vunpack.c.h.b16 %v1602
      %v3009 = vunpack.c.l.b16 %v1603
      %v3010 = vunpack.c.l.b16 %v1604
      %v3011 = vunpack.c.h.b16 %v1604
      %v3012 = vunpack.c.l.b16 %v1605
      %v3013 = vunpack.c.l.b16 %v1606
      %v3014 = vunpack.c.h.b16 %v1606
      %v3015 = vunpack.c.l.b16 %v1607
      %v3016 = vunpack.c.l.b16 %v1608
      %v3017 = vunpack.c.h.b16 %v1608
      %v3018 = vunpack.c.l.b16 %v1609
      %v3019 = vunpack.c.l.b16 %v1610
      %v3020 = vunpack.c.h.b16 %v1610
      %v3021 = vunpack.c.l.b16 %v1611
      %v3022 = vunpack.c.l.b16 %v1612
      %v3023 = vunpack.c.h.b16 %v1612
      %v3024 = vunpack.c.l.b16 %v1613
      %v3025 = vunpack.c.l.b16 %v1614
      %v3026 = vunpack.c.h.b16 %v1614
      %v3027 = vunpack.c.l.b16 %v1615
      %v3028 = vunpack.c.l.b16 %v1616
      %v3029 = vunpack.c.h.b16 %v1616
      %v3030 = vunpack.c.l.b16 %v1617
      %v3031 = vunpack.c.l.b16 %v1618
      %v3032 = vunpack.c.h.b16 %v1618
      %v3033 = vunpack.c.l.b16 %v1619
      %v3034 = vunpack.c.l.b16 %v1620
      %v3035 = vunpack.c.h.b16 %v1620
      %v3036 = vunpack.c.l.b16 %v1621
      %v3037 = vunpack.c.l.b16 %v1622
      %v3038 = vunpack.c.h.b16 %v1622
      %v3039 = vunpack.c.l.b16 %v1623
      %v3040 = vunpack.c.l.b16 %v1624
      %v3041 = vunpack.c.h.b16 %v1624
      %v3042 = vunpack.c.l.b16 %v1625
      %v3043 = vunpack.c.l.b16 %v1626
      %v3044 = vunpack.c.h.b16 %v1626
      %v3045 = vunpack.c.l.b16 %v1627
      %v3046 = vunpack.c.l.b16 %v1628
      %v3047 = vunpack.c.h.b16 %v1628
      %v3048 = vunpack.c.l.b16 %v1629
      %v3049 = vunpack.c.l.b16 %v1630
      %v3050 = vunpack.c.h.b16 %v1630
      %v3051 = vunpack.c.l.b16 %v1631
      %v3052 = vunpack.c.l.b16 %v1632
      %v3053 = vunpack.c.h.b16 %v1632
      %v3054 = vunpack.c.l.b16 %v1633
      %v3055 = vunpack.c.l.b16 %v1634
      %v3056 = vunpack.c.h.b16 %v1634
      %v3057 = vunpack.c.l.b16 %v1635
      %v3058 = vunpack.c.l.b16 %v1636
      %v3059 = vunpack.c.h.b16 %v1636
      %v3060 = vunpack.c.l.b16 %v1637
      %v3061 = vunpack.c.l.b16 %v1638
      %v3062 = vunpack.c.h.b16 %v1638
      %v3063 = vunpack.c.l.b16 %v1639
      %v3064 = vunpack.c.l.b16 %v1640
      %v3065 = vunpack.c.h.b16 %v1640
      %v3066 = vunpack.c.l.b16 %v1641
      %v3067 = vunpack.c.l.b16 %v1642
      %v3068 = vunpack.c.h.b16 %v1642
      %v3069 = vunpack.c.l.b16 %v1643
      %v3070 = vunpack.c.l.b16 %v1644
      %v3071 = vunpack.c.h.b16 %v1644
      %v3072 = vunpack.c.l.b16 %v1645
      %v3073 = vunpack.c.l.b16 %v1646
      %v3074 = vunpack.c.h.b16 %v1646
      %v3075 = vunpack.c.l.b16 %v1647
      %v3076 = vunpack.c.l.b16 %v1648
      %v3077 = vunpack.c.h.b16 %v1648
      %v3078 = vunpack.c.l.b16 %v1649
      %v3079 = vunpack.c.l.b16 %v1650
      %v3080 = vunpack.c.h.b16 %v1650
      %v3081 = vunpack.c.l.b16 %v1651
      %v3082 = vunpack.c.l.b16 %v1652
      %v3083 = vunpack.c.h.b16 %v1652
      %v3084 = vunpack.c.l.b16 %v1653
      %v3085 = vunpack.c.l.b16 %v1654
      %v3086 = vunpack.c.h.b16 %v1654
      %v3087 = vunpack.c.l.b16 %v1655
      %v3088 = vunpack.c.l.b16 %v1656
      %v3089 = vunpack.c.h.b16 %v1656
      %v3090 = vunpack.c.l.b16 %v1657
      %v3091 = vunpack.c.l.b16 %v1658
      %v3092 = vunpack.c.h.b16 %v1658
      %v3093 = vunpack.c.l.b16 %v1659
      %v3094 = vunpack.c.l.b16 %v1660
      %v3095 = vunpack.c.h.b16 %v1660
      %v3096 = vunpack.c.l.b16 %v1661
      %v3097 = vunpack.c.l.b16 %v1662
      %v3098 = vunpack.c.h.b16 %v1662
      %v3099 = vunpack.c.l.b16 %v1663
      %v3100 = vunpack.c.l.b16 %v1664
      %v3101 = vunpack.c.h.b16 %v1664
      %v3102 = vunpack.c.l.b16 %v1665
      %v3103 = vunpack.c.l.b16 %v1666
      %v3104 = vunpack.c.h.b16 %v1666
      %v3105 = vunpack.c.l.b16 %v1667
      %v3106 = vunpack.c.l.b16 %v1668
      %v3107 = vunpack.c.h.b16 %v1668
      %v3108 = vunpack.c.l.b16 %v1669
      %v3109 = vunpack.c.l.b16 %v1670
      %v3110 = vunpack.c.h.b16 %v1670
      %v3111 = vunpack.c.l.b16 %v1671
      %v3112 = vunpack.c.l.b16 %v1672
      %v3113 = vunpack.c.h.b16 %v1672
      %v3114 = vunpack.c.l.b16 %v1673
      %v3115 = vunpack.c.l.b16 %v1674
      %v3116 = vunpack.c.h.b16 %v1674
      %v3117 = vunpack.c.l.b16 %v1675
      %v3118 = vunpack.c.l.b16 %v1676
      %v3119 = vunpack.c.h.b16 %v1676
      %v3120 = vunpack.c.l.b16 %v1677
      %v3121 = vunpack.c.l.b16 %v1678
      %v3122 = vunpack.c.h.b16 %v1678
      %v3123 = vunpack.c.l.b16 %v1679
      %v3124 = vunpack.c.l.b16 %v1680
      %v3125 = vunpack.c.h.b16 %v1680
      %v3126 = vunpack.c.l.b16 %v1681
      %v3127 = vunpack.c.l.b16 %v1682
      %v3128 = vunpack.c.h.b16 %v1682
      %v3129 = vunpack.c.l.b16 %v1683
      %v3130 = vunpack.c.l.b16 %v1684
      %v3131 = vunpack.c.h.b16 %v1684
      %v3132 = vunpack.c.l.b16 %v1685
      %v3133 = vunpack.c.l.b16 %v1686
      %v3134 = vunpack.c.h.b16 %v1686
      %v3135 = vunpack.c.l.b16 %v1687
      %v3136 = vunpack.c.l.b16 %v1688
      %v3137 = vunpack.c.h.b16 %v1688
      %v3138 = vunpack.c.l.b16 %v1689
      %v3139 = vunpack.c.l.b16 %v1690
      %v3140 = vunpack.c.h.b16 %v1690
      %v3141 = vunpack.c.l.b16 %v1691
      %v3142 = vunpack.c.l.b16 %v1692
      %v3143 = vunpack.c.h.b16 %v1692
      %v3144 = vunpack.c.l.b16 %v1693
      %v3145 = vunpack.c.l.b16 %v1694
      %v3146 = vunpack.c.h.b16 %v1694
      %v3147 = vunpack.c.l.b16 %v1695
      %v3148 = vunpack.c.l.b16 %v1696
      %v3149 = vunpack.c.h.b16 %v1696
      %v3150 = vunpack.c.l.b16 %v1697
      %v3151 = vunpack.c.l.b16 %v1698
      %v3152 = vunpack.c.h.b16 %v1698
      %v3153 = vunpack.c.l.b16 %v1699
      %v3154 = vunpack.c.l.b16 %v1700
      %v3155 = vunpack.c.h.b16 %v1700
      %v3156 = vunpack.c.l.b16 %v1701
      %v3157 = vunpack.c.l.b16 %v1702
      %v3158 = vunpack.c.h.b16 %v1702
      %v3159 = vunpack.c.l.b16 %v1703
      %v3160 = vpack.c.b16 %v2731, %v2728
      %v3161 = vpack.c.b16 %v2732, %v2729
      %v3162 = vpack.c.b16 %v2733, %v2730
      %v3163 = vpack.c.b16 %v2737, %v2734
      %v3164 = vpack.c.b16 %v2738, %v2735
      %v3165 = vpack.c.b16 %v2739, %v2736
      %v3166 = vpack.c.b16 %v2743, %v2740
      %v3167 = vpack.c.b16 %v2744, %v2741
      %v3168 = vpack.c.b16 %v2745, %v2742
      %v3169 = vpack.c.b16 %v2749, %v2746
      %v3170 = vpack.c.b16 %v2750, %v2747
      %v3171 = vpack.c.b16 %v2751, %v2748
      %v3172 = vpack.c.b16 %v2755, %v2752
      %v3173 = vpack.c.b16 %v2756, %v2753
      %v3174 = vpack.c.b16 %v2757, %v2754
      %v3175 = vpack.c.b16 %v2761, %v2758
      %v3176 = vpack.c.b16 %v2762, %v2759
      %v3177 = vpack.c.b16 %v2763, %v2760
      %v3178 = vpack.c.b16 %v2767, %v2764
      %v3179 = vpack.c.b16 %v2768, %v2765
      %v3180 = vpack.c.b16 %v2769, %v2766
      %v3181 = vpack.c.b16 %v2773, %v2770
      %v3182 = vpack.c.b16 %v2774, %v2771
      %v3183 = vpack.c.b16 %v2775, %v2772
      %v3184 = vpack.c.b16 %v2779, %v2776
      %v3185 = vpack.c.b16 %v2780, %v2777
      %v3186 = vpack.c.b16 %v2781, %v2778
      %v3187 = vpack.c.b16 %v2785, %v2782
      %v3188 = vpack.c.b16 %v2786, %v2783
      %v3189 = vpack.c.b16 %v2787, %v2784
      %v3190 = vpack.c.b16 %v2791, %v2788
      %v3191 = vpack.c.b16 %v2792, %v2789
      %v3192 = vpack.c.b16 %v2793, %v2790
      %v3193 = vpack.c.b16 %v2797, %v2794
      %v3194 = vpack.c.b16 %v2798, %v2795
      %v3195 = vpack.c.b16 %v2799, %v2796
      %v3196 = vpack.c.b16 %v2803, %v2800
      %v3197 = vpack.c.b16 %v2804, %v2801
      %v3198 = vpack.c.b16 %v2805, %v2802
      %v3199 = vpack.c.b16 %v2809, %v2806
      %v3200 = vpack.c.b16 %v2810, %v2807
      %v3201 = vpack.c.b16 %v2811, %v2808
      %v3202 = vpack.c.b16 %v2815, %v2812
      %v3203 = vpack.c.b16 %v2816, %v2813
      %v3204 = vpack.c.b16 %v2817, %v2814
      %v3205 = vpack.c.b16 %v2821, %v2818
      %v3206 = vpack.c.b16 %v2822, %v2819
      %v3207 = vpack.c.b16 %v2823, %v2820
      %v3208 = vpack.c.b16 %v2827, %v2824
      %v3209 = vpack.c.b16 %v2828, %v2825
      %v3210 = vpack.c.b16 %v2829, %v2826
      %v3211 = vpack.c.b16 %v2833, %v2830
      %v3212 = vpack.c.b16 %v2834, %v2831
      %v3213 = vpack.c.b16 %v2835, %v2832
      %v3214 = vpack.c.b16 %v2839, %v2836
      %v3215 = vpack.c.b16 %v2840, %v2837
      %v3216 = vpack.c.b16 %v2841, %v2838
      %v3217 = vpack.c.b16 %v2845, %v2842
      %v3218 = vpack.c.b16 %v2846, %v2843
      %v3219 = vpack.c.b16 %v2847, %v2844
      %v3220 = vpack.c.b16 %v2851, %v2848
      %v3221 = vpack.c.b16 %v2852, %v2849
      %v3222 = vpack.c.b16 %v2853, %v2850
      %v3223 = vpack.c.b16 %v2857, %v2854
      %v3224 = vpack.c.b16 %v2858, %v2855
      %v3225 = vpack.c.b16 %v2859, %v2856
      %v3226 = vpack.c.b16 %v2863, %v2860
      %v3227 = vpack.c.b16 %v2864, %v2861
      %v3228 = vpack.c.b16 %v2865, %v2862
      %v3229 = vpack.c.b16 %v2869, %v2866
      %v3230 = vpack.c.b16 %v2870, %v2867
      %v3231 = vpack.c.b16 %v2871, %v2868
      %v3232 = vpack.c.b16 %v2875, %v2872
      %v3233 = vpack.c.b16 %v2876, %v2873
      %v3234 = vpack.c.b16 %v2877, %v2874
      %v3235 = vpack.c.b16 %v2881, %v2878
      %v3236 = vpack.c.b16 %v2882, %v2879
      %v3237 = vpack.c.b16 %v2883, %v2880
      %v3238 = vpack.c.b16 %v2887, %v2884
      %v3239 = vpack.c.b16 %v2888, %v2885
      %v3240 = vpack.c.b16 %v2889, %v2886
      %v3241 = vpack.c.b16 %v2893, %v2890
      %v3242 = vpack.c.b16 %v2894, %v2891
      %v3243 = vpack.c.b16 %v2895, %v2892
      %v3244 = vpack.c.b16 %v2899, %v2896
      %v3245 = vpack.c.b16 %v2900, %v2897
      %v3246 = vpack.c.b16 %v2901, %v2898
      %v3247 = vpack.c.b16 %v2905, %v2902
      %v3248 = vpack.c.b16 %v2906, %v2903
      %v3249 = vpack.c.b16 %v2907, %v2904
      %v3250 = vpack.c.b16 %v2911, %v2908
      %v3251 = vpack.c.b16 %v2912, %v2909
      %v3252 = vpack.c.b16 %v2913, %v2910
      %v3253 = vpack.c.b16 %v2917, %v2914
      %v3254 = vpack.c.b16 %v2918, %v2915
      %v3255 = vpack.c.b16 %v2919, %v2916
      %v3256 = vpack.c.b16 %v2923, %v2920
      %v3257 = vpack.c.b16 %v2924, %v2921
      %v3258 = vpack.c.b16 %v2925, %v2922
      %v3259 = vpack.c.b16 %v2929, %v2926
      %v3260 = vpack.c.b16 %v2930, %v2927
      %v3261 = vpack.c.b16 %v2931, %v2928
      %v3262 = vpack.c.b16 %v2935, %v2932
      %v3263 = vpack.c.b16 %v2936, %v2933
      %v3264 = vpack.c.b16 %v2937, %v2934
      %v3265 = vpack.c.b16 %v2941, %v2938
      %v3266 = vpack.c.b16 %v2942, %v2939
      %v3267 = vpack.c.b16 %v2943, %v2940
      %v3268 = vpack.c.b16 %v2947, %v2944
      %v3269 = vpack.c.b16 %v2948, %v2945
      %v3270 = vpack.c.b16 %v2949, %v2946
      %v3271 = vpack.c.b16 %v2953, %v2950
      %v3272 = vpack.c.b16 %v2954, %v2951
      %v3273 = vpack.c.b16 %v2955, %v2952
      %v3274 = vpack.c.b16 %v2959, %v2956
      %v3275 = vpack.c.b16 %v2960, %v2957
      %v3276 = vpack.c.b16 %v2961, %v2958
      %v3277 = vpack.c.b16 %v2965, %v2962
      %v3278 = vpack.c.b16 %v2966, %v2963
      %v3279 = vpack.c.b16 %v2967, %v2964
      %v3280 = vpack.c.b16 %v2971, %v2968
      %v3281 = vpack.c.b16 %v2972, %v2969
      %v3282 = vpack.c.b16 %v2973, %v2970
      %v3283 = vpack.c.b16 %v2977, %v2974
      %v3284 = vpack.c.b16 %v2978, %v2975
      %v3285 = vpack.c.b16 %v2979, %v2976
      %v3286 = vpack.c.b16 %v2983, %v2980
      %v3287 = vpack.c.b16 %v2984, %v2981
      %v3288 = vpack.c.b16 %v2985, %v2982
      %v3289 = vpack.c.b16 %v2989, %v2986
      %v3290 = vpack.c.b16 %v2990, %v2987
      %v3291 = vpack.c.b16 %v2991, %v2988
      %v3292 = vpack.c.b16 %v2995, %v2992
      %v3293 = vpack.c.b16 %v2996, %v2993
      %v3294 = vpack.c.b16 %v2997, %v2994
      %v3295 = vpack.c.b16 %v3001, %v2998
      %v3296 = vpack.c.b16 %v3002, %v2999
      %v3297 = vpack.c.b16 %v3003, %v3000
      %v3298 = vpack.c.b16 %v3007, %v3004
      %v3299 = vpack.c.b16 %v3008, %v3005
      %v3300 = vpack.c.b16 %v3009, %v3006
      %v3301 = vpack.c.b16 %v3013, %v3010
      %v3302 = vpack.c.b16 %v3014, %v3011
      %v3303 = vpack.c.b16 %v3015, %v3012
      %v3304 = vpack.c.b16 %v3019, %v3016
      %v3305 = vpack.c.b16 %v3020, %v3017
      %v3306 = vpack.c.b16 %v3021, %v3018
      %v3307 = vpack.c.b16 %v3025, %v3022
      %v3308 = vpack.c.b16 %v3026, %v3023
      %v3309 = vpack.c.b16 %v3027, %v3024
      %v3310 = vpack.c.b16 %v3031, %v3028
      %v3311 = vpack.c.b16 %v3032, %v3029
      %v3312 = vpack.c.b16 %v3033, %v3030
      %v3313 = vpack.c.b16 %v3037, %v3034
      %v3314 = vpack.c.b16 %v3038, %v3035
      %v3315 = vpack.c.b16 %v3039, %v3036
      %v3316 = vpack.c.b16 %v3043, %v3040
      %v3317 = vpack.c.b16 %v3044, %v3041
      %v3318 = vpack.c.b16 %v3045, %v3042
      %v3319 = vpack.c.b16 %v3049, %v3046
      %v3320 = vpack.c.b16 %v3050, %v3047
      %v3321 = vpack.c.b16 %v3051, %v3048
      %v3322 = vpack.c.b16 %v3055, %v3052
      %v3323 = vpack.c.b16 %v3056, %v3053
      %v3324 = vpack.c.b16 %v3057, %v3054
      %v3325 = vpack.c.b16 %v3061, %v3058
      %v3326 = vpack.c.b16 %v3062, %v3059
      %v3327 = vpack.c.b16 %v3063, %v3060
      %v3328 = vpack.c.b16 %v3067, %v3064
      %v3329 = vpack.c.b16 %v3068, %v3065
      %v3330 = vpack.c.b16 %v3069, %v3066
      %v3331 = vpack.c.b16 %v3073, %v3070
      %v3332 = vpack.c.b16 %v3074, %v3071
      %v3333 = vpack.c.b16 %v3075, %v3072
      %v3334 = vpack.c.b16 %v3079, %v3076
      %v3335 = vpack.c.b16 %v3080, %v3077
      %v3336 = vpack.c.b16 %v3081, %v3078
      %v3337 = vpack.c.b16 %v3085, %v3082
      %v3338 = vpack.c.b16 %v3086, %v3083
      %v3339 = vpack.c.b16 %v3087, %v3084
      %v3340 = vpack.c.b16 %v3091, %v3088
      %v3341 = vpack.c.b16 %v3092, %v3089
      %v3342 = vpack.c.b16 %v3093, %v3090
      %v3343 = vpack.c.b16 %v3097, %v3094
      %v3344 = vpack.c.b16 %v3098, %v3095
      %v3345 = vpack.c.b16 %v3099, %v3096
      %v3346 = vpack.c.b16 %v3103, %v3100
      %v3347 = vpack.c.b16 %v3104, %v3101
      %v3348 = vpack.c.b16 %v3105, %v3102
      %v3349 = vpack.c.b16 %v3109, %v3106
      %v3350 = vpack.c.b16 %v3110, %v3107
      %v3351 = vpack.c.b16 %v3111, %v3108
      %v3352 = vpack.c.b16 %v3115, %v3112
      %v3353 = vpack.c.b16 %v3116, %v3113
      %v3354 = vpack.c.b16 %v3117, %v3114
      %v3355 = vpack.c.b16 %v3121, %v3118
      %v3356 = vpack.c.b16 %v3122, %v3119
      %v3357 = vpack.c.b16 %v3123, %v3120
      %v3358 = vpack.c.b16 %v3127, %v3124
      %v3359 = vpack.c.b16 %v3128, %v3125
      %v3360 = vpack.c.b16 %v3129, %v3126
      %v3361 = vpack.c.b16 %v3133, %v3130
      %v3362 = vpack.c.b16 %v3134, %v3131
      %v3363 = vpack.c.b16 %v3135, %v3132
      %v3364 = vpack.c.b16 %v3139, %v3136
      %v3365 = vpack.c.b16 %v3140, %v3137
      %v3366 = vpack.c.b16 %v3141, %v3138
      %v3367 = vpack.c.b16 %v3145, %v3142
      %v3368 = vpack.c.b16 %v3146, %v3143
      %v3369 = vpack.c.b16 %v3147, %v3144
      %v3370 = vpack.c.b16 %v3151, %v3148
      %v3371 = vpack.c.b16 %v3152, %v3149
      %v3372 = vpack.c.b16 %v3153, %v3150
      %v3373 = vpack.c.b16 %v3157, %v3154
      %v3374 = vpack.c.b16 %v3158, %v3155
      %v3375 = vpack.c.b16 %v3159, %v3156
      %3592 = vmatprep.subr.bf16.mxu0 %v3182
      %3593 = vmatpush1.bf16.msra.mxu0 %v3181
      %3594 = vmatprep.subr.bf16.mxu0 %v3179
      %3595 = vmatpush1.bf16.msra.mxu0 %v3178
      %3596 = vmatprep.subr.bf16.mxu0 %v3176
      %3597 = vmatpush1.bf16.msra.mxu0 %v3175
      %3598 = vmatprep.subr.bf16.mxu0 %v3173
      %3599 = vmatpush1.bf16.msra.mxu0 %v3172
      %3600 = vmatprep.subr.bf16.mxu0 %v3170
      %3601 = vmatpush1.bf16.msra.mxu0 %v3169
      %3602 = vmatprep.subr.bf16.mxu0 %v3167
      %3603 = vmatpush1.bf16.msra.mxu0 %v3166
      %3604 = vmatprep.subr.bf16.mxu0 %v3164
      %3605 = vmatpush1.bf16.msra.mxu0 %v3163
      %3606 = vmatprep.subr.bf16.mxu0 %v3161
      %3607 = vmatpush1.bf16.msra.mxu0 %v3160
      %3608 = vmatprep.subr.bf16.mxu0 %v3206
      %3609 = vmatpush2.bf16.msra.mxu0 %v3205
      %3610 = vmatprep.subr.bf16.mxu0 %v3203
      %3611 = vmatpush2.bf16.msra.mxu0 %v3202
      %3612 = vmatprep.subr.bf16.mxu0 %v3200
      %3613 = vmatpush2.bf16.msra.mxu0 %v3199
      %3614 = vmatprep.subr.bf16.mxu0 %v3197
      %3615 = vmatpush2.bf16.msra.mxu0 %v3196
      %3616 = vmatprep.subr.bf16.mxu0 %v3194
      %3617 = vmatpush2.bf16.msra.mxu0 %v3193
      %3618 = vmatprep.subr.bf16.mxu0 %v3191
      %3619 = vmatpush2.bf16.msra.mxu0 %v3190
      %3620 = vmatprep.subr.bf16.mxu0 %v3188
      %3621 = vmatpush2.bf16.msra.mxu0 %v3187
      %3622 = vmatprep.subr.bf16.mxu0 %v3185
      %3623 = vmatpush2.bf16.msra.mxu0 %v3184
      %3624 = vmatprep.mubr.bf16.mxu0 %v2153
      %3625 = vmatmul.mubr.bf16.gmra.mxu0 %v2152
      %v3626 = vpop.f32.mrf.mxu0
      %v3627 = vadd.f32 0.0, %v3626
      %v3628 = vpop.f32.mrf.mxu0
      %v3629 = vadd.f32 0.0, %v3628
      %v3630 = vpop.f32.mrf.mxu0
      %v3631 = vadd.f32 0.0, %v3630
      %v3632 = vpop.f32.mrf.mxu0
      %v3633 = vadd.f32 0.0, %v3632
      %3634 = vmatprep.mubr.bf16.mxu0 %v2162
      %3635 = vmatmul.mubr.bf16.gmra.mxu0 %v2161
      %v3636 = vpop.f32.mrf.mxu0
      %v3637 = vadd.f32 0.0, %v3636
      %v3638 = vpop.f32.mrf.mxu0
      %v3639 = vadd.f32 0.0, %v3638
      %v3640 = vpop.f32.mrf.mxu0
      %v3641 = vadd.f32 0.0, %v3640
      %v3642 = vpop.f32.mrf.mxu0
      %v3643 = vadd.f32 0.0, %v3642
      %3644 = vmatprep.mubr.bf16.mxu0 %v2171
      %3645 = vmatmul.mubr.bf16.gmra.mxu0 %v2170
      %v3646 = vpop.f32.mrf.mxu0
      %v3647 = vadd.f32 0.0, %v3646
      %v3648 = vpop.f32.mrf.mxu0
      %v3649 = vadd.f32 0.0, %v3648
      %v3650 = vpop.f32.mrf.mxu0
      %v3651 = vadd.f32 0.0, %v3650
      %v3652 = vpop.f32.mrf.mxu0
      %v3653 = vadd.f32 0.0, %v3652
      %3654 = vmatprep.mubr.bf16.mxu0 %v2180
      %3655 = vmatmul.mubr.bf16.gmra.mxu0 %v2179
      %v3656 = vpop.f32.mrf.mxu0
      %v3657 = vadd.f32 0.0, %v3656
      %v3658 = vpop.f32.mrf.mxu0
      %v3659 = vadd.f32 0.0, %v3658
      %v3660 = vpop.f32.mrf.mxu0
      %v3661 = vadd.f32 0.0, %v3660
      %v3662 = vpop.f32.mrf.mxu0
      %v3663 = vadd.f32 0.0, %v3662
      %3664 = vmatprep.mubr.bf16.mxu0 %v2189
      %3665 = vmatmul.mubr.bf16.gmra.mxu0 %v2188
      %v3666 = vpop.f32.mrf.mxu0
      %v3667 = vadd.f32 0.0, %v3666
      %v3668 = vpop.f32.mrf.mxu0
      %v3669 = vadd.f32 0.0, %v3668
      %v3670 = vpop.f32.mrf.mxu0
      %v3671 = vadd.f32 0.0, %v3670
      %v3672 = vpop.f32.mrf.mxu0
      %v3673 = vadd.f32 0.0, %v3672
      %3674 = vmatprep.mubr.bf16.mxu0 %v2198
      %3675 = vmatmul.mubr.bf16.gmra.mxu0 %v2197
      %v3676 = vpop.f32.mrf.mxu0
      %v3677 = vadd.f32 0.0, %v3676
      %v3678 = vpop.f32.mrf.mxu0
      %v3679 = vadd.f32 0.0, %v3678
      %v3680 = vpop.f32.mrf.mxu0
      %v3681 = vadd.f32 0.0, %v3680
      %v3682 = vpop.f32.mrf.mxu0
      %v3683 = vadd.f32 0.0, %v3682
      %3684 = vmatprep.mubr.bf16.mxu0 %v2207
      %3685 = vmatmul.mubr.bf16.gmra.mxu0 %v2206
      %v3686 = vpop.f32.mrf.mxu0
      %v3687 = vadd.f32 0.0, %v3686
      %v3688 = vpop.f32.mrf.mxu0
      %v3689 = vadd.f32 0.0, %v3688
      %v3690 = vpop.f32.mrf.mxu0
      %v3691 = vadd.f32 0.0, %v3690
      %v3692 = vpop.f32.mrf.mxu0
      %v3693 = vadd.f32 0.0, %v3692
      %3694 = vmatprep.mubr.bf16.mxu0 %v2216
      %3695 = vmatmul.mubr.bf16.gmra.mxu0 %v2215
      %v3696 = vpop.f32.mrf.mxu0
      %v3697 = vadd.f32 0.0, %v3696
      %v3698 = vpop.f32.mrf.mxu0
      %v3699 = vadd.f32 0.0, %v3698
      %v3700 = vpop.f32.mrf.mxu0
      %v3701 = vadd.f32 0.0, %v3700
      %v3702 = vpop.f32.mrf.mxu0
      %v3703 = vadd.f32 0.0, %v3702
      %3704 = vmatprep.mubr.bf16.mxu0 %v2225
      %3705 = vmatmul.mubr.bf16.gmra.mxu0 %v2224
      %v3706 = vpop.f32.mrf.mxu0
      %v3707 = vadd.f32 0.0, %v3706
      %v3708 = vpop.f32.mrf.mxu0
      %v3709 = vadd.f32 0.0, %v3708
      %v3710 = vpop.f32.mrf.mxu0
      %v3711 = vadd.f32 0.0, %v3710
      %v3712 = vpop.f32.mrf.mxu0
      %v3713 = vadd.f32 0.0, %v3712
      %3714 = vmatprep.mubr.bf16.mxu0 %v2234
      %3715 = vmatmul.mubr.bf16.gmra.mxu0 %v2233
      %v3716 = vpop.f32.mrf.mxu0
      %v3717 = vadd.f32 0.0, %v3716
      %v3718 = vpop.f32.mrf.mxu0
      %v3719 = vadd.f32 0.0, %v3718
      %v3720 = vpop.f32.mrf.mxu0
      %v3721 = vadd.f32 0.0, %v3720
      %v3722 = vpop.f32.mrf.mxu0
      %v3723 = vadd.f32 0.0, %v3722
      %3724 = vmatprep.mubr.bf16.mxu0 %v2243
      %3725 = vmatmul.mubr.bf16.gmra.mxu0 %v2242
      %v3726 = vpop.f32.mrf.mxu0
      %v3727 = vadd.f32 0.0, %v3726
      %v3728 = vpop.f32.mrf.mxu0
      %v3729 = vadd.f32 0.0, %v3728
      %v3730 = vpop.f32.mrf.mxu0
      %v3731 = vadd.f32 0.0, %v3730
      %v3732 = vpop.f32.mrf.mxu0
      %v3733 = vadd.f32 0.0, %v3732
      %3734 = vmatprep.mubr.bf16.mxu0 %v2252
      %3735 = vmatmul.mubr.bf16.gmra.mxu0 %v2251
      %v3736 = vpop.f32.mrf.mxu0
      %v3737 = vadd.f32 0.0, %v3736
      %v3738 = vpop.f32.mrf.mxu0
      %v3739 = vadd.f32 0.0, %v3738
      %v3740 = vpop.f32.mrf.mxu0
      %v3741 = vadd.f32 0.0, %v3740
      %v3742 = vpop.f32.mrf.mxu0
      %v3743 = vadd.f32 0.0, %v3742
      %3744 = vmatprep.mubr.bf16.mxu0 %v2261
      %3745 = vmatmul.mubr.bf16.gmra.mxu0 %v2260
      %v3746 = vpop.f32.mrf.mxu0
      %v3747 = vadd.f32 0.0, %v3746
      %v3748 = vpop.f32.mrf.mxu0
      %v3749 = vadd.f32 0.0, %v3748
      %v3750 = vpop.f32.mrf.mxu0
      %v3751 = vadd.f32 0.0, %v3750
      %v3752 = vpop.f32.mrf.mxu0
      %v3753 = vadd.f32 0.0, %v3752
      %3754 = vmatprep.mubr.bf16.mxu0 %v2270
      %3755 = vmatmul.mubr.bf16.gmra.mxu0 %v2269
      %v3756 = vpop.f32.mrf.mxu0
      %v3757 = vadd.f32 0.0, %v3756
      %v3758 = vpop.f32.mrf.mxu0
      %v3759 = vadd.f32 0.0, %v3758
      %v3760 = vpop.f32.mrf.mxu0
      %v3761 = vadd.f32 0.0, %v3760
      %v3762 = vpop.f32.mrf.mxu0
      %v3763 = vadd.f32 0.0, %v3762
      %3764 = vmatprep.mubr.bf16.mxu0 %v2279
      %3765 = vmatmul.mubr.bf16.gmra.mxu0 %v2278
      %v3766 = vpop.f32.mrf.mxu0
      %v3767 = vadd.f32 0.0, %v3766
      %v3768 = vpop.f32.mrf.mxu0
      %v3769 = vadd.f32 0.0, %v3768
      %v3770 = vpop.f32.mrf.mxu0
      %v3771 = vadd.f32 0.0, %v3770
      %v3772 = vpop.f32.mrf.mxu0
      %v3773 = vadd.f32 0.0, %v3772
      %3774 = vmatprep.mubr.bf16.mxu0 %v2288
      %3775 = vmatmul.mubr.bf16.gmra.mxu0 %v2287
      %v3776 = vpop.f32.mrf.mxu0
      %v3777 = vadd.f32 0.0, %v3776
      %v3778 = vpop.f32.mrf.mxu0
      %v3779 = vadd.f32 0.0, %v3778
      %v3780 = vpop.f32.mrf.mxu0
      %v3781 = vadd.f32 0.0, %v3780
      %v3782 = vpop.f32.mrf.mxu0
      %v3783 = vadd.f32 0.0, %v3782
      %3784 = vdwg.mxu0
      %3785 = vmatprep.subr.bf16.mxu0 %v3230
      %3786 = vmatpush1.bf16.msra.mxu0 %v3229
      %3787 = vmatprep.subr.bf16.mxu0 %v3227
      %3788 = vmatpush1.bf16.msra.mxu0 %v3226
      %3789 = vmatprep.subr.bf16.mxu0 %v3224
      %3790 = vmatpush1.bf16.msra.mxu0 %v3223
      %3791 = vmatprep.subr.bf16.mxu0 %v3221
      %3792 = vmatpush1.bf16.msra.mxu0 %v3220
      %3793 = vmatprep.subr.bf16.mxu0 %v3218
      %3794 = vmatpush1.bf16.msra.mxu0 %v3217
      %3795 = vmatprep.subr.bf16.mxu0 %v3215
      %3796 = vmatpush1.bf16.msra.mxu0 %v3214
      %3797 = vmatprep.subr.bf16.mxu0 %v3212
      %3798 = vmatpush1.bf16.msra.mxu0 %v3211
      %3799 = vmatprep.subr.bf16.mxu0 %v3209
      %3800 = vmatpush1.bf16.msra.mxu0 %v3208
      %3801 = vmatprep.subr.bf16.mxu0 %v3254
      %3802 = vmatpush2.bf16.msra.mxu0 %v3253
      %3803 = vmatprep.subr.bf16.mxu0 %v3251
      %3804 = vmatpush2.bf16.msra.mxu0 %v3250
      %3805 = vmatprep.subr.bf16.mxu0 %v3248
      %3806 = vmatpush2.bf16.msra.mxu0 %v3247
      %3807 = vmatprep.subr.bf16.mxu0 %v3245
      %3808 = vmatpush2.bf16.msra.mxu0 %v3244
      %3809 = vmatprep.subr.bf16.mxu0 %v3242
      %3810 = vmatpush2.bf16.msra.mxu0 %v3241
      %3811 = vmatprep.subr.bf16.mxu0 %v3239
      %3812 = vmatpush2.bf16.msra.mxu0 %v3238
      %3813 = vmatprep.subr.bf16.mxu0 %v3236
      %3814 = vmatpush2.bf16.msra.mxu0 %v3235
      %3815 = vmatprep.subr.bf16.mxu0 %v3233
      %3816 = vmatpush2.bf16.msra.mxu0 %v3232
      %3817 = vmatprep.mubr.bf16.mxu0 %v2155
      %3818 = vmatmul.mubr.bf16.gmra.mxu0 %v2154
      %v3819 = vpop.f32.mrf.mxu0
      %v3820 = vadd.f32 %v3627, %v3819
      %v3821 = vpop.f32.mrf.mxu0
      %v3822 = vadd.f32 %v3629, %v3821
      %v3823 = vpop.f32.mrf.mxu0
      %v3824 = vadd.f32 %v3631, %v3823
      %v3825 = vpop.f32.mrf.mxu0
      %v3826 = vadd.f32 %v3633, %v3825
      %3827 = vmatprep.mubr.bf16.mxu0 %v2164
      %3828 = vmatmul.mubr.bf16.gmra.mxu0 %v2163
      %v3829 = vpop.f32.mrf.mxu0
      %v3830 = vadd.f32 %v3637, %v3829
      %v3831 = vpop.f32.mrf.mxu0
      %v3832 = vadd.f32 %v3639, %v3831
      %v3833 = vpop.f32.mrf.mxu0
      %v3834 = vadd.f32 %v3641, %v3833
      %v3835 = vpop.f32.mrf.mxu0
      %v3836 = vadd.f32 %v3643, %v3835
      %3837 = vmatprep.mubr.bf16.mxu0 %v2173
      %3838 = vmatmul.mubr.bf16.gmra.mxu0 %v2172
      %v3839 = vpop.f32.mrf.mxu0
      %v3840 = vadd.f32 %v3647, %v3839
      %v3841 = vpop.f32.mrf.mxu0
      %v3842 = vadd.f32 %v3649, %v3841
      %v3843 = vpop.f32.mrf.mxu0
      %v3844 = vadd.f32 %v3651, %v3843
      %v3845 = vpop.f32.mrf.mxu0
      %v3846 = vadd.f32 %v3653, %v3845
      %3847 = vmatprep.mubr.bf16.mxu0 %v2182
      %3848 = vmatmul.mubr.bf16.gmra.mxu0 %v2181
      %v3849 = vpop.f32.mrf.mxu0
      %v3850 = vadd.f32 %v3657, %v3849
      %v3851 = vpop.f32.mrf.mxu0
      %v3852 = vadd.f32 %v3659, %v3851
      %v3853 = vpop.f32.mrf.mxu0
      %v3854 = vadd.f32 %v3661, %v3853
      %v3855 = vpop.f32.mrf.mxu0
      %v3856 = vadd.f32 %v3663, %v3855
      %3857 = vmatprep.mubr.bf16.mxu0 %v2191
      %3858 = vmatmul.mubr.bf16.gmra.mxu0 %v2190
      %v3859 = vpop.f32.mrf.mxu0
      %v3860 = vadd.f32 %v3667, %v3859
      %v3861 = vpop.f32.mrf.mxu0
      %v3862 = vadd.f32 %v3669, %v3861
      %v3863 = vpop.f32.mrf.mxu0
      %v3864 = vadd.f32 %v3671, %v3863
      %v3865 = vpop.f32.mrf.mxu0
      %v3866 = vadd.f32 %v3673, %v3865
      %3867 = vmatprep.mubr.bf16.mxu0 %v2200
      %3868 = vmatmul.mubr.bf16.gmra.mxu0 %v2199
      %v3869 = vpop.f32.mrf.mxu0
      %v3870 = vadd.f32 %v3677, %v3869
      %v3871 = vpop.f32.mrf.mxu0
      %v3872 = vadd.f32 %v3679, %v3871
      %v3873 = vpop.f32.mrf.mxu0
      %v3874 = vadd.f32 %v3681, %v3873
      %v3875 = vpop.f32.mrf.mxu0
      %v3876 = vadd.f32 %v3683, %v3875
      %3877 = vmatprep.mubr.bf16.mxu0 %v2209
      %3878 = vmatmul.mubr.bf16.gmra.mxu0 %v2208
      %v3879 = vpop.f32.mrf.mxu0
      %v3880 = vadd.f32 %v3687, %v3879
      %v3881 = vpop.f32.mrf.mxu0
      %v3882 = vadd.f32 %v3689, %v3881
      %v3883 = vpop.f32.mrf.mxu0
      %v3884 = vadd.f32 %v3691, %v3883
      %v3885 = vpop.f32.mrf.mxu0
      %v3886 = vadd.f32 %v3693, %v3885
      %3887 = vmatprep.mubr.bf16.mxu0 %v2218
      %3888 = vmatmul.mubr.bf16.gmra.mxu0 %v2217
      %v3889 = vpop.f32.mrf.mxu0
      %v3890 = vadd.f32 %v3697, %v3889
      %v3891 = vpop.f32.mrf.mxu0
      %v3892 = vadd.f32 %v3699, %v3891
      %v3893 = vpop.f32.mrf.mxu0
      %v3894 = vadd.f32 %v3701, %v3893
      %v3895 = vpop.f32.mrf.mxu0
      %v3896 = vadd.f32 %v3703, %v3895
      %3897 = vmatprep.mubr.bf16.mxu0 %v2227
      %3898 = vmatmul.mubr.bf16.gmra.mxu0 %v2226
      %v3899 = vpop.f32.mrf.mxu0
      %v3900 = vadd.f32 %v3707, %v3899
      %v3901 = vpop.f32.mrf.mxu0
      %v3902 = vadd.f32 %v3709, %v3901
      %v3903 = vpop.f32.mrf.mxu0
      %v3904 = vadd.f32 %v3711, %v3903
      %v3905 = vpop.f32.mrf.mxu0
      %v3906 = vadd.f32 %v3713, %v3905
      %3907 = vmatprep.mubr.bf16.mxu0 %v2236
      %3908 = vmatmul.mubr.bf16.gmra.mxu0 %v2235
      %v3909 = vpop.f32.mrf.mxu0
      %v3910 = vadd.f32 %v3717, %v3909
      %v3911 = vpop.f32.mrf.mxu0
      %v3912 = vadd.f32 %v3719, %v3911
      %v3913 = vpop.f32.mrf.mxu0
      %v3914 = vadd.f32 %v3721, %v3913
      %v3915 = vpop.f32.mrf.mxu0
      %v3916 = vadd.f32 %v3723, %v3915
      %3917 = vmatprep.mubr.bf16.mxu0 %v2245
      %3918 = vmatmul.mubr.bf16.gmra.mxu0 %v2244
      %v3919 = vpop.f32.mrf.mxu0
      %v3920 = vadd.f32 %v3727, %v3919
      %v3921 = vpop.f32.mrf.mxu0
      %v3922 = vadd.f32 %v3729, %v3921
      %v3923 = vpop.f32.mrf.mxu0
      %v3924 = vadd.f32 %v3731, %v3923
      %v3925 = vpop.f32.mrf.mxu0
      %v3926 = vadd.f32 %v3733, %v3925
      %3927 = vmatprep.mubr.bf16.mxu0 %v2254
      %3928 = vmatmul.mubr.bf16.gmra.mxu0 %v2253
      %v3929 = vpop.f32.mrf.mxu0
      %v3930 = vadd.f32 %v3737, %v3929
      %v3931 = vpop.f32.mrf.mxu0
      %v3932 = vadd.f32 %v3739, %v3931
      %v3933 = vpop.f32.mrf.mxu0
      %v3934 = vadd.f32 %v3741, %v3933
      %v3935 = vpop.f32.mrf.mxu0
      %v3936 = vadd.f32 %v3743, %v3935
      %3937 = vmatprep.mubr.bf16.mxu0 %v2263
      %3938 = vmatmul.mubr.bf16.gmra.mxu0 %v2262
      %v3939 = vpop.f32.mrf.mxu0
      %v3940 = vadd.f32 %v3747, %v3939
      %v3941 = vpop.f32.mrf.mxu0
      %v3942 = vadd.f32 %v3749, %v3941
      %v3943 = vpop.f32.mrf.mxu0
      %v3944 = vadd.f32 %v3751, %v3943
      %v3945 = vpop.f32.mrf.mxu0
      %v3946 = vadd.f32 %v3753, %v3945
      %3947 = vmatprep.mubr.bf16.mxu0 %v2272
      %3948 = vmatmul.mubr.bf16.gmra.mxu0 %v2271
      %v3949 = vpop.f32.mrf.mxu0
      %v3950 = vadd.f32 %v3757, %v3949
      %v3951 = vpop.f32.mrf.mxu0
      %v3952 = vadd.f32 %v3759, %v3951
      %v3953 = vpop.f32.mrf.mxu0
      %v3954 = vadd.f32 %v3761, %v3953
      %v3955 = vpop.f32.mrf.mxu0
      %v3956 = vadd.f32 %v3763, %v3955
      %3957 = vmatprep.mubr.bf16.mxu0 %v2281
      %3958 = vmatmul.mubr.bf16.gmra.mxu0 %v2280
      %v3959 = vpop.f32.mrf.mxu0
      %v3960 = vadd.f32 %v3767, %v3959
      %v3961 = vpop.f32.mrf.mxu0
      %v3962 = vadd.f32 %v3769, %v3961
      %v3963 = vpop.f32.mrf.mxu0
      %v3964 = vadd.f32 %v3771, %v3963
      %v3965 = vpop.f32.mrf.mxu0
      %v3966 = vadd.f32 %v3773, %v3965
      %3967 = vmatprep.mubr.bf16.mxu0 %v2290
      %3968 = vmatmul.mubr.bf16.gmra.mxu0 %v2289
      %v3969 = vpop.f32.mrf.mxu0
      %v3970 = vadd.f32 %v3777, %v3969
      %v3971 = vpop.f32.mrf.mxu0
      %v3972 = vadd.f32 %v3779, %v3971
      %v3973 = vpop.f32.mrf.mxu0
      %v3974 = vadd.f32 %v3781, %v3973
      %v3975 = vpop.f32.mrf.mxu0
      %v3976 = vadd.f32 %v3783, %v3975
      %3977 = vdwg.mxu0
      %3978 = vmatprep.subr.bf16.mxu0 %v3278
      %3979 = vmatpush1.bf16.msra.mxu0 %v3277
      %3980 = vmatprep.subr.bf16.mxu0 %v3275
      %3981 = vmatpush1.bf16.msra.mxu0 %v3274
      %3982 = vmatprep.subr.bf16.mxu0 %v3272
      %3983 = vmatpush1.bf16.msra.mxu0 %v3271
      %3984 = vmatprep.subr.bf16.mxu0 %v3269
      %3985 = vmatpush1.bf16.msra.mxu0 %v3268
      %3986 = vmatprep.subr.bf16.mxu0 %v3266
      %3987 = vmatpush1.bf16.msra.mxu0 %v3265
      %3988 = vmatprep.subr.bf16.mxu0 %v3263
      %3989 = vmatpush1.bf16.msra.mxu0 %v3262
      %3990 = vmatprep.subr.bf16.mxu0 %v3260
      %3991 = vmatpush1.bf16.msra.mxu0 %v3259
      %3992 = vmatprep.subr.bf16.mxu0 %v3257
      %3993 = vmatpush1.bf16.msra.mxu0 %v3256
      %3994 = vmatprep.subr.bf16.mxu0 %v3302
      %3995 = vmatpush2.bf16.msra.mxu0 %v3301
      %3996 = vmatprep.subr.bf16.mxu0 %v3299
      %3997 = vmatpush2.bf16.msra.mxu0 %v3298
      %3998 = vmatprep.subr.bf16.mxu0 %v3296
      %3999 = vmatpush2.bf16.msra.mxu0 %v3295
      %4000 = vmatprep.subr.bf16.mxu0 %v3293
      %4001 = vmatpush2.bf16.msra.mxu0 %v3292
      %4002 = vmatprep.subr.bf16.mxu0 %v3290
      %4003 = vmatpush2.bf16.msra.mxu0 %v3289
      %4004 = vmatprep.subr.bf16.mxu0 %v3287
      %4005 = vmatpush2.bf16.msra.mxu0 %v3286
      %4006 = vmatprep.subr.bf16.mxu0 %v3284
      %4007 = vmatpush2.bf16.msra.mxu0 %v3283
      %4008 = vmatprep.subr.bf16.mxu0 %v3281
      %4009 = vmatpush2.bf16.msra.mxu0 %v3280
      %4010 = vmatprep.mubr.bf16.mxu0 %v2157
      %4011 = vmatmul.mubr.bf16.gmra.mxu0 %v2156
      %v4012 = vpop.f32.mrf.mxu0
      %v4013 = vadd.f32 %v3820, %v4012
      %v4014 = vpop.f32.mrf.mxu0
      %v4015 = vadd.f32 %v3822, %v4014
      %v4016 = vpop.f32.mrf.mxu0
      %v4017 = vadd.f32 %v3824, %v4016
      %v4018 = vpop.f32.mrf.mxu0
      %v4019 = vadd.f32 %v3826, %v4018
      %4020 = vmatprep.mubr.bf16.mxu0 %v2166
      %4021 = vmatmul.mubr.bf16.gmra.mxu0 %v2165
      %v4022 = vpop.f32.mrf.mxu0
      %v4023 = vadd.f32 %v3830, %v4022
      %v4024 = vpop.f32.mrf.mxu0
      %v4025 = vadd.f32 %v3832, %v4024
      %v4026 = vpop.f32.mrf.mxu0
      %v4027 = vadd.f32 %v3834, %v4026
      %v4028 = vpop.f32.mrf.mxu0
      %v4029 = vadd.f32 %v3836, %v4028
      %4030 = vmatprep.mubr.bf16.mxu0 %v2175
      %4031 = vmatmul.mubr.bf16.gmra.mxu0 %v2174
      %v4032 = vpop.f32.mrf.mxu0
      %v4033 = vadd.f32 %v3840, %v4032
      %v4034 = vpop.f32.mrf.mxu0
      %v4035 = vadd.f32 %v3842, %v4034
      %v4036 = vpop.f32.mrf.mxu0
      %v4037 = vadd.f32 %v3844, %v4036
      %v4038 = vpop.f32.mrf.mxu0
      %v4039 = vadd.f32 %v3846, %v4038
      %4040 = vmatprep.mubr.bf16.mxu0 %v2184
      %4041 = vmatmul.mubr.bf16.gmra.mxu0 %v2183
      %v4042 = vpop.f32.mrf.mxu0
      %v4043 = vadd.f32 %v3850, %v4042
      %v4044 = vpop.f32.mrf.mxu0
      %v4045 = vadd.f32 %v3852, %v4044
      %v4046 = vpop.f32.mrf.mxu0
      %v4047 = vadd.f32 %v3854, %v4046
      %v4048 = vpop.f32.mrf.mxu0
      %v4049 = vadd.f32 %v3856, %v4048
      %4050 = vmatprep.mubr.bf16.mxu0 %v2193
      %4051 = vmatmul.mubr.bf16.gmra.mxu0 %v2192
      %v4052 = vpop.f32.mrf.mxu0
      %v4053 = vadd.f32 %v3860, %v4052
      %v4054 = vpop.f32.mrf.mxu0
      %v4055 = vadd.f32 %v3862, %v4054
      %v4056 = vpop.f32.mrf.mxu0
      %v4057 = vadd.f32 %v3864, %v4056
      %v4058 = vpop.f32.mrf.mxu0
      %v4059 = vadd.f32 %v3866, %v4058
      %4060 = vmatprep.mubr.bf16.mxu0 %v2202
      %4061 = vmatmul.mubr.bf16.gmra.mxu0 %v2201
      %v4062 = vpop.f32.mrf.mxu0
      %v4063 = vadd.f32 %v3870, %v4062
      %v4064 = vpop.f32.mrf.mxu0
      %v4065 = vadd.f32 %v3872, %v4064
      %v4066 = vpop.f32.mrf.mxu0
      %v4067 = vadd.f32 %v3874, %v4066
      %v4068 = vpop.f32.mrf.mxu0
      %v4069 = vadd.f32 %v3876, %v4068
      %4070 = vmatprep.mubr.bf16.mxu0 %v2211
      %4071 = vmatmul.mubr.bf16.gmra.mxu0 %v2210
      %v4072 = vpop.f32.mrf.mxu0
      %v4073 = vadd.f32 %v3880, %v4072
      %v4074 = vpop.f32.mrf.mxu0
      %v4075 = vadd.f32 %v3882, %v4074
      %v4076 = vpop.f32.mrf.mxu0
      %v4077 = vadd.f32 %v3884, %v4076
      %v4078 = vpop.f32.mrf.mxu0
      %v4079 = vadd.f32 %v3886, %v4078
      %4080 = vmatprep.mubr.bf16.mxu0 %v2220
      %4081 = vmatmul.mubr.bf16.gmra.mxu0 %v2219
      %v4082 = vpop.f32.mrf.mxu0
      %v4083 = vadd.f32 %v3890, %v4082
      %v4084 = vpop.f32.mrf.mxu0
      %v4085 = vadd.f32 %v3892, %v4084
      %v4086 = vpop.f32.mrf.mxu0
      %v4087 = vadd.f32 %v3894, %v4086
      %v4088 = vpop.f32.mrf.mxu0
      %v4089 = vadd.f32 %v3896, %v4088
      %4090 = vmatprep.mubr.bf16.mxu0 %v2229
      %4091 = vmatmul.mubr.bf16.gmra.mxu0 %v2228
      %v4092 = vpop.f32.mrf.mxu0
      %v4093 = vadd.f32 %v3900, %v4092
      %v4094 = vpop.f32.mrf.mxu0
      %v4095 = vadd.f32 %v3902, %v4094
      %v4096 = vpop.f32.mrf.mxu0
      %v4097 = vadd.f32 %v3904, %v4096
      %v4098 = vpop.f32.mrf.mxu0
      %v4099 = vadd.f32 %v3906, %v4098
      %4100 = vmatprep.mubr.bf16.mxu0 %v2238
      %4101 = vmatmul.mubr.bf16.gmra.mxu0 %v2237
      %v4102 = vpop.f32.mrf.mxu0
      %v4103 = vadd.f32 %v3910, %v4102
      %v4104 = vpop.f32.mrf.mxu0
      %v4105 = vadd.f32 %v3912, %v4104
      %v4106 = vpop.f32.mrf.mxu0
      %v4107 = vadd.f32 %v3914, %v4106
      %v4108 = vpop.f32.mrf.mxu0
      %v4109 = vadd.f32 %v3916, %v4108
      %4110 = vmatprep.mubr.bf16.mxu0 %v2247
      %4111 = vmatmul.mubr.bf16.gmra.mxu0 %v2246
      %v4112 = vpop.f32.mrf.mxu0
      %v4113 = vadd.f32 %v3920, %v4112
      %v4114 = vpop.f32.mrf.mxu0
      %v4115 = vadd.f32 %v3922, %v4114
      %v4116 = vpop.f32.mrf.mxu0
      %v4117 = vadd.f32 %v3924, %v4116
      %v4118 = vpop.f32.mrf.mxu0
      %v4119 = vadd.f32 %v3926, %v4118
      %4120 = vmatprep.mubr.bf16.mxu0 %v2256
      %4121 = vmatmul.mubr.bf16.gmra.mxu0 %v2255
      %v4122 = vpop.f32.mrf.mxu0
      %v4123 = vadd.f32 %v3930, %v4122
      %v4124 = vpop.f32.mrf.mxu0
      %v4125 = vadd.f32 %v3932, %v4124
      %v4126 = vpop.f32.mrf.mxu0
      %v4127 = vadd.f32 %v3934, %v4126
      %v4128 = vpop.f32.mrf.mxu0
      %v4129 = vadd.f32 %v3936, %v4128
      %4130 = vmatprep.mubr.bf16.mxu0 %v2265
      %4131 = vmatmul.mubr.bf16.gmra.mxu0 %v2264
      %v4132 = vpop.f32.mrf.mxu0
      %v4133 = vadd.f32 %v3940, %v4132
      %v4134 = vpop.f32.mrf.mxu0
      %v4135 = vadd.f32 %v3942, %v4134
      %v4136 = vpop.f32.mrf.mxu0
      %v4137 = vadd.f32 %v3944, %v4136
      %v4138 = vpop.f32.mrf.mxu0
      %v4139 = vadd.f32 %v3946, %v4138
      %4140 = vmatprep.mubr.bf16.mxu0 %v2274
      %4141 = vmatmul.mubr.bf16.gmra.mxu0 %v2273
      %v4142 = vpop.f32.mrf.mxu0
      %v4143 = vadd.f32 %v3950, %v4142
      %v4144 = vpop.f32.mrf.mxu0
      %v4145 = vadd.f32 %v3952, %v4144
      %v4146 = vpop.f32.mrf.mxu0
      %v4147 = vadd.f32 %v3954, %v4146
      %v4148 = vpop.f32.mrf.mxu0
      %v4149 = vadd.f32 %v3956, %v4148
      %4150 = vmatprep.mubr.bf16.mxu0 %v2283
      %4151 = vmatmul.mubr.bf16.gmra.mxu0 %v2282
      %v4152 = vpop.f32.mrf.mxu0
      %v4153 = vadd.f32 %v3960, %v4152
      %v4154 = vpop.f32.mrf.mxu0
      %v4155 = vadd.f32 %v3962, %v4154
      %v4156 = vpop.f32.mrf.mxu0
      %v4157 = vadd.f32 %v3964, %v4156
      %v4158 = vpop.f32.mrf.mxu0
      %v4159 = vadd.f32 %v3966, %v4158
      %4160 = vmatprep.mubr.bf16.mxu0 %v2292
      %4161 = vmatmul.mubr.bf16.gmra.mxu0 %v2291
      %v4162 = vpop.f32.mrf.mxu0
      %v4163 = vadd.f32 %v3970, %v4162
      %v4164 = vpop.f32.mrf.mxu0
      %v4165 = vadd.f32 %v3972, %v4164
      %v4166 = vpop.f32.mrf.mxu0
      %v4167 = vadd.f32 %v3974, %v4166
      %v4168 = vpop.f32.mrf.mxu0
      %v4169 = vadd.f32 %v3976, %v4168
      %4170 = vdwg.mxu0
      %4171 = vmatprep.subr.bf16.mxu0 %v3326
      %4172 = vmatpush1.bf16.msra.mxu0 %v3325
      %4173 = vmatprep.subr.bf16.mxu0 %v3323
      %4174 = vmatpush1.bf16.msra.mxu0 %v3322
      %4175 = vmatprep.subr.bf16.mxu0 %v3320
      %4176 = vmatpush1.bf16.msra.mxu0 %v3319
      %4177 = vmatprep.subr.bf16.mxu0 %v3317
      %4178 = vmatpush1.bf16.msra.mxu0 %v3316
      %4179 = vmatprep.subr.bf16.mxu0 %v3314
      %4180 = vmatpush1.bf16.msra.mxu0 %v3313
      %4181 = vmatprep.subr.bf16.mxu0 %v3311
      %4182 = vmatpush1.bf16.msra.mxu0 %v3310
      %4183 = vmatprep.subr.bf16.mxu0 %v3308
      %4184 = vmatpush1.bf16.msra.mxu0 %v3307
      %4185 = vmatprep.subr.bf16.mxu0 %v3305
      %4186 = vmatpush1.bf16.msra.mxu0 %v3304
      %4187 = vmatprep.subr.bf16.mxu0 %v3350
      %4188 = vmatpush2.bf16.msra.mxu0 %v3349
      %4189 = vmatprep.subr.bf16.mxu0 %v3347
      %4190 = vmatpush2.bf16.msra.mxu0 %v3346
      %4191 = vmatprep.subr.bf16.mxu0 %v3344
      %4192 = vmatpush2.bf16.msra.mxu0 %v3343
      %4193 = vmatprep.subr.bf16.mxu0 %v3341
      %4194 = vmatpush2.bf16.msra.mxu0 %v3340
      %4195 = vmatprep.subr.bf16.mxu0 %v3338
      %4196 = vmatpush2.bf16.msra.mxu0 %v3337
      %4197 = vmatprep.subr.bf16.mxu0 %v3335
      %4198 = vmatpush2.bf16.msra.mxu0 %v3334
      %4199 = vmatprep.subr.bf16.mxu0 %v3332
      %4200 = vmatpush2.bf16.msra.mxu0 %v3331
      %4201 = vmatprep.subr.bf16.mxu0 %v3329
      %4202 = vmatpush2.bf16.msra.mxu0 %v3328
      %4203 = vmatprep.mubr.bf16.mxu0 %v2159
      %4204 = vmatmul.mubr.bf16.gmra.mxu0 %v2158
      %v4205 = vpop.f32.mrf.mxu0
      %v4206 = vadd.f32 %v4013, %v4205
      %v4207 = vpop.f32.mrf.mxu0
      %v4208 = vadd.f32 %v4015, %v4207
      %v4209 = vpop.f32.mrf.mxu0
      %v4210 = vadd.f32 %v4017, %v4209
      %v4211 = vpop.f32.mrf.mxu0
      %v4212 = vadd.f32 %v4019, %v4211
      %4213 = vmatprep.mubr.bf16.mxu0 %v2168
      %4214 = vmatmul.mubr.bf16.gmra.mxu0 %v2167
      %v4215 = vpop.f32.mrf.mxu0
      %v4216 = vadd.f32 %v4023, %v4215
      %v4217 = vpop.f32.mrf.mxu0
      %v4218 = vadd.f32 %v4025, %v4217
      %v4219 = vpop.f32.mrf.mxu0
      %v4220 = vadd.f32 %v4027, %v4219
      %v4221 = vpop.f32.mrf.mxu0
      %v4222 = vadd.f32 %v4029, %v4221
      %4223 = vmatprep.mubr.bf16.mxu0 %v2177
      %4224 = vmatmul.mubr.bf16.gmra.mxu0 %v2176
      %v4225 = vpop.f32.mrf.mxu0
      %v4226 = vadd.f32 %v4033, %v4225
      %v4227 = vpop.f32.mrf.mxu0
      %v4228 = vadd.f32 %v4035, %v4227
      %v4229 = vpop.f32.mrf.mxu0
      %v4230 = vadd.f32 %v4037, %v4229
      %v4231 = vpop.f32.mrf.mxu0
      %v4232 = vadd.f32 %v4039, %v4231
      %4233 = vmatprep.mubr.bf16.mxu0 %v2186
      %4234 = vmatmul.mubr.bf16.gmra.mxu0 %v2185
      %v4235 = vpop.f32.mrf.mxu0
      %v4236 = vadd.f32 %v4043, %v4235
      %v4237 = vpop.f32.mrf.mxu0
      %v4238 = vadd.f32 %v4045, %v4237
      %v4239 = vpop.f32.mrf.mxu0
      %v4240 = vadd.f32 %v4047, %v4239
      %v4241 = vpop.f32.mrf.mxu0
      %v4242 = vadd.f32 %v4049, %v4241
      %4243 = vmatprep.mubr.bf16.mxu0 %v2195
      %4244 = vmatmul.mubr.bf16.gmra.mxu0 %v2194
      %v4245 = vpop.f32.mrf.mxu0
      %v4246 = vadd.f32 %v4053, %v4245
      %v4247 = vpop.f32.mrf.mxu0
      %v4248 = vadd.f32 %v4055, %v4247
      %v4249 = vpop.f32.mrf.mxu0
      %v4250 = vadd.f32 %v4057, %v4249
      %v4251 = vpop.f32.mrf.mxu0
      %v4252 = vadd.f32 %v4059, %v4251
      %4253 = vmatprep.mubr.bf16.mxu0 %v2204
      %4254 = vmatmul.mubr.bf16.gmra.mxu0 %v2203
      %v4255 = vpop.f32.mrf.mxu0
      %v4256 = vadd.f32 %v4063, %v4255
      %v4257 = vpop.f32.mrf.mxu0
      %v4258 = vadd.f32 %v4065, %v4257
      %v4259 = vpop.f32.mrf.mxu0
      %v4260 = vadd.f32 %v4067, %v4259
      %v4261 = vpop.f32.mrf.mxu0
      %v4262 = vadd.f32 %v4069, %v4261
      %4263 = vmatprep.mubr.bf16.mxu0 %v2213
      %4264 = vmatmul.mubr.bf16.gmra.mxu0 %v2212
      %v4265 = vpop.f32.mrf.mxu0
      %v4266 = vadd.f32 %v4073, %v4265
      %v4267 = vpop.f32.mrf.mxu0
      %v4268 = vadd.f32 %v4075, %v4267
      %v4269 = vpop.f32.mrf.mxu0
      %v4270 = vadd.f32 %v4077, %v4269
      %v4271 = vpop.f32.mrf.mxu0
      %v4272 = vadd.f32 %v4079, %v4271
      %4273 = vmatprep.mubr.bf16.mxu0 %v2222
      %4274 = vmatmul.mubr.bf16.gmra.mxu0 %v2221
      %v4275 = vpop.f32.mrf.mxu0
      %v4276 = vadd.f32 %v4083, %v4275
      %v4277 = vpop.f32.mrf.mxu0
      %v4278 = vadd.f32 %v4085, %v4277
      %v4279 = vpop.f32.mrf.mxu0
      %v4280 = vadd.f32 %v4087, %v4279
      %v4281 = vpop.f32.mrf.mxu0
      %v4282 = vadd.f32 %v4089, %v4281
      %4283 = vmatprep.mubr.bf16.mxu0 %v2231
      %4284 = vmatmul.mubr.bf16.gmra.mxu0 %v2230
      %v4285 = vpop.f32.mrf.mxu0
      %v4286 = vadd.f32 %v4093, %v4285
      %v4287 = vpop.f32.mrf.mxu0
      %v4288 = vadd.f32 %v4095, %v4287
      %v4289 = vpop.f32.mrf.mxu0
      %v4290 = vadd.f32 %v4097, %v4289
      %v4291 = vpop.f32.mrf.mxu0
      %v4292 = vadd.f32 %v4099, %v4291
      %4293 = vmatprep.mubr.bf16.mxu0 %v2240
      %4294 = vmatmul.mubr.bf16.gmra.mxu0 %v2239
      %v4295 = vpop.f32.mrf.mxu0
      %v4296 = vadd.f32 %v4103, %v4295
      %v4297 = vpop.f32.mrf.mxu0
      %v4298 = vadd.f32 %v4105, %v4297
      %v4299 = vpop.f32.mrf.mxu0
      %v4300 = vadd.f32 %v4107, %v4299
      %v4301 = vpop.f32.mrf.mxu0
      %v4302 = vadd.f32 %v4109, %v4301
      %4303 = vmatprep.mubr.bf16.mxu0 %v2249
      %4304 = vmatmul.mubr.bf16.gmra.mxu0 %v2248
      %v4305 = vpop.f32.mrf.mxu0
      %v4306 = vadd.f32 %v4113, %v4305
      %v4307 = vpop.f32.mrf.mxu0
      %v4308 = vadd.f32 %v4115, %v4307
      %v4309 = vpop.f32.mrf.mxu0
      %v4310 = vadd.f32 %v4117, %v4309
      %v4311 = vpop.f32.mrf.mxu0
      %v4312 = vadd.f32 %v4119, %v4311
      %4313 = vmatprep.mubr.bf16.mxu0 %v2258
      %4314 = vmatmul.mubr.bf16.gmra.mxu0 %v2257
      %v4315 = vpop.f32.mrf.mxu0
      %v4316 = vadd.f32 %v4123, %v4315
      %v4317 = vpop.f32.mrf.mxu0
      %v4318 = vadd.f32 %v4125, %v4317
      %v4319 = vpop.f32.mrf.mxu0
      %v4320 = vadd.f32 %v4127, %v4319
      %v4321 = vpop.f32.mrf.mxu0
      %v4322 = vadd.f32 %v4129, %v4321
      %4323 = vmatprep.mubr.bf16.mxu0 %v2267
      %4324 = vmatmul.mubr.bf16.gmra.mxu0 %v2266
      %v4325 = vpop.f32.mrf.mxu0
      %v4326 = vadd.f32 %v4133, %v4325
      %v4327 = vpop.f32.mrf.mxu0
      %v4328 = vadd.f32 %v4135, %v4327
      %v4329 = vpop.f32.mrf.mxu0
      %v4330 = vadd.f32 %v4137, %v4329
      %v4331 = vpop.f32.mrf.mxu0
      %v4332 = vadd.f32 %v4139, %v4331
      %4333 = vmatprep.mubr.bf16.mxu0 %v2276
      %4334 = vmatmul.mubr.bf16.gmra.mxu0 %v2275
      %v4335 = vpop.f32.mrf.mxu0
      %v4336 = vadd.f32 %v4143, %v4335
      %v4337 = vpop.f32.mrf.mxu0
      %v4338 = vadd.f32 %v4145, %v4337
      %v4339 = vpop.f32.mrf.mxu0
      %v4340 = vadd.f32 %v4147, %v4339
      %v4341 = vpop.f32.mrf.mxu0
      %v4342 = vadd.f32 %v4149, %v4341
      %4343 = vmatprep.mubr.bf16.mxu0 %v2285
      %4344 = vmatmul.mubr.bf16.gmra.mxu0 %v2284
      %v4345 = vpop.f32.mrf.mxu0
      %v4346 = vadd.f32 %v4153, %v4345
      %v4347 = vpop.f32.mrf.mxu0
      %v4348 = vadd.f32 %v4155, %v4347
      %v4349 = vpop.f32.mrf.mxu0
      %v4350 = vadd.f32 %v4157, %v4349
      %v4351 = vpop.f32.mrf.mxu0
      %v4352 = vadd.f32 %v4159, %v4351
      %4353 = vmatprep.mubr.bf16.mxu0 %v2294
      %4354 = vmatmul.mubr.bf16.gmra.mxu0 %v2293
      %v4355 = vpop.f32.mrf.mxu0
      %v4356 = vadd.f32 %v4163, %v4355
      %v4357 = vpop.f32.mrf.mxu0
      %v4358 = vadd.f32 %v4165, %v4357
      %v4359 = vpop.f32.mrf.mxu0
      %v4360 = vadd.f32 %v4167, %v4359
      %v4361 = vpop.f32.mrf.mxu0
      %v4362 = vadd.f32 %v4169, %v4361
      %4363 = vdwg.mxu0
      %4364 = vmatprep.subr.bf16.mxu0 %v3374
      %4365 = vmatpush1.bf16.msra.mxu0 %v3373
      %4366 = vmatprep.subr.bf16.mxu0 %v3371
      %4367 = vmatpush1.bf16.msra.mxu0 %v3370
      %4368 = vmatprep.subr.bf16.mxu0 %v3368
      %4369 = vmatpush1.bf16.msra.mxu0 %v3367
      %4370 = vmatprep.subr.bf16.mxu0 %v3365
      %4371 = vmatpush1.bf16.msra.mxu0 %v3364
      %4372 = vmatprep.subr.bf16.mxu0 %v3362
      %4373 = vmatpush1.bf16.msra.mxu0 %v3361
      %4374 = vmatprep.subr.bf16.mxu0 %v3359
      %4375 = vmatpush1.bf16.msra.mxu0 %v3358
      %4376 = vmatprep.subr.bf16.mxu0 %v3356
      %4377 = vmatpush1.bf16.msra.mxu0 %v3355
      %4378 = vmatprep.subr.bf16.mxu0 %v3353
      %4379 = vmatpush1.bf16.msra.mxu0 %v3352
      %4380 = vmatprep.subr.bf16.mxu0 0
      %4381 = vmatpush2.bf16.msra.mxu0 0
      %4382 = vmatprep.subr.bf16.mxu0 0
      %4383 = vmatpush2.bf16.msra.mxu0 0
      %4384 = vmatprep.subr.bf16.mxu0 0
      %4385 = vmatpush2.bf16.msra.mxu0 0
      %4386 = vmatprep.subr.bf16.mxu0 0
      %4387 = vmatpush2.bf16.msra.mxu0 0
      %4388 = vmatprep.subr.bf16.mxu0 0
      %4389 = vmatpush2.bf16.msra.mxu0 0
      %4390 = vmatprep.subr.bf16.mxu0 0
      %4391 = vmatpush2.bf16.msra.mxu0 0
      %4392 = vmatprep.subr.bf16.mxu0 0
      %4393 = vmatpush2.bf16.msra.mxu0 0
      %4394 = vmatprep.subr.bf16.mxu0 0
      %4395 = vmatpush2.bf16.msra.mxu0 0
      %4396 = vmatprep.mubr.bf16.mxu0 0
      %4397 = vmatmul.mubr.bf16.gmra.mxu0 %v2160
      %v4398 = vpop.f32.mrf.mxu0
      %v4399 = vadd.f32 %v4206, %v4398
      %v4400 = vpop.f32.mrf.mxu0
      %v4401 = vadd.f32 %v4208, %v4400
      %v4402 = vpop.f32.mrf.mxu0
      %v4403 = vadd.f32 %v4210, %v4402
      %v4404 = vpop.f32.mrf.mxu0
      %v4405 = vadd.f32 %v4212, %v4404
      %4406 = vmatprep.mubr.bf16.mxu0 0
      %4407 = vmatmul.mubr.bf16.gmra.mxu0 %v2169
      %v4408 = vpop.f32.mrf.mxu0
      %v4409 = vadd.f32 %v4216, %v4408
      %v4410 = vpop.f32.mrf.mxu0
      %v4411 = vadd.f32 %v4218, %v4410
      %v4412 = vpop.f32.mrf.mxu0
      %v4413 = vadd.f32 %v4220, %v4412
      %v4414 = vpop.f32.mrf.mxu0
      %v4415 = vadd.f32 %v4222, %v4414
      %4416 = vmatprep.mubr.bf16.mxu0 0
      %4417 = vmatmul.mubr.bf16.gmra.mxu0 %v2178
      %v4418 = vpop.f32.mrf.mxu0
      %v4419 = vadd.f32 %v4226, %v4418
      %v4420 = vpop.f32.mrf.mxu0
      %v4421 = vadd.f32 %v4228, %v4420
      %v4422 = vpop.f32.mrf.mxu0
      %v4423 = vadd.f32 %v4230, %v4422
      %v4424 = vpop.f32.mrf.mxu0
      %v4425 = vadd.f32 %v4232, %v4424
      %4426 = vmatprep.mubr.bf16.mxu0 0
      %4427 = vmatmul.mubr.bf16.gmra.mxu0 %v2187
      %v4428 = vpop.f32.mrf.mxu0
      %v4429 = vadd.f32 %v4236, %v4428
      %v4430 = vpop.f32.mrf.mxu0
      %v4431 = vadd.f32 %v4238, %v4430
      %v4432 = vpop.f32.mrf.mxu0
      %v4433 = vadd.f32 %v4240, %v4432
      %v4434 = vpop.f32.mrf.mxu0
      %v4435 = vadd.f32 %v4242, %v4434
      %4436 = vmatprep.mubr.bf16.mxu0 0
      %4437 = vmatmul.mubr.bf16.gmra.mxu0 %v2196
      %v4438 = vpop.f32.mrf.mxu0
      %v4439 = vadd.f32 %v4246, %v4438
      %v4440 = vpop.f32.mrf.mxu0
      %v4441 = vadd.f32 %v4248, %v4440
      %v4442 = vpop.f32.mrf.mxu0
      %v4443 = vadd.f32 %v4250, %v4442
      %v4444 = vpop.f32.mrf.mxu0
      %v4445 = vadd.f32 %v4252, %v4444
      %4446 = vmatprep.mubr.bf16.mxu0 0
      %4447 = vmatmul.mubr.bf16.gmra.mxu0 %v2205
      %v4448 = vpop.f32.mrf.mxu0
      %v4449 = vadd.f32 %v4256, %v4448
      %v4450 = vpop.f32.mrf.mxu0
      %v4451 = vadd.f32 %v4258, %v4450
      %v4452 = vpop.f32.mrf.mxu0
      %v4453 = vadd.f32 %v4260, %v4452
      %v4454 = vpop.f32.mrf.mxu0
      %v4455 = vadd.f32 %v4262, %v4454
      %4456 = vmatprep.mubr.bf16.mxu0 0
      %4457 = vmatmul.mubr.bf16.gmra.mxu0 %v2214
      %v4458 = vpop.f32.mrf.mxu0
      %v4459 = vadd.f32 %v4266, %v4458
      %v4460 = vpop.f32.mrf.mxu0
      %v4461 = vadd.f32 %v4268, %v4460
      %v4462 = vpop.f32.mrf.mxu0
      %v4463 = vadd.f32 %v4270, %v4462
      %v4464 = vpop.f32.mrf.mxu0
      %v4465 = vadd.f32 %v4272, %v4464
      %4466 = vmatprep.mubr.bf16.mxu0 0
      %4467 = vmatmul.mubr.bf16.gmra.mxu0 %v2223
      %v4468 = vpop.f32.mrf.mxu0
      %v4469 = vadd.f32 %v4276, %v4468
      %v4470 = vpop.f32.mrf.mxu0
      %v4471 = vadd.f32 %v4278, %v4470
      %v4472 = vpop.f32.mrf.mxu0
      %v4473 = vadd.f32 %v4280, %v4472
      %v4474 = vpop.f32.mrf.mxu0
      %v4475 = vadd.f32 %v4282, %v4474
      %4476 = vmatprep.mubr.bf16.mxu0 0
      %4477 = vmatmul.mubr.bf16.gmra.mxu0 %v2232
      %v4478 = vpop.f32.mrf.mxu0
      %v4479 = vadd.f32 %v4286, %v4478
      %v4480 = vpop.f32.mrf.mxu0
      %v4481 = vadd.f32 %v4288, %v4480
      %v4482 = vpop.f32.mrf.mxu0
      %v4483 = vadd.f32 %v4290, %v4482
      %v4484 = vpop.f32.mrf.mxu0
      %v4485 = vadd.f32 %v4292, %v4484
      %4486 = vmatprep.mubr.bf16.mxu0 0
      %4487 = vmatmul.mubr.bf16.gmra.mxu0 %v2241
      %v4488 = vpop.f32.mrf.mxu0
      %v4489 = vadd.f32 %v4296, %v4488
      %v4490 = vpop.f32.mrf.mxu0
      %v4491 = vadd.f32 %v4298, %v4490
      %v4492 = vpop.f32.mrf.mxu0
      %v4493 = vadd.f32 %v4300, %v4492
      %v4494 = vpop.f32.mrf.mxu0
      %v4495 = vadd.f32 %v4302, %v4494
      %4496 = vmatprep.mubr.bf16.mxu0 0
      %4497 = vmatmul.mubr.bf16.gmra.mxu0 %v2250
      %v4498 = vpop.f32.mrf.mxu0
      %v4499 = vadd.f32 %v4306, %v4498
      %v4500 = vpop.f32.mrf.mxu0
      %v4501 = vadd.f32 %v4308, %v4500
      %v4502 = vpop.f32.mrf.mxu0
      %v4503 = vadd.f32 %v4310, %v4502
      %v4504 = vpop.f32.mrf.mxu0
      %v4505 = vadd.f32 %v4312, %v4504
      %4506 = vmatprep.mubr.bf16.mxu0 0
      %4507 = vmatmul.mubr.bf16.gmra.mxu0 %v2259
      %v4508 = vpop.f32.mrf.mxu0
      %v4509 = vadd.f32 %v4316, %v4508
      %v4510 = vpop.f32.mrf.mxu0
      %v4511 = vadd.f32 %v4318, %v4510
      %v4512 = vpop.f32.mrf.mxu0
      %v4513 = vadd.f32 %v4320, %v4512
      %v4514 = vpop.f32.mrf.mxu0
      %v4515 = vadd.f32 %v4322, %v4514
      %4516 = vmatprep.mubr.bf16.mxu0 0
      %4517 = vmatmul.mubr.bf16.gmra.mxu0 %v2268
      %v4518 = vpop.f32.mrf.mxu0
      %v4519 = vadd.f32 %v4326, %v4518
      %v4520 = vpop.f32.mrf.mxu0
      %v4521 = vadd.f32 %v4328, %v4520
      %v4522 = vpop.f32.mrf.mxu0
      %v4523 = vadd.f32 %v4330, %v4522
      %v4524 = vpop.f32.mrf.mxu0
      %v4525 = vadd.f32 %v4332, %v4524
      %4526 = vmatprep.mubr.bf16.mxu0 0
      %4527 = vmatmul.mubr.bf16.gmra.mxu0 %v2277
      %v4528 = vpop.f32.mrf.mxu0
      %v4529 = vadd.f32 %v4336, %v4528
      %v4530 = vpop.f32.mrf.mxu0
      %v4531 = vadd.f32 %v4338, %v4530
      %v4532 = vpop.f32.mrf.mxu0
      %v4533 = vadd.f32 %v4340, %v4532
      %v4534 = vpop.f32.mrf.mxu0
      %v4535 = vadd.f32 %v4342, %v4534
      %4536 = vmatprep.mubr.bf16.mxu0 0
      %4537 = vmatmul.mubr.bf16.gmra.mxu0 %v2286
      %v4538 = vpop.f32.mrf.mxu0
      %v4539 = vadd.f32 %v4346, %v4538
      %v4540 = vpop.f32.mrf.mxu0
      %v4541 = vadd.f32 %v4348, %v4540
      %v4542 = vpop.f32.mrf.mxu0
      %v4543 = vadd.f32 %v4350, %v4542
      %v4544 = vpop.f32.mrf.mxu0
      %v4545 = vadd.f32 %v4352, %v4544
      %4546 = vmatprep.mubr.bf16.mxu0 0
      %4547 = vmatmul.mubr.bf16.gmra.mxu0 %v2295
      %v4548 = vpop.f32.mrf.mxu0
      %v4549 = vadd.f32 %v4356, %v4548
      %v4550 = vpop.f32.mrf.mxu0
      %v4551 = vadd.f32 %v4358, %v4550
      %v4552 = vpop.f32.mrf.mxu0
      %v4553 = vadd.f32 %v4360, %v4552
      %v4554 = vpop.f32.mrf.mxu0
      %v4555 = vadd.f32 %v4362, %v4554
      %4556 = vdwg.mxu0
      %4557 = vmatprep.subr.bf16.mxu0 0
      %4558 = vmatpush1.bf16.msra.mxu0 %v3183
      %4559 = vmatprep.subr.bf16.mxu0 0
      %4560 = vmatpush1.bf16.msra.mxu0 %v3180
      %4561 = vmatprep.subr.bf16.mxu0 0
      %4562 = vmatpush1.bf16.msra.mxu0 %v3177
      %4563 = vmatprep.subr.bf16.mxu0 0
      %4564 = vmatpush1.bf16.msra.mxu0 %v3174
      %4565 = vmatprep.subr.bf16.mxu0 0
      %4566 = vmatpush1.bf16.msra.mxu0 %v3171
      %4567 = vmatprep.subr.bf16.mxu0 0
      %4568 = vmatpush1.bf16.msra.mxu0 %v3168
      %4569 = vmatprep.subr.bf16.mxu0 0
      %4570 = vmatpush1.bf16.msra.mxu0 %v3165
      %4571 = vmatprep.subr.bf16.mxu0 0
      %4572 = vmatpush1.bf16.msra.mxu0 %v3162
      %4573 = vmatprep.subr.bf16.mxu0 0
      %4574 = vmatpush2.bf16.msra.mxu0 %v3207
      %4575 = vmatprep.subr.bf16.mxu0 0
      %4576 = vmatpush2.bf16.msra.mxu0 %v3204
      %4577 = vmatprep.subr.bf16.mxu0 0
      %4578 = vmatpush2.bf16.msra.mxu0 %v3201
      %4579 = vmatprep.subr.bf16.mxu0 0
      %4580 = vmatpush2.bf16.msra.mxu0 %v3198
      %4581 = vmatprep.subr.bf16.mxu0 0
      %4582 = vmatpush2.bf16.msra.mxu0 %v3195
      %4583 = vmatprep.subr.bf16.mxu0 0
      %4584 = vmatpush2.bf16.msra.mxu0 %v3192
      %4585 = vmatprep.subr.bf16.mxu0 0
      %4586 = vmatpush2.bf16.msra.mxu0 %v3189
      %4587 = vmatprep.subr.bf16.mxu0 0
      %4588 = vmatpush2.bf16.msra.mxu0 %v3186
      %4589 = vmatprep.mubr.bf16.mxu0 %v2153
      %4590 = vmatmul.mubr.bf16.gmra.mxu0 %v2152
      %v4591 = vpop.f32.mrf.mxu0
      %v4592 = vadd.f32 0.0, %v4591
      %v4593 = vpop.f32.mrf.mxu0
      %v4594 = vpop.f32.mrf.mxu0
      %v4595 = vadd.f32 0.0, %v4594
      %v4596 = vpop.f32.mrf.mxu0
      %4597 = vmatprep.mubr.bf16.mxu0 %v2162
      %4598 = vmatmul.mubr.bf16.gmra.mxu0 %v2161
      %v4599 = vpop.f32.mrf.mxu0
      %v4600 = vadd.f32 0.0, %v4599
      %v4601 = vpop.f32.mrf.mxu0
      %v4602 = vpop.f32.mrf.mxu0
      %v4603 = vadd.f32 0.0, %v4602
      %v4604 = vpop.f32.mrf.mxu0
      %4605 = vmatprep.mubr.bf16.mxu0 %v2171
      %4606 = vmatmul.mubr.bf16.gmra.mxu0 %v2170
      %v4607 = vpop.f32.mrf.mxu0
      %v4608 = vadd.f32 0.0, %v4607
      %v4609 = vpop.f32.mrf.mxu0
      %v4610 = vpop.f32.mrf.mxu0
      %v4611 = vadd.f32 0.0, %v4610
      %v4612 = vpop.f32.mrf.mxu0
      %4613 = vmatprep.mubr.bf16.mxu0 %v2180
      %4614 = vmatmul.mubr.bf16.gmra.mxu0 %v2179
      %v4615 = vpop.f32.mrf.mxu0
      %v4616 = vadd.f32 0.0, %v4615
      %v4617 = vpop.f32.mrf.mxu0
      %v4618 = vpop.f32.mrf.mxu0
      %v4619 = vadd.f32 0.0, %v4618
      %v4620 = vpop.f32.mrf.mxu0
      %4621 = vmatprep.mubr.bf16.mxu0 %v2189
      %4622 = vmatmul.mubr.bf16.gmra.mxu0 %v2188
      %v4623 = vpop.f32.mrf.mxu0
      %v4624 = vadd.f32 0.0, %v4623
      %v4625 = vpop.f32.mrf.mxu0
      %v4626 = vpop.f32.mrf.mxu0
      %v4627 = vadd.f32 0.0, %v4626
      %v4628 = vpop.f32.mrf.mxu0
      %4629 = vmatprep.mubr.bf16.mxu0 %v2198
      %4630 = vmatmul.mubr.bf16.gmra.mxu0 %v2197
      %v4631 = vpop.f32.mrf.mxu0
      %v4632 = vadd.f32 0.0, %v4631
      %v4633 = vpop.f32.mrf.mxu0
      %v4634 = vpop.f32.mrf.mxu0
      %v4635 = vadd.f32 0.0, %v4634
      %v4636 = vpop.f32.mrf.mxu0
      %4637 = vmatprep.mubr.bf16.mxu0 %v2207
      %4638 = vmatmul.mubr.bf16.gmra.mxu0 %v2206
      %v4639 = vpop.f32.mrf.mxu0
      %v4640 = vadd.f32 0.0, %v4639
      %v4641 = vpop.f32.mrf.mxu0
      %v4642 = vpop.f32.mrf.mxu0
      %v4643 = vadd.f32 0.0, %v4642
      %v4644 = vpop.f32.mrf.mxu0
      %4645 = vmatprep.mubr.bf16.mxu0 %v2216
      %4646 = vmatmul.mubr.bf16.gmra.mxu0 %v2215
      %v4647 = vpop.f32.mrf.mxu0
      %v4648 = vadd.f32 0.0, %v4647
      %v4649 = vpop.f32.mrf.mxu0
      %v4650 = vpop.f32.mrf.mxu0
      %v4651 = vadd.f32 0.0, %v4650
      %v4652 = vpop.f32.mrf.mxu0
      %4653 = vmatprep.mubr.bf16.mxu0 %v2225
      %4654 = vmatmul.mubr.bf16.gmra.mxu0 %v2224
      %v4655 = vpop.f32.mrf.mxu0
      %v4656 = vadd.f32 0.0, %v4655
      %v4657 = vpop.f32.mrf.mxu0
      %v4658 = vpop.f32.mrf.mxu0
      %v4659 = vadd.f32 0.0, %v4658
      %v4660 = vpop.f32.mrf.mxu0
      %4661 = vmatprep.mubr.bf16.mxu0 %v2234
      %4662 = vmatmul.mubr.bf16.gmra.mxu0 %v2233
      %v4663 = vpop.f32.mrf.mxu0
      %v4664 = vadd.f32 0.0, %v4663
      %v4665 = vpop.f32.mrf.mxu0
      %v4666 = vpop.f32.mrf.mxu0
      %v4667 = vadd.f32 0.0, %v4666
      %v4668 = vpop.f32.mrf.mxu0
      %4669 = vmatprep.mubr.bf16.mxu0 %v2243
      %4670 = vmatmul.mubr.bf16.gmra.mxu0 %v2242
      %v4671 = vpop.f32.mrf.mxu0
      %v4672 = vadd.f32 0.0, %v4671
      %v4673 = vpop.f32.mrf.mxu0
      %v4674 = vpop.f32.mrf.mxu0
      %v4675 = vadd.f32 0.0, %v4674
      %v4676 = vpop.f32.mrf.mxu0
      %4677 = vmatprep.mubr.bf16.mxu0 %v2252
      %4678 = vmatmul.mubr.bf16.gmra.mxu0 %v2251
      %v4679 = vpop.f32.mrf.mxu0
      %v4680 = vadd.f32 0.0, %v4679
      %v4681 = vpop.f32.mrf.mxu0
      %v4682 = vpop.f32.mrf.mxu0
      %v4683 = vadd.f32 0.0, %v4682
      %v4684 = vpop.f32.mrf.mxu0
      %4685 = vmatprep.mubr.bf16.mxu0 %v2261
      %4686 = vmatmul.mubr.bf16.gmra.mxu0 %v2260
      %v4687 = vpop.f32.mrf.mxu0
      %v4688 = vadd.f32 0.0, %v4687
      %v4689 = vpop.f32.mrf.mxu0
      %v4690 = vpop.f32.mrf.mxu0
      %v4691 = vadd.f32 0.0, %v4690
      %v4692 = vpop.f32.mrf.mxu0
      %4693 = vmatprep.mubr.bf16.mxu0 %v2270
      %4694 = vmatmul.mubr.bf16.gmra.mxu0 %v2269
      %v4695 = vpop.f32.mrf.mxu0
      %v4696 = vadd.f32 0.0, %v4695
      %v4697 = vpop.f32.mrf.mxu0
      %v4698 = vpop.f32.mrf.mxu0
      %v4699 = vadd.f32 0.0, %v4698
      %v4700 = vpop.f32.mrf.mxu0
      %4701 = vmatprep.mubr.bf16.mxu0 %v2279
      %4702 = vmatmul.mubr.bf16.gmra.mxu0 %v2278
      %v4703 = vpop.f32.mrf.mxu0
      %v4704 = vadd.f32 0.0, %v4703
      %v4705 = vpop.f32.mrf.mxu0
      %v4706 = vpop.f32.mrf.mxu0
      %v4707 = vadd.f32 0.0, %v4706
      %v4708 = vpop.f32.mrf.mxu0
      %4709 = vmatprep.mubr.bf16.mxu0 %v2288
      %4710 = vmatmul.mubr.bf16.gmra.mxu0 %v2287
      %v4711 = vpop.f32.mrf.mxu0
      %v4712 = vadd.f32 0.0, %v4711
      %v4713 = vpop.f32.mrf.mxu0
      %v4714 = vpop.f32.mrf.mxu0
      %v4715 = vadd.f32 0.0, %v4714
      %v4716 = vpop.f32.mrf.mxu0
      %4717 = vdwg.mxu0
      %4718 = vmatprep.subr.bf16.mxu0 0
      %4719 = vmatpush1.bf16.msra.mxu0 %v3231
      %4720 = vmatprep.subr.bf16.mxu0 0
      %4721 = vmatpush1.bf16.msra.mxu0 %v3228
      %4722 = vmatprep.subr.bf16.mxu0 0
      %4723 = vmatpush1.bf16.msra.mxu0 %v3225
      %4724 = vmatprep.subr.bf16.mxu0 0
      %4725 = vmatpush1.bf16.msra.mxu0 %v3222
      %4726 = vmatprep.subr.bf16.mxu0 0
      %4727 = vmatpush1.bf16.msra.mxu0 %v3219
      %4728 = vmatprep.subr.bf16.mxu0 0
      %4729 = vmatpush1.bf16.msra.mxu0 %v3216
      %4730 = vmatprep.subr.bf16.mxu0 0
      %4731 = vmatpush1.bf16.msra.mxu0 %v3213
      %4732 = vmatprep.subr.bf16.mxu0 0
      %4733 = vmatpush1.bf16.msra.mxu0 %v3210
      %4734 = vmatprep.subr.bf16.mxu0 0
      %4735 = vmatpush2.bf16.msra.mxu0 %v3255
      %4736 = vmatprep.subr.bf16.mxu0 0
      %4737 = vmatpush2.bf16.msra.mxu0 %v3252
      %4738 = vmatprep.subr.bf16.mxu0 0
      %4739 = vmatpush2.bf16.msra.mxu0 %v3249
      %4740 = vmatprep.subr.bf16.mxu0 0
      %4741 = vmatpush2.bf16.msra.mxu0 %v3246
      %4742 = vmatprep.subr.bf16.mxu0 0
      %4743 = vmatpush2.bf16.msra.mxu0 %v3243
      %4744 = vmatprep.subr.bf16.mxu0 0
      %4745 = vmatpush2.bf16.msra.mxu0 %v3240
      %4746 = vmatprep.subr.bf16.mxu0 0
      %4747 = vmatpush2.bf16.msra.mxu0 %v3237
      %4748 = vmatprep.subr.bf16.mxu0 0
      %4749 = vmatpush2.bf16.msra.mxu0 %v3234
      %4750 = vmatprep.mubr.bf16.mxu0 %v2155
      %4751 = vmatmul.mubr.bf16.gmra.mxu0 %v2154
      %v4752 = vpop.f32.mrf.mxu0
      %v4753 = vadd.f32 %v4592, %v4752
      %v4754 = vpop.f32.mrf.mxu0
      %v4755 = vpop.f32.mrf.mxu0
      %v4756 = vadd.f32 %v4595, %v4755
      %v4757 = vpop.f32.mrf.mxu0
      %4758 = vmatprep.mubr.bf16.mxu0 %v2164
      %4759 = vmatmul.mubr.bf16.gmra.mxu0 %v2163
      %v4760 = vpop.f32.mrf.mxu0
      %v4761 = vadd.f32 %v4600, %v4760
      %v4762 = vpop.f32.mrf.mxu0
      %v4763 = vpop.f32.mrf.mxu0
      %v4764 = vadd.f32 %v4603, %v4763
      %v4765 = vpop.f32.mrf.mxu0
      %4766 = vmatprep.mubr.bf16.mxu0 %v2173
      %4767 = vmatmul.mubr.bf16.gmra.mxu0 %v2172
      %v4768 = vpop.f32.mrf.mxu0
      %v4769 = vadd.f32 %v4608, %v4768
      %v4770 = vpop.f32.mrf.mxu0
      %v4771 = vpop.f32.mrf.mxu0
      %v4772 = vadd.f32 %v4611, %v4771
      %v4773 = vpop.f32.mrf.mxu0
      %4774 = vmatprep.mubr.bf16.mxu0 %v2182
      %4775 = vmatmul.mubr.bf16.gmra.mxu0 %v2181
      %v4776 = vpop.f32.mrf.mxu0
      %v4777 = vadd.f32 %v4616, %v4776
      %v4778 = vpop.f32.mrf.mxu0
      %v4779 = vpop.f32.mrf.mxu0
      %v4780 = vadd.f32 %v4619, %v4779
      %v4781 = vpop.f32.mrf.mxu0
      %4782 = vmatprep.mubr.bf16.mxu0 %v2191
      %4783 = vmatmul.mubr.bf16.gmra.mxu0 %v2190
      %v4784 = vpop.f32.mrf.mxu0
      %v4785 = vadd.f32 %v4624, %v4784
      %v4786 = vpop.f32.mrf.mxu0
      %v4787 = vpop.f32.mrf.mxu0
      %v4788 = vadd.f32 %v4627, %v4787
      %v4789 = vpop.f32.mrf.mxu0
      %4790 = vmatprep.mubr.bf16.mxu0 %v2200
      %4791 = vmatmul.mubr.bf16.gmra.mxu0 %v2199
      %v4792 = vpop.f32.mrf.mxu0
      %v4793 = vadd.f32 %v4632, %v4792
      %v4794 = vpop.f32.mrf.mxu0
      %v4795 = vpop.f32.mrf.mxu0
      %v4796 = vadd.f32 %v4635, %v4795
      %v4797 = vpop.f32.mrf.mxu0
      %4798 = vmatprep.mubr.bf16.mxu0 %v2209
      %4799 = vmatmul.mubr.bf16.gmra.mxu0 %v2208
      %v4800 = vpop.f32.mrf.mxu0
      %v4801 = vadd.f32 %v4640, %v4800
      %v4802 = vpop.f32.mrf.mxu0
      %v4803 = vpop.f32.mrf.mxu0
      %v4804 = vadd.f32 %v4643, %v4803
      %v4805 = vpop.f32.mrf.mxu0
      %4806 = vmatprep.mubr.bf16.mxu0 %v2218
      %4807 = vmatmul.mubr.bf16.gmra.mxu0 %v2217
      %v4808 = vpop.f32.mrf.mxu0
      %v4809 = vadd.f32 %v4648, %v4808
      %v4810 = vpop.f32.mrf.mxu0
      %v4811 = vpop.f32.mrf.mxu0
      %v4812 = vadd.f32 %v4651, %v4811
      %v4813 = vpop.f32.mrf.mxu0
      %4814 = vmatprep.mubr.bf16.mxu0 %v2227
      %4815 = vmatmul.mubr.bf16.gmra.mxu0 %v2226
      %v4816 = vpop.f32.mrf.mxu0
      %v4817 = vadd.f32 %v4656, %v4816
      %v4818 = vpop.f32.mrf.mxu0
      %v4819 = vpop.f32.mrf.mxu0
      %v4820 = vadd.f32 %v4659, %v4819
      %v4821 = vpop.f32.mrf.mxu0
      %4822 = vmatprep.mubr.bf16.mxu0 %v2236
      %4823 = vmatmul.mubr.bf16.gmra.mxu0 %v2235
      %v4824 = vpop.f32.mrf.mxu0
      %v4825 = vadd.f32 %v4664, %v4824
      %v4826 = vpop.f32.mrf.mxu0
      %v4827 = vpop.f32.mrf.mxu0
      %v4828 = vadd.f32 %v4667, %v4827
      %v4829 = vpop.f32.mrf.mxu0
      %4830 = vmatprep.mubr.bf16.mxu0 %v2245
      %4831 = vmatmul.mubr.bf16.gmra.mxu0 %v2244
      %v4832 = vpop.f32.mrf.mxu0
      %v4833 = vadd.f32 %v4672, %v4832
      %v4834 = vpop.f32.mrf.mxu0
      %v4835 = vpop.f32.mrf.mxu0
      %v4836 = vadd.f32 %v4675, %v4835
      %v4837 = vpop.f32.mrf.mxu0
      %4838 = vmatprep.mubr.bf16.mxu0 %v2254
      %4839 = vmatmul.mubr.bf16.gmra.mxu0 %v2253
      %v4840 = vpop.f32.mrf.mxu0
      %v4841 = vadd.f32 %v4680, %v4840
      %v4842 = vpop.f32.mrf.mxu0
      %v4843 = vpop.f32.mrf.mxu0
      %v4844 = vadd.f32 %v4683, %v4843
      %v4845 = vpop.f32.mrf.mxu0
      %4846 = vmatprep.mubr.bf16.mxu0 %v2263
      %4847 = vmatmul.mubr.bf16.gmra.mxu0 %v2262
      %v4848 = vpop.f32.mrf.mxu0
      %v4849 = vadd.f32 %v4688, %v4848
      %v4850 = vpop.f32.mrf.mxu0
      %v4851 = vpop.f32.mrf.mxu0
      %v4852 = vadd.f32 %v4691, %v4851
      %v4853 = vpop.f32.mrf.mxu0
      %4854 = vmatprep.mubr.bf16.mxu0 %v2272
      %4855 = vmatmul.mubr.bf16.gmra.mxu0 %v2271
      %v4856 = vpop.f32.mrf.mxu0
      %v4857 = vadd.f32 %v4696, %v4856
      %v4858 = vpop.f32.mrf.mxu0
      %v4859 = vpop.f32.mrf.mxu0
      %v4860 = vadd.f32 %v4699, %v4859
      %v4861 = vpop.f32.mrf.mxu0
      %4862 = vmatprep.mubr.bf16.mxu0 %v2281
      %4863 = vmatmul.mubr.bf16.gmra.mxu0 %v2280
      %v4864 = vpop.f32.mrf.mxu0
      %v4865 = vadd.f32 %v4704, %v4864
      %v4866 = vpop.f32.mrf.mxu0
      %v4867 = vpop.f32.mrf.mxu0
      %v4868 = vadd.f32 %v4707, %v4867
      %v4869 = vpop.f32.mrf.mxu0
      %4870 = vmatprep.mubr.bf16.mxu0 %v2290
      %4871 = vmatmul.mubr.bf16.gmra.mxu0 %v2289
      %v4872 = vpop.f32.mrf.mxu0
      %v4873 = vadd.f32 %v4712, %v4872
      %v4874 = vpop.f32.mrf.mxu0
      %v4875 = vpop.f32.mrf.mxu0
      %v4876 = vadd.f32 %v4715, %v4875
      %v4877 = vpop.f32.mrf.mxu0
      %4878 = vdwg.mxu0
      %4879 = vmatprep.subr.bf16.mxu0 0
      %4880 = vmatpush1.bf16.msra.mxu0 %v3279
      %4881 = vmatprep.subr.bf16.mxu0 0
      %4882 = vmatpush1.bf16.msra.mxu0 %v3276
      %4883 = vmatprep.subr.bf16.mxu0 0
      %4884 = vmatpush1.bf16.msra.mxu0 %v3273
      %4885 = vmatprep.subr.bf16.mxu0 0
      %4886 = vmatpush1.bf16.msra.mxu0 %v3270
      %4887 = vmatprep.subr.bf16.mxu0 0
      %4888 = vmatpush1.bf16.msra.mxu0 %v3267
      %4889 = vmatprep.subr.bf16.mxu0 0
      %4890 = vmatpush1.bf16.msra.mxu0 %v3264
      %4891 = vmatprep.subr.bf16.mxu0 0
      %4892 = vmatpush1.bf16.msra.mxu0 %v3261
      %4893 = vmatprep.subr.bf16.mxu0 0
      %4894 = vmatpush1.bf16.msra.mxu0 %v3258
      %4895 = vmatprep.subr.bf16.mxu0 0
      %4896 = vmatpush2.bf16.msra.mxu0 %v3303
      %4897 = vmatprep.subr.bf16.mxu0 0
      %4898 = vmatpush2.bf16.msra.mxu0 %v3300
      %4899 = vmatprep.subr.bf16.mxu0 0
      %4900 = vmatpush2.bf16.msra.mxu0 %v3297
      %4901 = vmatprep.subr.bf16.mxu0 0
      %4902 = vmatpush2.bf16.msra.mxu0 %v3294
      %4903 = vmatprep.subr.bf16.mxu0 0
      %4904 = vmatpush2.bf16.msra.mxu0 %v3291
      %4905 = vmatprep.subr.bf16.mxu0 0
      %4906 = vmatpush2.bf16.msra.mxu0 %v3288
      %4907 = vmatprep.subr.bf16.mxu0 0
      %4908 = vmatpush2.bf16.msra.mxu0 %v3285
      %4909 = vmatprep.subr.bf16.mxu0 0
      %4910 = vmatpush2.bf16.msra.mxu0 %v3282
      %4911 = vmatprep.mubr.bf16.mxu0 %v2157
      %4912 = vmatmul.mubr.bf16.gmra.mxu0 %v2156
      %v4913 = vpop.f32.mrf.mxu0
      %v4914 = vadd.f32 %v4753, %v4913
      %v4915 = vpop.f32.mrf.mxu0
      %v4916 = vpop.f32.mrf.mxu0
      %v4917 = vadd.f32 %v4756, %v4916
      %v4918 = vpop.f32.mrf.mxu0
      %4919 = vmatprep.mubr.bf16.mxu0 %v2166
      %4920 = vmatmul.mubr.bf16.gmra.mxu0 %v2165
      %v4921 = vpop.f32.mrf.mxu0
      %v4922 = vadd.f32 %v4761, %v4921
      %v4923 = vpop.f32.mrf.mxu0
      %v4924 = vpop.f32.mrf.mxu0
      %v4925 = vadd.f32 %v4764, %v4924
      %v4926 = vpop.f32.mrf.mxu0
      %4927 = vmatprep.mubr.bf16.mxu0 %v2175
      %4928 = vmatmul.mubr.bf16.gmra.mxu0 %v2174
      %v4929 = vpop.f32.mrf.mxu0
      %v4930 = vadd.f32 %v4769, %v4929
      %v4931 = vpop.f32.mrf.mxu0
      %v4932 = vpop.f32.mrf.mxu0
      %v4933 = vadd.f32 %v4772, %v4932
      %v4934 = vpop.f32.mrf.mxu0
      %4935 = vmatprep.mubr.bf16.mxu0 %v2184
      %4936 = vmatmul.mubr.bf16.gmra.mxu0 %v2183
      %v4937 = vpop.f32.mrf.mxu0
      %v4938 = vadd.f32 %v4777, %v4937
      %v4939 = vpop.f32.mrf.mxu0
      %v4940 = vpop.f32.mrf.mxu0
      %v4941 = vadd.f32 %v4780, %v4940
      %v4942 = vpop.f32.mrf.mxu0
      %4943 = vmatprep.mubr.bf16.mxu0 %v2193
      %4944 = vmatmul.mubr.bf16.gmra.mxu0 %v2192
      %v4945 = vpop.f32.mrf.mxu0
      %v4946 = vadd.f32 %v4785, %v4945
      %v4947 = vpop.f32.mrf.mxu0
      %v4948 = vpop.f32.mrf.mxu0
      %v4949 = vadd.f32 %v4788, %v4948
      %v4950 = vpop.f32.mrf.mxu0
      %4951 = vmatprep.mubr.bf16.mxu0 %v2202
      %4952 = vmatmul.mubr.bf16.gmra.mxu0 %v2201
      %v4953 = vpop.f32.mrf.mxu0
      %v4954 = vadd.f32 %v4793, %v4953
      %v4955 = vpop.f32.mrf.mxu0
      %v4956 = vpop.f32.mrf.mxu0
      %v4957 = vadd.f32 %v4796, %v4956
      %v4958 = vpop.f32.mrf.mxu0
      %4959 = vmatprep.mubr.bf16.mxu0 %v2211
      %4960 = vmatmul.mubr.bf16.gmra.mxu0 %v2210
      %v4961 = vpop.f32.mrf.mxu0
      %v4962 = vadd.f32 %v4801, %v4961
      %v4963 = vpop.f32.mrf.mxu0
      %v4964 = vpop.f32.mrf.mxu0
      %v4965 = vadd.f32 %v4804, %v4964
      %v4966 = vpop.f32.mrf.mxu0
      %4967 = vmatprep.mubr.bf16.mxu0 %v2220
      %4968 = vmatmul.mubr.bf16.gmra.mxu0 %v2219
      %v4969 = vpop.f32.mrf.mxu0
      %v4970 = vadd.f32 %v4809, %v4969
      %v4971 = vpop.f32.mrf.mxu0
      %v4972 = vpop.f32.mrf.mxu0
      %v4973 = vadd.f32 %v4812, %v4972
      %v4974 = vpop.f32.mrf.mxu0
      %4975 = vmatprep.mubr.bf16.mxu0 %v2229
      %4976 = vmatmul.mubr.bf16.gmra.mxu0 %v2228
      %v4977 = vpop.f32.mrf.mxu0
      %v4978 = vadd.f32 %v4817, %v4977
      %v4979 = vpop.f32.mrf.mxu0
      %v4980 = vpop.f32.mrf.mxu0
      %v4981 = vadd.f32 %v4820, %v4980
      %v4982 = vpop.f32.mrf.mxu0
      %4983 = vmatprep.mubr.bf16.mxu0 %v2238
      %4984 = vmatmul.mubr.bf16.gmra.mxu0 %v2237
      %v4985 = vpop.f32.mrf.mxu0
      %v4986 = vadd.f32 %v4825, %v4985
      %v4987 = vpop.f32.mrf.mxu0
      %v4988 = vpop.f32.mrf.mxu0
      %v4989 = vadd.f32 %v4828, %v4988
      %v4990 = vpop.f32.mrf.mxu0
      %4991 = vmatprep.mubr.bf16.mxu0 %v2247
      %4992 = vmatmul.mubr.bf16.gmra.mxu0 %v2246
      %v4993 = vpop.f32.mrf.mxu0
      %v4994 = vadd.f32 %v4833, %v4993
      %v4995 = vpop.f32.mrf.mxu0
      %v4996 = vpop.f32.mrf.mxu0
      %v4997 = vadd.f32 %v4836, %v4996
      %v4998 = vpop.f32.mrf.mxu0
      %4999 = vmatprep.mubr.bf16.mxu0 %v2256
      %5000 = vmatmul.mubr.bf16.gmra.mxu0 %v2255
      %v5001 = vpop.f32.mrf.mxu0
      %v5002 = vadd.f32 %v4841, %v5001
      %v5003 = vpop.f32.mrf.mxu0
      %v5004 = vpop.f32.mrf.mxu0
      %v5005 = vadd.f32 %v4844, %v5004
      %v5006 = vpop.f32.mrf.mxu0
      %5007 = vmatprep.mubr.bf16.mxu0 %v2265
      %5008 = vmatmul.mubr.bf16.gmra.mxu0 %v2264
      %v5009 = vpop.f32.mrf.mxu0
      %v5010 = vadd.f32 %v4849, %v5009
      %v5011 = vpop.f32.mrf.mxu0
      %v5012 = vpop.f32.mrf.mxu0
      %v5013 = vadd.f32 %v4852, %v5012
      %v5014 = vpop.f32.mrf.mxu0
      %5015 = vmatprep.mubr.bf16.mxu0 %v2274
      %5016 = vmatmul.mubr.bf16.gmra.mxu0 %v2273
      %v5017 = vpop.f32.mrf.mxu0
      %v5018 = vadd.f32 %v4857, %v5017
      %v5019 = vpop.f32.mrf.mxu0
      %v5020 = vpop.f32.mrf.mxu0
      %v5021 = vadd.f32 %v4860, %v5020
      %v5022 = vpop.f32.mrf.mxu0
      %5023 = vmatprep.mubr.bf16.mxu0 %v2283
      %5024 = vmatmul.mubr.bf16.gmra.mxu0 %v2282
      %v5025 = vpop.f32.mrf.mxu0
      %v5026 = vadd.f32 %v4865, %v5025
      %v5027 = vpop.f32.mrf.mxu0
      %v5028 = vpop.f32.mrf.mxu0
      %v5029 = vadd.f32 %v4868, %v5028
      %v5030 = vpop.f32.mrf.mxu0
      %5031 = vmatprep.mubr.bf16.mxu0 %v2292
      %5032 = vmatmul.mubr.bf16.gmra.mxu0 %v2291
      %v5033 = vpop.f32.mrf.mxu0
      %v5034 = vadd.f32 %v4873, %v5033
      %v5035 = vpop.f32.mrf.mxu0
      %v5036 = vpop.f32.mrf.mxu0
      %v5037 = vadd.f32 %v4876, %v5036
      %v5038 = vpop.f32.mrf.mxu0
      %5039 = vdwg.mxu0
      %5040 = vmatprep.subr.bf16.mxu0 0
      %5041 = vmatpush1.bf16.msra.mxu0 %v3327
      %5042 = vmatprep.subr.bf16.mxu0 0
      %5043 = vmatpush1.bf16.msra.mxu0 %v3324
      %5044 = vmatprep.subr.bf16.mxu0 0
      %5045 = vmatpush1.bf16.msra.mxu0 %v3321
      %5046 = vmatprep.subr.bf16.mxu0 0
      %5047 = vmatpush1.bf16.msra.mxu0 %v3318
      %5048 = vmatprep.subr.bf16.mxu0 0
      %5049 = vmatpush1.bf16.msra.mxu0 %v3315
      %5050 = vmatprep.subr.bf16.mxu0 0
      %5051 = vmatpush1.bf16.msra.mxu0 %v3312
      %5052 = vmatprep.subr.bf16.mxu0 0
      %5053 = vmatpush1.bf16.msra.mxu0 %v3309
      %5054 = vmatprep.subr.bf16.mxu0 0
      %5055 = vmatpush1.bf16.msra.mxu0 %v3306
      %5056 = vmatprep.subr.bf16.mxu0 0
      %5057 = vmatpush2.bf16.msra.mxu0 %v3351
      %5058 = vmatprep.subr.bf16.mxu0 0
      %5059 = vmatpush2.bf16.msra.mxu0 %v3348
      %5060 = vmatprep.subr.bf16.mxu0 0
      %5061 = vmatpush2.bf16.msra.mxu0 %v3345
      %5062 = vmatprep.subr.bf16.mxu0 0
      %5063 = vmatpush2.bf16.msra.mxu0 %v3342
      %5064 = vmatprep.subr.bf16.mxu0 0
      %5065 = vmatpush2.bf16.msra.mxu0 %v3339
      %5066 = vmatprep.subr.bf16.mxu0 0
      %5067 = vmatpush2.bf16.msra.mxu0 %v3336
      %5068 = vmatprep.subr.bf16.mxu0 0
      %5069 = vmatpush2.bf16.msra.mxu0 %v3333
      %5070 = vmatprep.subr.bf16.mxu0 0
      %5071 = vmatpush2.bf16.msra.mxu0 %v3330
      %5072 = vmatprep.mubr.bf16.mxu0 %v2159
      %5073 = vmatmul.mubr.bf16.gmra.mxu0 %v2158
      %v5074 = vpop.f32.mrf.mxu0
      %v5075 = vadd.f32 %v4914, %v5074
      %v5076 = vpop.f32.mrf.mxu0
      %v5077 = vpop.f32.mrf.mxu0
      %v5078 = vadd.f32 %v4917, %v5077
      %v5079 = vpop.f32.mrf.mxu0
      %5080 = vmatprep.mubr.bf16.mxu0 %v2168
      %5081 = vmatmul.mubr.bf16.gmra.mxu0 %v2167
      %v5082 = vpop.f32.mrf.mxu0
      %v5083 = vadd.f32 %v4922, %v5082
      %v5084 = vpop.f32.mrf.mxu0
      %v5085 = vpop.f32.mrf.mxu0
      %v5086 = vadd.f32 %v4925, %v5085
      %v5087 = vpop.f32.mrf.mxu0
      %5088 = vmatprep.mubr.bf16.mxu0 %v2177
      %5089 = vmatmul.mubr.bf16.gmra.mxu0 %v2176
      %v5090 = vpop.f32.mrf.mxu0
      %v5091 = vadd.f32 %v4930, %v5090
      %v5092 = vpop.f32.mrf.mxu0
      %v5093 = vpop.f32.mrf.mxu0
      %v5094 = vadd.f32 %v4933, %v5093
      %v5095 = vpop.f32.mrf.mxu0
      %5096 = vmatprep.mubr.bf16.mxu0 %v2186
      %5097 = vmatmul.mubr.bf16.gmra.mxu0 %v2185
      %v5098 = vpop.f32.mrf.mxu0
      %v5099 = vadd.f32 %v4938, %v5098
      %v5100 = vpop.f32.mrf.mxu0
      %v5101 = vpop.f32.mrf.mxu0
      %v5102 = vadd.f32 %v4941, %v5101
      %v5103 = vpop.f32.mrf.mxu0
      %5104 = vmatprep.mubr.bf16.mxu0 %v2195
      %5105 = vmatmul.mubr.bf16.gmra.mxu0 %v2194
      %v5106 = vpop.f32.mrf.mxu0
      %v5107 = vadd.f32 %v4946, %v5106
      %v5108 = vpop.f32.mrf.mxu0
      %v5109 = vpop.f32.mrf.mxu0
      %v5110 = vadd.f32 %v4949, %v5109
      %v5111 = vpop.f32.mrf.mxu0
      %5112 = vmatprep.mubr.bf16.mxu0 %v2204
      %5113 = vmatmul.mubr.bf16.gmra.mxu0 %v2203
      %v5114 = vpop.f32.mrf.mxu0
      %v5115 = vadd.f32 %v4954, %v5114
      %v5116 = vpop.f32.mrf.mxu0
      %v5117 = vpop.f32.mrf.mxu0
      %v5118 = vadd.f32 %v4957, %v5117
      %v5119 = vpop.f32.mrf.mxu0
      %5120 = vmatprep.mubr.bf16.mxu0 %v2213
      %5121 = vmatmul.mubr.bf16.gmra.mxu0 %v2212
      %v5122 = vpop.f32.mrf.mxu0
      %v5123 = vadd.f32 %v4962, %v5122
      %v5124 = vpop.f32.mrf.mxu0
      %v5125 = vpop.f32.mrf.mxu0
      %v5126 = vadd.f32 %v4965, %v5125
      %v5127 = vpop.f32.mrf.mxu0
      %5128 = vmatprep.mubr.bf16.mxu0 %v2222
      %5129 = vmatmul.mubr.bf16.gmra.mxu0 %v2221
      %v5130 = vpop.f32.mrf.mxu0
      %v5131 = vadd.f32 %v4970, %v5130
      %v5132 = vpop.f32.mrf.mxu0
      %v5133 = vpop.f32.mrf.mxu0
      %v5134 = vadd.f32 %v4973, %v5133
      %v5135 = vpop.f32.mrf.mxu0
      %5136 = vmatprep.mubr.bf16.mxu0 %v2231
      %5137 = vmatmul.mubr.bf16.gmra.mxu0 %v2230
      %v5138 = vpop.f32.mrf.mxu0
      %v5139 = vadd.f32 %v4978, %v5138
      %v5140 = vpop.f32.mrf.mxu0
      %v5141 = vpop.f32.mrf.mxu0
      %v5142 = vadd.f32 %v4981, %v5141
      %v5143 = vpop.f32.mrf.mxu0
      %5144 = vmatprep.mubr.bf16.mxu0 %v2240
      %5145 = vmatmul.mubr.bf16.gmra.mxu0 %v2239
      %v5146 = vpop.f32.mrf.mxu0
      %v5147 = vadd.f32 %v4986, %v5146
      %v5148 = vpop.f32.mrf.mxu0
      %v5149 = vpop.f32.mrf.mxu0
      %v5150 = vadd.f32 %v4989, %v5149
      %v5151 = vpop.f32.mrf.mxu0
      %5152 = vmatprep.mubr.bf16.mxu0 %v2249
      %5153 = vmatmul.mubr.bf16.gmra.mxu0 %v2248
      %v5154 = vpop.f32.mrf.mxu0
      %v5155 = vadd.f32 %v4994, %v5154
      %v5156 = vpop.f32.mrf.mxu0
      %v5157 = vpop.f32.mrf.mxu0
      %v5158 = vadd.f32 %v4997, %v5157
      %v5159 = vpop.f32.mrf.mxu0
      %5160 = vmatprep.mubr.bf16.mxu0 %v2258
      %5161 = vmatmul.mubr.bf16.gmra.mxu0 %v2257
      %v5162 = vpop.f32.mrf.mxu0
      %v5163 = vadd.f32 %v5002, %v5162
      %v5164 = vpop.f32.mrf.mxu0
      %v5165 = vpop.f32.mrf.mxu0
      %v5166 = vadd.f32 %v5005, %v5165
      %v5167 = vpop.f32.mrf.mxu0
      %5168 = vmatprep.mubr.bf16.mxu0 %v2267
      %5169 = vmatmul.mubr.bf16.gmra.mxu0 %v2266
      %v5170 = vpop.f32.mrf.mxu0
      %v5171 = vadd.f32 %v5010, %v5170
      %v5172 = vpop.f32.mrf.mxu0
      %v5173 = vpop.f32.mrf.mxu0
      %v5174 = vadd.f32 %v5013, %v5173
      %v5175 = vpop.f32.mrf.mxu0
      %5176 = vmatprep.mubr.bf16.mxu0 %v2276
      %5177 = vmatmul.mubr.bf16.gmra.mxu0 %v2275
      %v5178 = vpop.f32.mrf.mxu0
      %v5179 = vadd.f32 %v5018, %v5178
      %v5180 = vpop.f32.mrf.mxu0
      %v5181 = vpop.f32.mrf.mxu0
      %v5182 = vadd.f32 %v5021, %v5181
      %v5183 = vpop.f32.mrf.mxu0
      %5184 = vmatprep.mubr.bf16.mxu0 %v2285
      %5185 = vmatmul.mubr.bf16.gmra.mxu0 %v2284
      %v5186 = vpop.f32.mrf.mxu0
      %v5187 = vadd.f32 %v5026, %v5186
      %v5188 = vpop.f32.mrf.mxu0
      %v5189 = vpop.f32.mrf.mxu0
      %v5190 = vadd.f32 %v5029, %v5189
      %v5191 = vpop.f32.mrf.mxu0
      %5192 = vmatprep.mubr.bf16.mxu0 %v2294
      %5193 = vmatmul.mubr.bf16.gmra.mxu0 %v2293
      %v5194 = vpop.f32.mrf.mxu0
      %v5195 = vadd.f32 %v5034, %v5194
      %v5196 = vpop.f32.mrf.mxu0
      %v5197 = vpop.f32.mrf.mxu0
      %v5198 = vadd.f32 %v5037, %v5197
      %v5199 = vpop.f32.mrf.mxu0
      %5200 = vdwg.mxu0
      %5201 = vmatprep.subr.bf16.mxu0 0
      %5202 = vmatpush1.bf16.msra.mxu0 %v3375
      %5203 = vmatprep.subr.bf16.mxu0 0
      %5204 = vmatpush1.bf16.msra.mxu0 %v3372
      %5205 = vmatprep.subr.bf16.mxu0 0
      %5206 = vmatpush1.bf16.msra.mxu0 %v3369
      %5207 = vmatprep.subr.bf16.mxu0 0
      %5208 = vmatpush1.bf16.msra.mxu0 %v3366
      %5209 = vmatprep.subr.bf16.mxu0 0
      %5210 = vmatpush1.bf16.msra.mxu0 %v3363
      %5211 = vmatprep.subr.bf16.mxu0 0
      %5212 = vmatpush1.bf16.msra.mxu0 %v3360
      %5213 = vmatprep.subr.bf16.mxu0 0
      %5214 = vmatpush1.bf16.msra.mxu0 %v3357
      %5215 = vmatprep.subr.bf16.mxu0 0
      %5216 = vmatpush1.bf16.msra.mxu0 %v3354
      %5217 = vmatprep.subr.bf16.mxu0 0
      %5218 = vmatpush2.bf16.msra.mxu0 0
      %5219 = vmatprep.subr.bf16.mxu0 0
      %5220 = vmatpush2.bf16.msra.mxu0 0
      %5221 = vmatprep.subr.bf16.mxu0 0
      %5222 = vmatpush2.bf16.msra.mxu0 0
      %5223 = vmatprep.subr.bf16.mxu0 0
      %5224 = vmatpush2.bf16.msra.mxu0 0
      %5225 = vmatprep.subr.bf16.mxu0 0
      %5226 = vmatpush2.bf16.msra.mxu0 0
      %5227 = vmatprep.subr.bf16.mxu0 0
      %5228 = vmatpush2.bf16.msra.mxu0 0
      %5229 = vmatprep.subr.bf16.mxu0 0
      %5230 = vmatpush2.bf16.msra.mxu0 0
      %5231 = vmatprep.subr.bf16.mxu0 0
      %5232 = vmatpush2.bf16.msra.mxu0 0
      %5233 = vmatprep.mubr.bf16.mxu0 0
      %5234 = vmatmul.mubr.bf16.gmra.mxu0 %v2160
      %v5235 = vpop.f32.mrf.mxu0
      %v5236 = vadd.f32 %v5075, %v5235
      %v5237 = vpop.f32.mrf.mxu0
      %v5238 = vpop.f32.mrf.mxu0
      %v5239 = vadd.f32 %v5078, %v5238
      %v5240 = vpop.f32.mrf.mxu0
      %5241 = vmatprep.mubr.bf16.mxu0 0
      %5242 = vmatmul.mubr.bf16.gmra.mxu0 %v2169
      %v5243 = vpop.f32.mrf.mxu0
      %v5244 = vadd.f32 %v5083, %v5243
      %v5245 = vpop.f32.mrf.mxu0
      %v5246 = vpop.f32.mrf.mxu0
      %v5247 = vadd.f32 %v5086, %v5246
      %v5248 = vpop.f32.mrf.mxu0
      %5249 = vmatprep.mubr.bf16.mxu0 0
      %5250 = vmatmul.mubr.bf16.gmra.mxu0 %v2178
      %v5251 = vpop.f32.mrf.mxu0
      %v5252 = vadd.f32 %v5091, %v5251
      %v5253 = vpop.f32.mrf.mxu0
      %v5254 = vpop.f32.mrf.mxu0
      %v5255 = vadd.f32 %v5094, %v5254
      %v5256 = vpop.f32.mrf.mxu0
      %5257 = vmatprep.mubr.bf16.mxu0 0
      %5258 = vmatmul.mubr.bf16.gmra.mxu0 %v2187
      %v5259 = vpop.f32.mrf.mxu0
      %v5260 = vadd.f32 %v5099, %v5259
      %v5261 = vpop.f32.mrf.mxu0
      %v5262 = vpop.f32.mrf.mxu0
      %v5263 = vadd.f32 %v5102, %v5262
      %v5264 = vpop.f32.mrf.mxu0
      %5265 = vmatprep.mubr.bf16.mxu0 0
      %5266 = vmatmul.mubr.bf16.gmra.mxu0 %v2196
      %v5267 = vpop.f32.mrf.mxu0
      %v5268 = vadd.f32 %v5107, %v5267
      %v5269 = vpop.f32.mrf.mxu0
      %v5270 = vpop.f32.mrf.mxu0
      %v5271 = vadd.f32 %v5110, %v5270
      %v5272 = vpop.f32.mrf.mxu0
      %5273 = vmatprep.mubr.bf16.mxu0 0
      %5274 = vmatmul.mubr.bf16.gmra.mxu0 %v2205
      %v5275 = vpop.f32.mrf.mxu0
      %v5276 = vadd.f32 %v5115, %v5275
      %v5277 = vpop.f32.mrf.mxu0
      %v5278 = vpop.f32.mrf.mxu0
      %v5279 = vadd.f32 %v5118, %v5278
      %v5280 = vpop.f32.mrf.mxu0
      %5281 = vmatprep.mubr.bf16.mxu0 0
      %5282 = vmatmul.mubr.bf16.gmra.mxu0 %v2214
      %v5283 = vpop.f32.mrf.mxu0
      %v5284 = vadd.f32 %v5123, %v5283
      %v5285 = vpop.f32.mrf.mxu0
      %v5286 = vpop.f32.mrf.mxu0
      %v5287 = vadd.f32 %v5126, %v5286
      %v5288 = vpop.f32.mrf.mxu0
      %5289 = vmatprep.mubr.bf16.mxu0 0
      %5290 = vmatmul.mubr.bf16.gmra.mxu0 %v2223
      %v5291 = vpop.f32.mrf.mxu0
      %v5292 = vadd.f32 %v5131, %v5291
      %v5293 = vpop.f32.mrf.mxu0
      %v5294 = vpop.f32.mrf.mxu0
      %v5295 = vadd.f32 %v5134, %v5294
      %v5296 = vpop.f32.mrf.mxu0
      %5297 = vmatprep.mubr.bf16.mxu0 0
      %5298 = vmatmul.mubr.bf16.gmra.mxu0 %v2232
      %v5299 = vpop.f32.mrf.mxu0
      %v5300 = vadd.f32 %v5139, %v5299
      %v5301 = vpop.f32.mrf.mxu0
      %v5302 = vpop.f32.mrf.mxu0
      %v5303 = vadd.f32 %v5142, %v5302
      %v5304 = vpop.f32.mrf.mxu0
      %5305 = vmatprep.mubr.bf16.mxu0 0
      %5306 = vmatmul.mubr.bf16.gmra.mxu0 %v2241
      %v5307 = vpop.f32.mrf.mxu0
      %v5308 = vadd.f32 %v5147, %v5307
      %v5309 = vpop.f32.mrf.mxu0
      %v5310 = vpop.f32.mrf.mxu0
      %v5311 = vadd.f32 %v5150, %v5310
      %v5312 = vpop.f32.mrf.mxu0
      %5313 = vmatprep.mubr.bf16.mxu0 0
      %5314 = vmatmul.mubr.bf16.gmra.mxu0 %v2250
      %v5315 = vpop.f32.mrf.mxu0
      %v5316 = vadd.f32 %v5155, %v5315
      %v5317 = vpop.f32.mrf.mxu0
      %v5318 = vpop.f32.mrf.mxu0
      %v5319 = vadd.f32 %v5158, %v5318
      %v5320 = vpop.f32.mrf.mxu0
      %5321 = vmatprep.mubr.bf16.mxu0 0
      %5322 = vmatmul.mubr.bf16.gmra.mxu0 %v2259
      %v5323 = vpop.f32.mrf.mxu0
      %v5324 = vadd.f32 %v5163, %v5323
      %v5325 = vpop.f32.mrf.mxu0
      %v5326 = vpop.f32.mrf.mxu0
      %v5327 = vadd.f32 %v5166, %v5326
      %v5328 = vpop.f32.mrf.mxu0
      %5329 = vmatprep.mubr.bf16.mxu0 0
      %5330 = vmatmul.mubr.bf16.gmra.mxu0 %v2268
      %v5331 = vpop.f32.mrf.mxu0
      %v5332 = vadd.f32 %v5171, %v5331
      %v5333 = vpop.f32.mrf.mxu0
      %v5334 = vpop.f32.mrf.mxu0
      %v5335 = vadd.f32 %v5174, %v5334
      %v5336 = vpop.f32.mrf.mxu0
      %5337 = vmatprep.mubr.bf16.mxu0 0
      %5338 = vmatmul.mubr.bf16.gmra.mxu0 %v2277
      %v5339 = vpop.f32.mrf.mxu0
      %v5340 = vadd.f32 %v5179, %v5339
      %v5341 = vpop.f32.mrf.mxu0
      %v5342 = vpop.f32.mrf.mxu0
      %v5343 = vadd.f32 %v5182, %v5342
      %v5344 = vpop.f32.mrf.mxu0
      %5345 = vmatprep.mubr.bf16.mxu0 0
      %5346 = vmatmul.mubr.bf16.gmra.mxu0 %v2286
      %v5347 = vpop.f32.mrf.mxu0
      %v5348 = vadd.f32 %v5187, %v5347
      %v5349 = vpop.f32.mrf.mxu0
      %v5350 = vpop.f32.mrf.mxu0
      %v5351 = vadd.f32 %v5190, %v5350
      %v5352 = vpop.f32.mrf.mxu0
      %5353 = vmatprep.mubr.bf16.mxu0 0
      %5354 = vmatmul.mubr.bf16.gmra.mxu0 %v2295
      %v5355 = vpop.f32.mrf.mxu0
      %v5356 = vadd.f32 %v5195, %v5355
      %v5357 = vpop.f32.mrf.mxu0
      %v5358 = vpop.f32.mrf.mxu0
      %v5359 = vadd.f32 %v5198, %v5358
      %v5360 = vpop.f32.mrf.mxu0
      %5361 = vdwg.mxu0
      %v5362 = vld [vmem:[%s224] sm:$0xff]
      %v5363 = vld [vmem:[%s224 + $0x8] sm:$0xf]
      %v5364 = vld [vmem:[%s224 + $0xc] sm:$0xff]
      %v5365 = vld [vmem:[%s224 + $0x14] sm:$0xf]
      %v5366 = vld [vmem:[%s224 + $0x18] sm:$0xff]
      %v5367 = vld [vmem:[%s224 + $0x20] sm:$0xf]
      %v5368 = vld [vmem:[%s224 + $0x24] sm:$0xff]
      %v5369 = vld [vmem:[%s224 + $0x2c] sm:$0xf]
      %v5370 = vld [vmem:[%s224 + $0x30] sm:$0xff]
      %v5371 = vld [vmem:[%s224 + $0x38] sm:$0xf]
      %v5372 = vld [vmem:[%s224 + $0x3c] sm:$0xff]
      %v5373 = vld [vmem:[%s224 + $0x44] sm:$0xf]
      %v5374 = vld [vmem:[%s224 + $0x48] sm:$0xff]
      %v5375 = vld [vmem:[%s224 + $0x50] sm:$0xf]
      %v5376 = vld [vmem:[%s224 + $0x54] sm:$0xff]
      %v5377 = vld [vmem:[%s224 + $0x5c] sm:$0xf]
      %v5378 = vld [vmem:[%s224 + $0x60] sm:$0xff]
      %v5379 = vld [vmem:[%s224 + $0x68] sm:$0xf]
      %v5380 = vld [vmem:[%s224 + $0x6c] sm:$0xff]
      %v5381 = vld [vmem:[%s224 + $0x74] sm:$0xf]
      %v5382 = vld [vmem:[%s224 + $0x78] sm:$0xff]
      %v5383 = vld [vmem:[%s224 + $0x80] sm:$0xf]
      %v5384 = vld [vmem:[%s224 + $0x84] sm:$0xff]
      %v5385 = vld [vmem:[%s224 + $0x8c] sm:$0xf]
      %v5386 = vld [vmem:[%s224 + $0x90] sm:$0xff]
      %v5387 = vld [vmem:[%s224 + $0x98] sm:$0xf]
      %v5388 = vld [vmem:[%s224 + $0x9c] sm:$0xff]
      %v5389 = vld [vmem:[%s224 + $0xa4] sm:$0xf]
      %v5390 = vld [vmem:[%s224 + $0xa8] sm:$0xff]
      %v5391 = vld [vmem:[%s224 + $0xb0] sm:$0xf]
      %v5392 = vld [vmem:[%s224 + $0xb4] sm:$0xff]
      %v5393 = vld [vmem:[%s224 + $0xbc] sm:$0xf]
      %v5394 = vld [vmem:[%s224 + $0xc0] sm:$0xff]
      %v5395 = vld [vmem:[%s224 + $0xc8] sm:$0xf]
      %v5396 = vld [vmem:[%s224 + $0xcc] sm:$0xff]
      %v5397 = vld [vmem:[%s224 + $0xd4] sm:$0xf]
      %v5398 = vld [vmem:[%s224 + $0xd8] sm:$0xff]
      %v5399 = vld [vmem:[%s224 + $0xe0] sm:$0xf]
      %v5400 = vld [vmem:[%s224 + $0xe4] sm:$0xff]
      %v5401 = vld [vmem:[%s224 + $0xec] sm:$0xf]
      %v5402 = vld [vmem:[%s224 + $0xf0] sm:$0xff]
      %v5403 = vld [vmem:[%s224 + $0xf8] sm:$0xf]
      %v5404 = vld [vmem:[%s224 + $0xfc] sm:$0xff]
      %v5405 = vld [vmem:[%s224 + $0x104] sm:$0xf]
      %v5406 = vld [vmem:[%s224 + $0x108] sm:$0xff]
      %v5407 = vld [vmem:[%s224 + $0x110] sm:$0xf]
      %v5408 = vld [vmem:[%s224 + $0x114] sm:$0xff]
      %v5409 = vld [vmem:[%s224 + $0x11c] sm:$0xf]
      %v5410 = vld [vmem:[%s224 + $0x120] sm:$0xff]
      %v5411 = vld [vmem:[%s224 + $0x128] sm:$0xf]
      %v5412 = vld [vmem:[%s224 + $0x12c] sm:$0xff]
      %v5413 = vld [vmem:[%s224 + $0x134] sm:$0xf]
      %v5414 = vld [vmem:[%s224 + $0x138] sm:$0xff]
      %v5415 = vld [vmem:[%s224 + $0x140] sm:$0xf]
      %v5416 = vld [vmem:[%s224 + $0x144] sm:$0xff]
      %v5417 = vld [vmem:[%s224 + $0x14c] sm:$0xf]
      %v5418 = vld [vmem:[%s224 + $0x150] sm:$0xff]
      %v5419 = vld [vmem:[%s224 + $0x158] sm:$0xf]
      %v5420 = vld [vmem:[%s224 + $0x15c] sm:$0xff]
      %v5421 = vld [vmem:[%s224 + $0x164] sm:$0xf]
      %v5422 = vld [vmem:[%s224 + $0x168] sm:$0xff]
      %v5423 = vld [vmem:[%s224 + $0x170] sm:$0xf]
      %v5424 = vld [vmem:[%s224 + $0x174] sm:$0xff]
      %v5425 = vld [vmem:[%s224 + $0x17c] sm:$0xf]
      %v5426 = vunpack.c.l.bf16 %v5362
      %v5427 = vunpack.c.h.bf16 %v5362
      %v5428 = vunpack.c.l.bf16 %v5363
      %v5429 = vunpack.c.l.bf16 %v5364
      %v5430 = vunpack.c.h.bf16 %v5364
      %v5431 = vunpack.c.l.bf16 %v5365
      %v5432 = vunpack.c.l.bf16 %v5366
      %v5433 = vunpack.c.h.bf16 %v5366
      %v5434 = vunpack.c.l.bf16 %v5367
      %v5435 = vunpack.c.l.bf16 %v5368
      %v5436 = vunpack.c.h.bf16 %v5368
      %v5437 = vunpack.c.l.bf16 %v5369
      %v5438 = vunpack.c.l.bf16 %v5370
      %v5439 = vunpack.c.h.bf16 %v5370
      %v5440 = vunpack.c.l.bf16 %v5371
      %v5441 = vunpack.c.l.bf16 %v5372
      %v5442 = vunpack.c.h.bf16 %v5372
      %v5443 = vunpack.c.l.bf16 %v5373
      %v5444 = vunpack.c.l.bf16 %v5374
      %v5445 = vunpack.c.h.bf16 %v5374
      %v5446 = vunpack.c.l.bf16 %v5375
      %v5447 = vunpack.c.l.bf16 %v5376
      %v5448 = vunpack.c.h.bf16 %v5376
      %v5449 = vunpack.c.l.bf16 %v5377
      %v5450 = vunpack.c.l.bf16 %v5378
      %v5451 = vunpack.c.h.bf16 %v5378
      %v5452 = vunpack.c.l.bf16 %v5379
      %v5453 = vunpack.c.l.bf16 %v5380
      %v5454 = vunpack.c.h.bf16 %v5380
      %v5455 = vunpack.c.l.bf16 %v5381
      %v5456 = vunpack.c.l.bf16 %v5382
      %v5457 = vunpack.c.h.bf16 %v5382
      %v5458 = vunpack.c.l.bf16 %v5383
      %v5459 = vunpack.c.l.bf16 %v5384
      %v5460 = vunpack.c.h.bf16 %v5384
      %v5461 = vunpack.c.l.bf16 %v5385
      %v5462 = vunpack.c.l.bf16 %v5386
      %v5463 = vunpack.c.h.bf16 %v5386
      %v5464 = vunpack.c.l.bf16 %v5387
      %v5465 = vunpack.c.l.bf16 %v5388
      %v5466 = vunpack.c.h.bf16 %v5388
      %v5467 = vunpack.c.l.bf16 %v5389
      %v5468 = vunpack.c.l.bf16 %v5390
      %v5469 = vunpack.c.h.bf16 %v5390
      %v5470 = vunpack.c.l.bf16 %v5391
      %v5471 = vunpack.c.l.bf16 %v5392
      %v5472 = vunpack.c.h.bf16 %v5392
      %v5473 = vunpack.c.l.bf16 %v5393
      %v5474 = vunpack.c.l.bf16 %v5394
      %v5475 = vunpack.c.h.bf16 %v5394
      %v5476 = vunpack.c.l.bf16 %v5395
      %v5477 = vunpack.c.l.bf16 %v5396
      %v5478 = vunpack.c.h.bf16 %v5396
      %v5479 = vunpack.c.l.bf16 %v5397
      %v5480 = vunpack.c.l.bf16 %v5398
      %v5481 = vunpack.c.h.bf16 %v5398
      %v5482 = vunpack.c.l.bf16 %v5399
      %v5483 = vunpack.c.l.bf16 %v5400
      %v5484 = vunpack.c.h.bf16 %v5400
      %v5485 = vunpack.c.l.bf16 %v5401
      %v5486 = vunpack.c.l.bf16 %v5402
      %v5487 = vunpack.c.h.bf16 %v5402
      %v5488 = vunpack.c.l.bf16 %v5403
      %v5489 = vunpack.c.l.bf16 %v5404
      %v5490 = vunpack.c.h.bf16 %v5404
      %v5491 = vunpack.c.l.bf16 %v5405
      %v5492 = vunpack.c.l.bf16 %v5406
      %v5493 = vunpack.c.h.bf16 %v5406
      %v5494 = vunpack.c.l.bf16 %v5407
      %v5495 = vunpack.c.l.bf16 %v5408
      %v5496 = vunpack.c.h.bf16 %v5408
      %v5497 = vunpack.c.l.bf16 %v5409
      %v5498 = vunpack.c.l.bf16 %v5410
      %v5499 = vunpack.c.h.bf16 %v5410
      %v5500 = vunpack.c.l.bf16 %v5411
      %v5501 = vunpack.c.l.bf16 %v5412
      %v5502 = vunpack.c.h.bf16 %v5412
      %v5503 = vunpack.c.l.bf16 %v5413
      %v5504 = vunpack.c.l.bf16 %v5414
      %v5505 = vunpack.c.h.bf16 %v5414
      %v5506 = vunpack.c.l.bf16 %v5415
      %v5507 = vunpack.c.l.bf16 %v5416
      %v5508 = vunpack.c.h.bf16 %v5416
      %v5509 = vunpack.c.l.bf16 %v5417
      %v5510 = vunpack.c.l.bf16 %v5418
      %v5511 = vunpack.c.h.bf16 %v5418
      %v5512 = vunpack.c.l.bf16 %v5419
      %v5513 = vunpack.c.l.bf16 %v5420
      %v5514 = vunpack.c.h.bf16 %v5420
      %v5515 = vunpack.c.l.bf16 %v5421
      %v5516 = vunpack.c.l.bf16 %v5422
      %v5517 = vunpack.c.h.bf16 %v5422
      %v5518 = vunpack.c.l.bf16 %v5423
      %v5519 = vunpack.c.l.bf16 %v5424
      %v5520 = vunpack.c.h.bf16 %v5424
      %v5521 = vunpack.c.l.bf16 %v5425
      %v5522 = vadd.f32 %v5426, %v4399
      %v5523 = vadd.f32 %v5427, %v4401
      %v5524 = vadd.f32 %v5429, %v4403
      %v5525 = vadd.f32 %v5430, %v4405
      %v5526 = vadd.f32 %v5432, %v4409
      %v5527 = vadd.f32 %v5433, %v4411
      %v5528 = vadd.f32 %v5435, %v4413
      %v5529 = vadd.f32 %v5436, %v4415
      %v5530 = vadd.f32 %v5438, %v4419
      %v5531 = vadd.f32 %v5439, %v4421
      %v5532 = vadd.f32 %v5441, %v4423
      %v5533 = vadd.f32 %v5442, %v4425
      %v5534 = vadd.f32 %v5444, %v4429
      %v5535 = vadd.f32 %v5445, %v4431
      %v5536 = vadd.f32 %v5447, %v4433
      %v5537 = vadd.f32 %v5448, %v4435
      %v5538 = vadd.f32 %v5450, %v4439
      %v5539 = vadd.f32 %v5451, %v4441
      %v5540 = vadd.f32 %v5453, %v4443
      %v5541 = vadd.f32 %v5454, %v4445
      %v5542 = vadd.f32 %v5456, %v4449
      %v5543 = vadd.f32 %v5457, %v4451
      %v5544 = vadd.f32 %v5459, %v4453
      %v5545 = vadd.f32 %v5460, %v4455
      %v5546 = vadd.f32 %v5462, %v4459
      %v5547 = vadd.f32 %v5463, %v4461
      %v5548 = vadd.f32 %v5465, %v4463
      %v5549 = vadd.f32 %v5466, %v4465
      %v5550 = vadd.f32 %v5468, %v4469
      %v5551 = vadd.f32 %v5469, %v4471
      %v5552 = vadd.f32 %v5471, %v4473
      %v5553 = vadd.f32 %v5472, %v4475
      %v5554 = vadd.f32 %v5474, %v4479
      %v5555 = vadd.f32 %v5475, %v4481
      %v5556 = vadd.f32 %v5477, %v4483
      %v5557 = vadd.f32 %v5478, %v4485
      %v5558 = vadd.f32 %v5480, %v4489
      %v5559 = vadd.f32 %v5481, %v4491
      %v5560 = vadd.f32 %v5483, %v4493
      %v5561 = vadd.f32 %v5484, %v4495
      %v5562 = vadd.f32 %v5486, %v4499
      %v5563 = vadd.f32 %v5487, %v4501
      %v5564 = vadd.f32 %v5489, %v4503
      %v5565 = vadd.f32 %v5490, %v4505
      %v5566 = vadd.f32 %v5492, %v4509
      %v5567 = vadd.f32 %v5493, %v4511
      %v5568 = vadd.f32 %v5495, %v4513
      %v5569 = vadd.f32 %v5496, %v4515
      %v5570 = vadd.f32 %v5498, %v4519
      %v5571 = vadd.f32 %v5499, %v4521
      %v5572 = vadd.f32 %v5501, %v4523
      %v5573 = vadd.f32 %v5502, %v4525
      %v5574 = vadd.f32 %v5504, %v4529
      %v5575 = vadd.f32 %v5505, %v4531
      %v5576 = vadd.f32 %v5507, %v4533
      %v5577 = vadd.f32 %v5508, %v4535
      %v5578 = vadd.f32 %v5510, %v4539
      %v5579 = vadd.f32 %v5511, %v4541
      %v5580 = vadd.f32 %v5513, %v4543
      %v5581 = vadd.f32 %v5514, %v4545
      %v5582 = vadd.f32 %v5516, %v4549
      %v5583 = vadd.f32 %v5517, %v4551
      %v5584 = vadd.f32 %v5519, %v4553
      %v5585 = vadd.f32 %v5520, %v4555
      %v5586 = vxor.u32 %v5522, 2147483648
      %v5587 = vxor.u32 %v5523, 2147483648
      %v5588 = vxor.u32 %v5524, 2147483648
      %v5589 = vxor.u32 %v5525, 2147483648
      %v5590 = vxor.u32 %v5526, 2147483648
      %v5591 = vxor.u32 %v5527, 2147483648
      %v5592 = vxor.u32 %v5528, 2147483648
      %v5593 = vxor.u32 %v5529, 2147483648
      %v5594 = vxor.u32 %v5530, 2147483648
      %v5595 = vxor.u32 %v5531, 2147483648
      %v5596 = vxor.u32 %v5532, 2147483648
      %v5597 = vxor.u32 %v5533, 2147483648
      %v5598 = vxor.u32 %v5534, 2147483648
      %v5599 = vxor.u32 %v5535, 2147483648
      %v5600 = vxor.u32 %v5536, 2147483648
      %v5601 = vxor.u32 %v5537, 2147483648
      %v5602 = vxor.u32 %v5538, 2147483648
      %v5603 = vxor.u32 %v5539, 2147483648
      %v5604 = vxor.u32 %v5540, 2147483648
      %v5605 = vxor.u32 %v5541, 2147483648
      %v5606 = vxor.u32 %v5542, 2147483648
      %v5607 = vxor.u32 %v5543, 2147483648
      %v5608 = vxor.u32 %v5544, 2147483648
      %v5609 = vxor.u32 %v5545, 2147483648
      %v5610 = vxor.u32 %v5546, 2147483648
      %v5611 = vxor.u32 %v5547, 2147483648
      %v5612 = vxor.u32 %v5548, 2147483648
      %v5613 = vxor.u32 %v5549, 2147483648
      %v5614 = vxor.u32 %v5550, 2147483648
      %v5615 = vxor.u32 %v5551, 2147483648
      %v5616 = vxor.u32 %v5552, 2147483648
      %v5617 = vxor.u32 %v5553, 2147483648
      %v5618 = vxor.u32 %v5554, 2147483648
      %v5619 = vxor.u32 %v5555, 2147483648
      %v5620 = vxor.u32 %v5556, 2147483648
      %v5621 = vxor.u32 %v5557, 2147483648
      %v5622 = vxor.u32 %v5558, 2147483648
      %v5623 = vxor.u32 %v5559, 2147483648
      %v5624 = vxor.u32 %v5560, 2147483648
      %v5625 = vxor.u32 %v5561, 2147483648
      %v5626 = vxor.u32 %v5562, 2147483648
      %v5627 = vxor.u32 %v5563, 2147483648
      %v5628 = vxor.u32 %v5564, 2147483648
      %v5629 = vxor.u32 %v5565, 2147483648
      %v5630 = vxor.u32 %v5566, 2147483648
      %v5631 = vxor.u32 %v5567, 2147483648
      %v5632 = vxor.u32 %v5568, 2147483648
      %v5633 = vxor.u32 %v5569, 2147483648
      %v5634 = vxor.u32 %v5570, 2147483648
      %v5635 = vxor.u32 %v5571, 2147483648
      %v5636 = vxor.u32 %v5572, 2147483648
      %v5637 = vxor.u32 %v5573, 2147483648
      %v5638 = vxor.u32 %v5574, 2147483648
      %v5639 = vxor.u32 %v5575, 2147483648
      %v5640 = vxor.u32 %v5576, 2147483648
      %v5641 = vxor.u32 %v5577, 2147483648
      %v5642 = vxor.u32 %v5578, 2147483648
      %v5643 = vxor.u32 %v5579, 2147483648
      %v5644 = vxor.u32 %v5580, 2147483648
      %v5645 = vxor.u32 %v5581, 2147483648
      %v5646 = vxor.u32 %v5582, 2147483648
      %v5647 = vxor.u32 %v5583, 2147483648
      %v5648 = vxor.u32 %v5584, 2147483648
      %v5649 = vxor.u32 %v5585, 2147483648
      %v5650 = vmul.f32 %v5586, 1.442695
      %v5651 = vpow.pop %v5650
      %v5652 = vmul.f32 %v5587, 1.442695
      %v5653 = vpow.pop %v5652
      %v5654 = vmul.f32 %v5588, 1.442695
      %v5655 = vpow.pop %v5654
      %v5656 = vmul.f32 %v5589, 1.442695
      %v5657 = vpow.pop %v5656
      %v5658 = vmul.f32 %v5590, 1.442695
      %v5659 = vpow.pop %v5658
      %v5660 = vmul.f32 %v5591, 1.442695
      %v5661 = vpow.pop %v5660
      %v5662 = vmul.f32 %v5592, 1.442695
      %v5663 = vpow.pop %v5662
      %v5664 = vmul.f32 %v5593, 1.442695
      %v5665 = vpow.pop %v5664
      %v5666 = vmul.f32 %v5594, 1.442695
      %v5667 = vpow.pop %v5666
      %v5668 = vmul.f32 %v5595, 1.442695
      %v5669 = vpow.pop %v5668
      %v5670 = vmul.f32 %v5596, 1.442695
      %v5671 = vpow.pop %v5670
      %v5672 = vmul.f32 %v5597, 1.442695
      %v5673 = vpow.pop %v5672
      %v5674 = vmul.f32 %v5598, 1.442695
      %v5675 = vpow.pop %v5674
      %v5676 = vmul.f32 %v5599, 1.442695
      %v5677 = vpow.pop %v5676
      %v5678 = vmul.f32 %v5600, 1.442695
      %v5679 = vpow.pop %v5678
      %v5680 = vmul.f32 %v5601, 1.442695
      %v5681 = vpow.pop %v5680
      %v5682 = vmul.f32 %v5602, 1.442695
      %v5683 = vpow.pop %v5682
      %v5684 = vmul.f32 %v5603, 1.442695
      %v5685 = vpow.pop %v5684
      %v5686 = vmul.f32 %v5604, 1.442695
      %v5687 = vpow.pop %v5686
      %v5688 = vmul.f32 %v5605, 1.442695
      %v5689 = vpow.pop %v5688
      %v5690 = vmul.f32 %v5606, 1.442695
      %v5691 = vpow.pop %v5690
      %v5692 = vmul.f32 %v5607, 1.442695
      %v5693 = vpow.pop %v5692
      %v5694 = vmul.f32 %v5608, 1.442695
      %v5695 = vpow.pop %v5694
      %v5696 = vmul.f32 %v5609, 1.442695
      %v5697 = vpow.pop %v5696
      %v5698 = vmul.f32 %v5610, 1.442695
      %v5699 = vpow.pop %v5698
      %v5700 = vmul.f32 %v5611, 1.442695
      %v5701 = vpow.pop %v5700
      %v5702 = vmul.f32 %v5612, 1.442695
      %v5703 = vpow.pop %v5702
      %v5704 = vmul.f32 %v5613, 1.442695
      %v5705 = vpow.pop %v5704
      %v5706 = vmul.f32 %v5614, 1.442695
      %v5707 = vpow.pop %v5706
      %v5708 = vmul.f32 %v5615, 1.442695
      %v5709 = vpow.pop %v5708
      %v5710 = vmul.f32 %v5616, 1.442695
      %v5711 = vpow.pop %v5710
      %v5712 = vmul.f32 %v5617, 1.442695
      %v5713 = vpow.pop %v5712
      %v5714 = vmul.f32 %v5618, 1.442695
      %v5715 = vpow.pop %v5714
      %v5716 = vmul.f32 %v5619, 1.442695
      %v5717 = vpow.pop %v5716
      %v5718 = vmul.f32 %v5620, 1.442695
      %v5719 = vpow.pop %v5718
      %v5720 = vmul.f32 %v5621, 1.442695
      %v5721 = vpow.pop %v5720
      %v5722 = vmul.f32 %v5622, 1.442695
      %v5723 = vpow.pop %v5722
      %v5724 = vmul.f32 %v5623, 1.442695
      %v5725 = vpow.pop %v5724
      %v5726 = vmul.f32 %v5624, 1.442695
      %v5727 = vpow.pop %v5726
      %v5728 = vmul.f32 %v5625, 1.442695
      %v5729 = vpow.pop %v5728
      %v5730 = vmul.f32 %v5626, 1.442695
      %v5731 = vpow.pop %v5730
      %v5732 = vmul.f32 %v5627, 1.442695
      %v5733 = vpow.pop %v5732
      %v5734 = vmul.f32 %v5628, 1.442695
      %v5735 = vpow.pop %v5734
      %v5736 = vmul.f32 %v5629, 1.442695
      %v5737 = vpow.pop %v5736
      %v5738 = vmul.f32 %v5630, 1.442695
      %v5739 = vpow.pop %v5738
      %v5740 = vmul.f32 %v5631, 1.442695
      %v5741 = vpow.pop %v5740
      %v5742 = vmul.f32 %v5632, 1.442695
      %v5743 = vpow.pop %v5742
      %v5744 = vmul.f32 %v5633, 1.442695
      %v5745 = vpow.pop %v5744
      %v5746 = vmul.f32 %v5634, 1.442695
      %v5747 = vpow.pop %v5746
      %v5748 = vmul.f32 %v5635, 1.442695
      %v5749 = vpow.pop %v5748
      %v5750 = vmul.f32 %v5636, 1.442695
      %v5751 = vpow.pop %v5750
      %v5752 = vmul.f32 %v5637, 1.442695
      %v5753 = vpow.pop %v5752
      %v5754 = vmul.f32 %v5638, 1.442695
      %v5755 = vpow.pop %v5754
      %v5756 = vmul.f32 %v5639, 1.442695
      %v5757 = vpow.pop %v5756
      %v5758 = vmul.f32 %v5640, 1.442695
      %v5759 = vpow.pop %v5758
      %v5760 = vmul.f32 %v5641, 1.442695
      %v5761 = vpow.pop %v5760
      %v5762 = vmul.f32 %v5642, 1.442695
      %v5763 = vpow.pop %v5762
      %v5764 = vmul.f32 %v5643, 1.442695
      %v5765 = vpow.pop %v5764
      %v5766 = vmul.f32 %v5644, 1.442695
      %v5767 = vpow.pop %v5766
      %v5768 = vmul.f32 %v5645, 1.442695
      %v5769 = vpow.pop %v5768
      %v5770 = vmul.f32 %v5646, 1.442695
      %v5771 = vpow.pop %v5770
      %v5772 = vmul.f32 %v5647, 1.442695
      %v5773 = vpow.pop %v5772
      %v5774 = vmul.f32 %v5648, 1.442695
      %v5775 = vpow.pop %v5774
      %v5776 = vmul.f32 %v5649, 1.442695
      %v5777 = vpow.pop %v5776
      %v5778 = vadd.f32 %v5651, 1.0
      %v5779 = vadd.f32 %v5653, 1.0
      %v5780 = vadd.f32 %v5655, 1.0
      %v5781 = vadd.f32 %v5657, 1.0
      %v5782 = vadd.f32 %v5659, 1.0
      %v5783 = vadd.f32 %v5661, 1.0
      %v5784 = vadd.f32 %v5663, 1.0
      %v5785 = vadd.f32 %v5665, 1.0
      %v5786 = vadd.f32 %v5667, 1.0
      %v5787 = vadd.f32 %v5669, 1.0
      %v5788 = vadd.f32 %v5671, 1.0
      %v5789 = vadd.f32 %v5673, 1.0
      %v5790 = vadd.f32 %v5675, 1.0
      %v5791 = vadd.f32 %v5677, 1.0
      %v5792 = vadd.f32 %v5679, 1.0
      %v5793 = vadd.f32 %v5681, 1.0
      %v5794 = vadd.f32 %v5683, 1.0
      %v5795 = vadd.f32 %v5685, 1.0
      %v5796 = vadd.f32 %v5687, 1.0
      %v5797 = vadd.f32 %v5689, 1.0
      %v5798 = vadd.f32 %v5691, 1.0
      %v5799 = vadd.f32 %v5693, 1.0
      %v5800 = vadd.f32 %v5695, 1.0
      %v5801 = vadd.f32 %v5697, 1.0
      %v5802 = vadd.f32 %v5699, 1.0
      %v5803 = vadd.f32 %v5701, 1.0
      %v5804 = vadd.f32 %v5703, 1.0
      %v5805 = vadd.f32 %v5705, 1.0
      %v5806 = vadd.f32 %v5707, 1.0
      %v5807 = vadd.f32 %v5709, 1.0
      %v5808 = vadd.f32 %v5711, 1.0
      %v5809 = vadd.f32 %v5713, 1.0
      %v5810 = vadd.f32 %v5715, 1.0
      %v5811 = vadd.f32 %v5717, 1.0
      %v5812 = vadd.f32 %v5719, 1.0
      %v5813 = vadd.f32 %v5721, 1.0
      %v5814 = vadd.f32 %v5723, 1.0
      %v5815 = vadd.f32 %v5725, 1.0
      %v5816 = vadd.f32 %v5727, 1.0
      %v5817 = vadd.f32 %v5729, 1.0
      %v5818 = vadd.f32 %v5731, 1.0
      %v5819 = vadd.f32 %v5733, 1.0
      %v5820 = vadd.f32 %v5735, 1.0
      %v5821 = vadd.f32 %v5737, 1.0
      %v5822 = vadd.f32 %v5739, 1.0
      %v5823 = vadd.f32 %v5741, 1.0
      %v5824 = vadd.f32 %v5743, 1.0
      %v5825 = vadd.f32 %v5745, 1.0
      %v5826 = vadd.f32 %v5747, 1.0
      %v5827 = vadd.f32 %v5749, 1.0
      %v5828 = vadd.f32 %v5751, 1.0
      %v5829 = vadd.f32 %v5753, 1.0
      %v5830 = vadd.f32 %v5755, 1.0
      %v5831 = vadd.f32 %v5757, 1.0
      %v5832 = vadd.f32 %v5759, 1.0
      %v5833 = vadd.f32 %v5761, 1.0
      %v5834 = vadd.f32 %v5763, 1.0
      %v5835 = vadd.f32 %v5765, 1.0
      %v5836 = vadd.f32 %v5767, 1.0
      %v5837 = vadd.f32 %v5769, 1.0
      %v5838 = vadd.f32 %v5771, 1.0
      %v5839 = vadd.f32 %v5773, 1.0
      %v5840 = vadd.f32 %v5775, 1.0
      %v5841 = vadd.f32 %v5777, 1.0
      %v5842 = vrcp.pop %v5778
      %v5843 = vmul.f32 1.0, %v5842
      %v5844 = vrcp.pop %v5779
      %v5845 = vmul.f32 1.0, %v5844
      %v5846 = vrcp.pop %v5780
      %v5847 = vmul.f32 1.0, %v5846
      %v5848 = vrcp.pop %v5781
      %v5849 = vmul.f32 1.0, %v5848
      %v5850 = vrcp.pop %v5782
      %v5851 = vmul.f32 1.0, %v5850
      %v5852 = vrcp.pop %v5783
      %v5853 = vmul.f32 1.0, %v5852
      %v5854 = vrcp.pop %v5784
      %v5855 = vmul.f32 1.0, %v5854
      %v5856 = vrcp.pop %v5785
      %v5857 = vmul.f32 1.0, %v5856
      %v5858 = vrcp.pop %v5786
      %v5859 = vmul.f32 1.0, %v5858
      %v5860 = vrcp.pop %v5787
      %v5861 = vmul.f32 1.0, %v5860
      %v5862 = vrcp.pop %v5788
      %v5863 = vmul.f32 1.0, %v5862
      %v5864 = vrcp.pop %v5789
      %v5865 = vmul.f32 1.0, %v5864
      %v5866 = vrcp.pop %v5790
      %v5867 = vmul.f32 1.0, %v5866
      %v5868 = vrcp.pop %v5791
      %v5869 = vmul.f32 1.0, %v5868
      %v5870 = vrcp.pop %v5792
      %v5871 = vmul.f32 1.0, %v5870
      %v5872 = vrcp.pop %v5793
      %v5873 = vmul.f32 1.0, %v5872
      %v5874 = vrcp.pop %v5794
      %v5875 = vmul.f32 1.0, %v5874
      %v5876 = vrcp.pop %v5795
      %v5877 = vmul.f32 1.0, %v5876
      %v5878 = vrcp.pop %v5796
      %v5879 = vmul.f32 1.0, %v5878
      %v5880 = vrcp.pop %v5797
      %v5881 = vmul.f32 1.0, %v5880
      %v5882 = vrcp.pop %v5798
      %v5883 = vmul.f32 1.0, %v5882
      %v5884 = vrcp.pop %v5799
      %v5885 = vmul.f32 1.0, %v5884
      %v5886 = vrcp.pop %v5800
      %v5887 = vmul.f32 1.0, %v5886
      %v5888 = vrcp.pop %v5801
      %v5889 = vmul.f32 1.0, %v5888
      %v5890 = vrcp.pop %v5802
      %v5891 = vmul.f32 1.0, %v5890
      %v5892 = vrcp.pop %v5803
      %v5893 = vmul.f32 1.0, %v5892
      %v5894 = vrcp.pop %v5804
      %v5895 = vmul.f32 1.0, %v5894
      %v5896 = vrcp.pop %v5805
      %v5897 = vmul.f32 1.0, %v5896
      %v5898 = vrcp.pop %v5806
      %v5899 = vmul.f32 1.0, %v5898
      %v5900 = vrcp.pop %v5807
      %v5901 = vmul.f32 1.0, %v5900
      %v5902 = vrcp.pop %v5808
      %v5903 = vmul.f32 1.0, %v5902
      %v5904 = vrcp.pop %v5809
      %v5905 = vmul.f32 1.0, %v5904
      %v5906 = vrcp.pop %v5810
      %v5907 = vmul.f32 1.0, %v5906
      %v5908 = vrcp.pop %v5811
      %v5909 = vmul.f32 1.0, %v5908
      %v5910 = vrcp.pop %v5812
      %v5911 = vmul.f32 1.0, %v5910
      %v5912 = vrcp.pop %v5813
      %v5913 = vmul.f32 1.0, %v5912
      %v5914 = vrcp.pop %v5814
      %v5915 = vmul.f32 1.0, %v5914
      %v5916 = vrcp.pop %v5815
      %v5917 = vmul.f32 1.0, %v5916
      %v5918 = vrcp.pop %v5816
      %v5919 = vmul.f32 1.0, %v5918
      %v5920 = vrcp.pop %v5817
      %v5921 = vmul.f32 1.0, %v5920
      %v5922 = vrcp.pop %v5818
      %v5923 = vmul.f32 1.0, %v5922
      %v5924 = vrcp.pop %v5819
      %v5925 = vmul.f32 1.0, %v5924
      %v5926 = vrcp.pop %v5820
      %v5927 = vmul.f32 1.0, %v5926
      %v5928 = vrcp.pop %v5821
      %v5929 = vmul.f32 1.0, %v5928
      %v5930 = vrcp.pop %v5822
      %v5931 = vmul.f32 1.0, %v5930
      %v5932 = vrcp.pop %v5823
      %v5933 = vmul.f32 1.0, %v5932
      %v5934 = vrcp.pop %v5824
      %v5935 = vmul.f32 1.0, %v5934
      %v5936 = vrcp.pop %v5825
      %v5937 = vmul.f32 1.0, %v5936
      %v5938 = vrcp.pop %v5826
      %v5939 = vmul.f32 1.0, %v5938
      %v5940 = vrcp.pop %v5827
      %v5941 = vmul.f32 1.0, %v5940
      %v5942 = vrcp.pop %v5828
      %v5943 = vmul.f32 1.0, %v5942
      %v5944 = vrcp.pop %v5829
      %v5945 = vmul.f32 1.0, %v5944
      %v5946 = vrcp.pop %v5830
      %v5947 = vmul.f32 1.0, %v5946
      %v5948 = vrcp.pop %v5831
      %v5949 = vmul.f32 1.0, %v5948
      %v5950 = vrcp.pop %v5832
      %v5951 = vmul.f32 1.0, %v5950
      %v5952 = vrcp.pop %v5833
      %v5953 = vmul.f32 1.0, %v5952
      %v5954 = vrcp.pop %v5834
      %v5955 = vmul.f32 1.0, %v5954
      %v5956 = vrcp.pop %v5835
      %v5957 = vmul.f32 1.0, %v5956
      %v5958 = vrcp.pop %v5836
      %v5959 = vmul.f32 1.0, %v5958
      %v5960 = vrcp.pop %v5837
      %v5961 = vmul.f32 1.0, %v5960
      %v5962 = vrcp.pop %v5838
      %v5963 = vmul.f32 1.0, %v5962
      %v5964 = vrcp.pop %v5839
      %v5965 = vmul.f32 1.0, %v5964
      %v5966 = vrcp.pop %v5840
      %v5967 = vmul.f32 1.0, %v5966
      %v5968 = vrcp.pop %v5841
      %v5969 = vmul.f32 1.0, %v5968
      %v5970 = vld [vmem:[%s2] sm:$0x1]
      %v5972 = vlaneseq
      %v5973 = vshrl.u32 %v5972, 7
      %v5974 = vsub.s32 0, %v5973
      %v5975 = vrot.slane %v5970, %v5974
      %v5977 = vadd.f32 %v5236, %v5975
      %v5978 = vadd.f32 %v5239, %v5975
      %v5979 = vadd.f32 %v5244, %v5975
      %v5980 = vadd.f32 %v5247, %v5975
      %v5981 = vadd.f32 %v5252, %v5975
      %v5982 = vadd.f32 %v5255, %v5975
      %v5983 = vadd.f32 %v5260, %v5975
      %v5984 = vadd.f32 %v5263, %v5975
      %v5985 = vadd.f32 %v5268, %v5975
      %v5986 = vadd.f32 %v5271, %v5975
      %v5987 = vadd.f32 %v5276, %v5975
      %v5988 = vadd.f32 %v5279, %v5975
      %v5989 = vadd.f32 %v5284, %v5975
      %v5990 = vadd.f32 %v5287, %v5975
      %v5991 = vadd.f32 %v5292, %v5975
      %v5992 = vadd.f32 %v5295, %v5975
      %v5993 = vadd.f32 %v5300, %v5975
      %v5994 = vadd.f32 %v5303, %v5975
      %v5995 = vadd.f32 %v5308, %v5975
      %v5996 = vadd.f32 %v5311, %v5975
      %v5997 = vadd.f32 %v5316, %v5975
      %v5998 = vadd.f32 %v5319, %v5975
      %v5999 = vadd.f32 %v5324, %v5975
      %v6000 = vadd.f32 %v5327, %v5975
      %v6001 = vadd.f32 %v5332, %v5975
      %v6002 = vadd.f32 %v5335, %v5975
      %v6003 = vadd.f32 %v5340, %v5975
      %v6004 = vadd.f32 %v5343, %v5975
      %v6005 = vadd.f32 %v5348, %v5975
      %v6006 = vadd.f32 %v5351, %v5975
      %v6007 = vadd.f32 %v5356, %v5975
      %v6008 = vadd.f32 %v5359, %v5975
      %v6009 = vmul.f32 %v5845, %v5977
      %v6010 = vmul.f32 %v5849, %v5978
      %v6011 = vmul.f32 %v5853, %v5979
      %v6012 = vmul.f32 %v5857, %v5980
      %v6013 = vmul.f32 %v5861, %v5981
      %v6014 = vmul.f32 %v5865, %v5982
      %v6015 = vmul.f32 %v5869, %v5983
      %v6016 = vmul.f32 %v5873, %v5984
      %v6017 = vmul.f32 %v5877, %v5985
      %v6018 = vmul.f32 %v5881, %v5986
      %v6019 = vmul.f32 %v5885, %v5987
      %v6020 = vmul.f32 %v5889, %v5988
      %v6021 = vmul.f32 %v5893, %v5989
      %v6022 = vmul.f32 %v5897, %v5990
      %v6023 = vmul.f32 %v5901, %v5991
      %v6024 = vmul.f32 %v5905, %v5992
      %v6025 = vmul.f32 %v5909, %v5993
      %v6026 = vmul.f32 %v5913, %v5994
      %v6027 = vmul.f32 %v5917, %v5995
      %v6028 = vmul.f32 %v5921, %v5996
      %v6029 = vmul.f32 %v5925, %v5997
      %v6030 = vmul.f32 %v5929, %v5998
      %v6031 = vmul.f32 %v5933, %v5999
      %v6032 = vmul.f32 %v5937, %v6000
      %v6033 = vmul.f32 %v5941, %v6001
      %v6034 = vmul.f32 %v5945, %v6002
      %v6035 = vmul.f32 %v5949, %v6003
      %v6036 = vmul.f32 %v5953, %v6004
      %v6037 = vmul.f32 %v5957, %v6005
      %v6038 = vmul.f32 %v5961, %v6006
      %v6039 = vmul.f32 %v5965, %v6007
      %v6040 = vmul.f32 %v5969, %v6008
      %v6041 = vadd.f32 %v5428, %v6009
      %v6042 = vadd.f32 %v5431, %v6010
      %v6043 = vadd.f32 %v5434, %v6011
      %v6044 = vadd.f32 %v5437, %v6012
      %v6045 = vadd.f32 %v5440, %v6013
      %v6046 = vadd.f32 %v5443, %v6014
      %v6047 = vadd.f32 %v5446, %v6015
      %v6048 = vadd.f32 %v5449, %v6016
      %v6049 = vadd.f32 %v5452, %v6017
      %v6050 = vadd.f32 %v5455, %v6018
      %v6051 = vadd.f32 %v5458, %v6019
      %v6052 = vadd.f32 %v5461, %v6020
      %v6053 = vadd.f32 %v5464, %v6021
      %v6054 = vadd.f32 %v5467, %v6022
      %v6055 = vadd.f32 %v5470, %v6023
      %v6056 = vadd.f32 %v5473, %v6024
      %v6057 = vadd.f32 %v5476, %v6025
      %v6058 = vadd.f32 %v5479, %v6026
      %v6059 = vadd.f32 %v5482, %v6027
      %v6060 = vadd.f32 %v5485, %v6028
      %v6061 = vadd.f32 %v5488, %v6029
      %v6062 = vadd.f32 %v5491, %v6030
      %v6063 = vadd.f32 %v5494, %v6031
      %v6064 = vadd.f32 %v5497, %v6032
      %v6065 = vadd.f32 %v5500, %v6033
      %v6066 = vadd.f32 %v5503, %v6034
      %v6067 = vadd.f32 %v5506, %v6035
      %v6068 = vadd.f32 %v5509, %v6036
      %v6069 = vadd.f32 %v5512, %v6037
      %v6070 = vadd.f32 %v5515, %v6038
      %v6071 = vadd.f32 %v5518, %v6039
      %v6072 = vadd.f32 %v5521, %v6040
      %v6073 = vtanh.pop %v6041
      %v6074 = vtanh.pop %v6042
      %v6075 = vtanh.pop %v6043
      %v6076 = vtanh.pop %v6044
      %v6077 = vtanh.pop %v6045
      %v6078 = vtanh.pop %v6046
      %v6079 = vtanh.pop %v6047
      %v6080 = vtanh.pop %v6048
      %v6081 = vtanh.pop %v6049
      %v6082 = vtanh.pop %v6050
      %v6083 = vtanh.pop %v6051
      %v6084 = vtanh.pop %v6052
      %v6085 = vtanh.pop %v6053
      %v6086 = vtanh.pop %v6054
      %v6087 = vtanh.pop %v6055
      %v6088 = vtanh.pop %v6056
      %v6089 = vtanh.pop %v6057
      %v6090 = vtanh.pop %v6058
      %v6091 = vtanh.pop %v6059
      %v6092 = vtanh.pop %v6060
      %v6093 = vtanh.pop %v6061
      %v6094 = vtanh.pop %v6062
      %v6095 = vtanh.pop %v6063
      %v6096 = vtanh.pop %v6064
      %v6097 = vtanh.pop %v6065
      %v6098 = vtanh.pop %v6066
      %v6099 = vtanh.pop %v6067
      %v6100 = vtanh.pop %v6068
      %v6101 = vtanh.pop %v6069
      %v6102 = vtanh.pop %v6070
      %v6103 = vtanh.pop %v6071
      %v6104 = vtanh.pop %v6072
      %s6105 = scalar_lea.vmem [#allocation2], 16
      %v6106 = vld [vmem:[%s6105] sm:$0xff]
      %v6107 = vld [vmem:[%s6105 + $0x8] sm:$0xff]
      %v6108 = vld [vmem:[%s6105 + $0x10] sm:$0xff]
      %v6109 = vld [vmem:[%s6105 + $0x18] sm:$0xff]
      %v6110 = vld [vmem:[%s6105 + $0x20] sm:$0xff]
      %v6111 = vld [vmem:[%s6105 + $0x28] sm:$0xff]
      %v6112 = vld [vmem:[%s6105 + $0x30] sm:$0xff]
      %v6113 = vld [vmem:[%s6105 + $0x38] sm:$0xff]
      %v6114 = vld [vmem:[%s6105 + $0x40] sm:$0xff]
      %v6115 = vld [vmem:[%s6105 + $0x48] sm:$0xff]
      %v6116 = vld [vmem:[%s6105 + $0x50] sm:$0xff]
      %v6117 = vld [vmem:[%s6105 + $0x58] sm:$0xff]
      %v6118 = vld [vmem:[%s6105 + $0x60] sm:$0xff]
      %v6119 = vld [vmem:[%s6105 + $0x68] sm:$0xff]
      %v6120 = vld [vmem:[%s6105 + $0x70] sm:$0xff]
      %v6121 = vld [vmem:[%s6105 + $0x78] sm:$0xff]
      %v6122 = vld [vmem:[%s6105 + $0x80] sm:$0xff]
      %v6123 = vld [vmem:[%s6105 + $0x88] sm:$0xff]
      %v6124 = vld [vmem:[%s6105 + $0x90] sm:$0xff]
      %v6125 = vld [vmem:[%s6105 + $0x98] sm:$0xff]
      %v6126 = vld [vmem:[%s6105 + $0xa0] sm:$0xff]
      %v6127 = vld [vmem:[%s6105 + $0xa8] sm:$0xff]
      %v6128 = vld [vmem:[%s6105 + $0xb0] sm:$0xff]
      %v6129 = vld [vmem:[%s6105 + $0xb8] sm:$0xff]
      %v6130 = vld [vmem:[%s6105 + $0xc0] sm:$0xff]
      %v6131 = vld [vmem:[%s6105 + $0xc8] sm:$0xff]
      %v6132 = vld [vmem:[%s6105 + $0xd0] sm:$0xff]
      %v6133 = vld [vmem:[%s6105 + $0xd8] sm:$0xff]
      %v6134 = vld [vmem:[%s6105 + $0xe0] sm:$0xff]
      %v6135 = vld [vmem:[%s6105 + $0xe8] sm:$0xff]
      %v6136 = vld [vmem:[%s6105 + $0xf0] sm:$0xff]
      %v6137 = vld [vmem:[%s6105 + $0xf8] sm:$0xff]
      %v6138 = vsub.f32 %v6106, %v6073
      %v6139 = vsub.f32 %v6107, %v6074
      %v6140 = vsub.f32 %v6108, %v6075
      %v6141 = vsub.f32 %v6109, %v6076
      %v6142 = vsub.f32 %v6110, %v6077
      %v6143 = vsub.f32 %v6111, %v6078
      %v6144 = vsub.f32 %v6112, %v6079
      %v6145 = vsub.f32 %v6113, %v6080
      %v6146 = vsub.f32 %v6114, %v6081
      %v6147 = vsub.f32 %v6115, %v6082
      %v6148 = vsub.f32 %v6116, %v6083
      %v6149 = vsub.f32 %v6117, %v6084
      %v6150 = vsub.f32 %v6118, %v6085
      %v6151 = vsub.f32 %v6119, %v6086
      %v6152 = vsub.f32 %v6120, %v6087
      %v6153 = vsub.f32 %v6121, %v6088
      %v6154 = vsub.f32 %v6122, %v6089
      %v6155 = vsub.f32 %v6123, %v6090
      %v6156 = vsub.f32 %v6124, %v6091
      %v6157 = vsub.f32 %v6125, %v6092
      %v6158 = vsub.f32 %v6126, %v6093
      %v6159 = vsub.f32 %v6127, %v6094
      %v6160 = vsub.f32 %v6128, %v6095
      %v6161 = vsub.f32 %v6129, %v6096
      %v6162 = vsub.f32 %v6130, %v6097
      %v6163 = vsub.f32 %v6131, %v6098
      %v6164 = vsub.f32 %v6132, %v6099
      %v6165 = vsub.f32 %v6133, %v6100
      %v6166 = vsub.f32 %v6134, %v6101
      %v6167 = vsub.f32 %v6135, %v6102
      %v6168 = vsub.f32 %v6136, %v6103
      %v6169 = vsub.f32 %v6137, %v6104
      %v6170 = vmul.f32 %v5843, %v6138
      %v6171 = vmul.f32 %v5847, %v6139
      %v6172 = vmul.f32 %v5851, %v6140
      %v6173 = vmul.f32 %v5855, %v6141
      %v6174 = vmul.f32 %v5859, %v6142
      %v6175 = vmul.f32 %v5863, %v6143
      %v6176 = vmul.f32 %v5867, %v6144
      %v6177 = vmul.f32 %v5871, %v6145
      %v6178 = vmul.f32 %v5875, %v6146
      %v6179 = vmul.f32 %v5879, %v6147
      %v6180 = vmul.f32 %v5883, %v6148
      %v6181 = vmul.f32 %v5887, %v6149
      %v6182 = vmul.f32 %v5891, %v6150
      %v6183 = vmul.f32 %v5895, %v6151
      %v6184 = vmul.f32 %v5899, %v6152
      %v6185 = vmul.f32 %v5903, %v6153
      %v6186 = vmul.f32 %v5907, %v6154
      %v6187 = vmul.f32 %v5911, %v6155
      %v6188 = vmul.f32 %v5915, %v6156
      %v6189 = vmul.f32 %v5919, %v6157
      %v6190 = vmul.f32 %v5923, %v6158
      %v6191 = vmul.f32 %v5927, %v6159
      %v6192 = vmul.f32 %v5931, %v6160
      %v6193 = vmul.f32 %v5935, %v6161
      %v6194 = vmul.f32 %v5939, %v6162
      %v6195 = vmul.f32 %v5943, %v6163
      %v6196 = vmul.f32 %v5947, %v6164
      %v6197 = vmul.f32 %v5951, %v6165
      %v6198 = vmul.f32 %v5955, %v6166
      %v6199 = vmul.f32 %v5959, %v6167
      %v6200 = vmul.f32 %v5963, %v6168
      %v6201 = vmul.f32 %v5967, %v6169
      %v6202 = vadd.f32 %v6073, %v6170
      %v6203 = vadd.f32 %v6074, %v6171
      %v6204 = vadd.f32 %v6075, %v6172
      %v6205 = vadd.f32 %v6076, %v6173
      %v6206 = vadd.f32 %v6077, %v6174
      %v6207 = vadd.f32 %v6078, %v6175
      %v6208 = vadd.f32 %v6079, %v6176
      %v6209 = vadd.f32 %v6080, %v6177
      %v6210 = vadd.f32 %v6081, %v6178
      %v6211 = vadd.f32 %v6082, %v6179
      %v6212 = vadd.f32 %v6083, %v6180
      %v6213 = vadd.f32 %v6084, %v6181
      %v6214 = vadd.f32 %v6085, %v6182
      %v6215 = vadd.f32 %v6086, %v6183
      %v6216 = vadd.f32 %v6087, %v6184
      %v6217 = vadd.f32 %v6088, %v6185
      %v6218 = vadd.f32 %v6089, %v6186
      %v6219 = vadd.f32 %v6090, %v6187
      %v6220 = vadd.f32 %v6091, %v6188
      %v6221 = vadd.f32 %v6092, %v6189
      %v6222 = vadd.f32 %v6093, %v6190
      %v6223 = vadd.f32 %v6094, %v6191
      %v6224 = vadd.f32 %v6095, %v6192
      %v6225 = vadd.f32 %v6096, %v6193
      %v6226 = vadd.f32 %v6097, %v6194
      %v6227 = vadd.f32 %v6098, %v6195
      %v6228 = vadd.f32 %v6099, %v6196
      %v6229 = vadd.f32 %v6100, %v6197
      %v6230 = vadd.f32 %v6101, %v6198
      %v6231 = vadd.f32 %v6102, %v6199
      %v6232 = vadd.f32 %v6103, %v6200
      %v6233 = vadd.f32 %v6104, %v6201
      %6234 = vst [vmem:[%s233] sm:$0xff] %v6202
      %6235 = vst [vmem:[%s233 + $0x8] sm:$0xff] %v6203
      %6236 = vst [vmem:[%s233 + $0x10] sm:$0xff] %v6204
      %6237 = vst [vmem:[%s233 + $0x18] sm:$0xff] %v6205
      %6238 = vst [vmem:[%s233 + $0x20] sm:$0xff] %v6206
      %6239 = vst [vmem:[%s233 + $0x28] sm:$0xff] %v6207
      %6240 = vst [vmem:[%s233 + $0x30] sm:$0xff] %v6208
      %6241 = vst [vmem:[%s233 + $0x38] sm:$0xff] %v6209
      %6242 = vst [vmem:[%s233 + $0x40] sm:$0xff] %v6210
      %6243 = vst [vmem:[%s233 + $0x48] sm:$0xff] %v6211
      %6244 = vst [vmem:[%s233 + $0x50] sm:$0xff] %v6212
      %6245 = vst [vmem:[%s233 + $0x58] sm:$0xff] %v6213
      %6246 = vst [vmem:[%s233 + $0x60] sm:$0xff] %v6214
      %6247 = vst [vmem:[%s233 + $0x68] sm:$0xff] %v6215
      %6248 = vst [vmem:[%s233 + $0x70] sm:$0xff] %v6216
      %6249 = vst [vmem:[%s233 + $0x78] sm:$0xff] %v6217
      %6250 = vst [vmem:[%s233 + $0x80] sm:$0xff] %v6218
      %6251 = vst [vmem:[%s233 + $0x88] sm:$0xff] %v6219
      %6252 = vst [vmem:[%s233 + $0x90] sm:$0xff] %v6220
      %6253 = vst [vmem:[%s233 + $0x98] sm:$0xff] %v6221
      %6254 = vst [vmem:[%s233 + $0xa0] sm:$0xff] %v6222
      %6255 = vst [vmem:[%s233 + $0xa8] sm:$0xff] %v6223
      %6256 = vst [vmem:[%s233 + $0xb0] sm:$0xff] %v6224
      %6257 = vst [vmem:[%s233 + $0xb8] sm:$0xff] %v6225
      %6258 = vst [vmem:[%s233 + $0xc0] sm:$0xff] %v6226
      %6259 = vst [vmem:[%s233 + $0xc8] sm:$0xff] %v6227
      %6260 = vst [vmem:[%s233 + $0xd0] sm:$0xff] %v6228
      %6261 = vst [vmem:[%s233 + $0xd8] sm:$0xff] %v6229
      %6262 = vst [vmem:[%s233 + $0xe0] sm:$0xff] %v6230
      %6263 = vst [vmem:[%s233 + $0xe8] sm:$0xff] %v6231
      %6264 = vst [vmem:[%s233 + $0xf0] sm:$0xff] %v6232
      %6265 = vst [vmem:[%s233 + $0xf8] sm:$0xff] %v6233
      %6266 = vst [vmem:[%s6105] sm:$0xff] %v6202
      %6267 = vst [vmem:[%s6105 + $0x8] sm:$0xff] %v6203
      %6268 = vst [vmem:[%s6105 + $0x10] sm:$0xff] %v6204
      %6269 = vst [vmem:[%s6105 + $0x18] sm:$0xff] %v6205
      %6270 = vst [vmem:[%s6105 + $0x20] sm:$0xff] %v6206
      %6271 = vst [vmem:[%s6105 + $0x28] sm:$0xff] %v6207
      %6272 = vst [vmem:[%s6105 + $0x30] sm:$0xff] %v6208
      %6273 = vst [vmem:[%s6105 + $0x38] sm:$0xff] %v6209
      %6274 = vst [vmem:[%s6105 + $0x40] sm:$0xff] %v6210
      %6275 = vst [vmem:[%s6105 + $0x48] sm:$0xff] %v6211
      %6276 = vst [vmem:[%s6105 + $0x50] sm:$0xff] %v6212
      %6277 = vst [vmem:[%s6105 + $0x58] sm:$0xff] %v6213
      %6278 = vst [vmem:[%s6105 + $0x60] sm:$0xff] %v6214
      %6279 = vst [vmem:[%s6105 + $0x68] sm:$0xff] %v6215
      %6280 = vst [vmem:[%s6105 + $0x70] sm:$0xff] %v6216
      %6281 = vst [vmem:[%s6105 + $0x78] sm:$0xff] %v6217
      %6282 = vst [vmem:[%s6105 + $0x80] sm:$0xff] %v6218
      %6283 = vst [vmem:[%s6105 + $0x88] sm:$0xff] %v6219
      %6284 = vst [vmem:[%s6105 + $0x90] sm:$0xff] %v6220
      %6285 = vst [vmem:[%s6105 + $0x98] sm:$0xff] %v6221
      %6286 = vst [vmem:[%s6105 + $0xa0] sm:$0xff] %v6222
      %6287 = vst [vmem:[%s6105 + $0xa8] sm:$0xff] %v6223
      %6288 = vst [vmem:[%s6105 + $0xb0] sm:$0xff] %v6224
      %6289 = vst [vmem:[%s6105 + $0xb8] sm:$0xff] %v6225
      %6290 = vst [vmem:[%s6105 + $0xc0] sm:$0xff] %v6226
      %6291 = vst [vmem:[%s6105 + $0xc8] sm:$0xff] %v6227
      %6292 = vst [vmem:[%s6105 + $0xd0] sm:$0xff] %v6228
      %6293 = vst [vmem:[%s6105 + $0xd8] sm:$0xff] %v6229
      %6294 = vst [vmem:[%s6105 + $0xe0] sm:$0xff] %v6230
      %6295 = vst [vmem:[%s6105 + $0xe8] sm:$0xff] %v6231
      %6296 = vst [vmem:[%s6105 + $0xf0] sm:$0xff] %v6232
      %6297 = vst [vmem:[%s6105 + $0xf8] sm:$0xff] %v6233
      %p6298 = scmp.lt.s32.totalorder %s19, 1
      %s6299 = scalar_select %p6298, %s19, 1
      %p6300 = scmp.lt.s32.totalorder %s20, 5
      %s6301 = scalar_select %p6300, %s20, 5
      %s6302 = smul.addr %s6301, 32
      %s6303 = smul.addr %s6299, 192
      %s6304 = sadd.s32 %s6302, %s6303
      %s6305 = smul.addr %s6304, 8
      %s6306 = scalar_lea.vmem %s4, %s6305
      // Predicated region
      $region41: #{temporal_encoder_pallas.1} parent=35 // pred_check
        %p6307 = pneg %p138
      $region42: #{temporal_encoder_pallas.1} parent=35 // pred_check_branch
        %6309 = sbr.rel (%p6307) target = $region44
      $region43: #{temporal_encoder_pallas.1} parent=35 // pred_region
        _
      $region44: #{temporal_encoder_pallas.1} parent=35 // pred_fallthru
        _
    $region36: #{temporal_encoder_pallas.1} parent=5 // pred_fallthru
      _
    %p6310 = scmp.le.s32.totalorder 2, %s10
    // Predicated region
    $region45: #{temporal_encoder_pallas.1} parent=5 // pred_check
      %p6311 = pneg %p6310
    $region46: #{temporal_encoder_pallas.1} parent=5 // pred_check_branch
      %6313 = sbr.rel (%p6311) target = $region48
    $region47: #{temporal_encoder_pallas.1} parent=5 // pred_region
      %s6314 = ssub.s32 %s10, 2
      // Predicated region
      $region49: #{temporal_encoder_pallas.1} parent=47 // pred_check
        %p6315 = pneg %p144
      $region50: #{temporal_encoder_pallas.1} parent=47 // pred_check_branch
        %6317 = sbr.rel (%p6315) target = $region52
      $region51: #{temporal_encoder_pallas.1} parent=47 // pred_region
        %p6318 = scmp.lt.s32.totalorder %s21, 1
        %s6319 = scalar_select %p6318, %s21, 1
        %p6320 = scmp.lt.s32.totalorder %s22, 5
        %s6321 = scalar_select %p6320, %s22, 5
        %s6322 = smul.addr %s6321, 32
        %s6323 = smul.addr %s6319, 192
        %s6324 = sadd.s32 %s6322, %s6323
        %s6325 = smul.addr %s6324, 8
        %s6326 = scalar_lea.vmem %s4, %s6325
      $region52: #{temporal_encoder_pallas.1} parent=47 // pred_fallthru
        _
    $region48: #{temporal_encoder_pallas.1} parent=5 // pred_fallthru
      _
  $region6: #{temporal_encoder_pallas.1} parent=0 // loop_footer
    %s14 = sadd.s32 1, %s10
  $region7: #{temporal_encoder_pallas.1} parent=0 // loop_footer_branch
    %9 = sbr.rel target = $region3
  $region8: #{temporal_encoder_pallas.1} parent=0 // loop_exit
    _

</llo_original>
